<compile_context>
chip_gen: v7x
topology: tpu7x:2x2x1
jax: 0.10.0
libtpu: 0.0.40
codegen_flags: <defaults>
</compile_context>

<pallas_src>
import jax
import jax.numpy as jnp
from jax.experimental import pallas as pl
from jax.experimental.pallas import tpu as pltpu

H1 = 64      # hidden_conv_1
H2 = 32      # hidden_conv_2
PRE1 = 256
PRE2 = 128
LANE = 128   # lane-pad the narrow H1/H2 channel dims up to one lane width


def _leaky(v):
    # F.leaky_relu default negative_slope = 0.01 (f32 on the VPU)
    return jnp.where(v > 0, v, 0.01 * v)


def _bf16(v):
    return v.astype(jnp.bfloat16)


# ---------------------------------------------------------------------------
# Monolithic per-snapshot kernel: A_hat fully VMEM-resident, grid = (T,).
# ---------------------------------------------------------------------------
def roland_snapshot_kernel(x_ref, a_ref, pc1_ref, pc2_ref, p_ref,
                           wp1_ref, bp1_ref, wp2_ref, bp2_ref,
                           wc1_ref, bc1_ref, wm1_ref,
                           wc2_ref, bc2_ref, wm2_ref,
                           out_ref):
    a = a_ref[...]                                                # (N, N) bf16

    # preprocess1 / preprocess2 (+ leaky_relu). dropout p=0.0 -> identity.
    h = _leaky(jnp.dot(_bf16(x_ref[...]), wp1_ref[...],
                       preferred_element_type=jnp.float32) + bp1_ref[...])
    h = _leaky(jnp.dot(_bf16(h), wp2_ref[...],
                       preferred_element_type=jnp.float32) + bp2_ref[...])

    # conv1: A_hat @ (H W1) + b1 (W1/b1 zero-padded 64 -> 128 lanes), leaky_relu.
    m = jnp.dot(_bf16(h), wc1_ref[...], preferred_element_type=jnp.float32)
    h = _leaky(jnp.dot(a, _bf16(m), preferred_element_type=jnp.float32)
               + bc1_ref[...])

    # mlp1: h @ wm1[:H1] + (prev1 @ wm1[H1:] + bm1)  (prev term hoisted into pc1).
    h = jnp.dot(_bf16(h), wm1_ref[...],
                preferred_element_type=jnp.float32) + pc1_ref[...]

    # conv2 (+ leaky_relu), lane-padded 32 -> 128.
    m = jnp.dot(_bf16(h), wc2_ref[...], preferred_element_type=jnp.float32)
    h = _leaky(jnp.dot(a, _bf16(m), preferred_element_type=jnp.float32)
               + bc2_ref[...])

    # mlp2 (prev term hoisted into pc2).
    h = jnp.dot(_bf16(h), wm2_ref[...],
                preferred_element_type=jnp.float32) + pc2_ref[...]

    # global_mean_pool as a (G, N) @ (N, 128) matmul -> lane-dense output block.
    out_ref[...] = jnp.dot(p_ref[...], h, preferred_element_type=jnp.float32)


# ---------------------------------------------------------------------------
# Row-tiled path (large N / v7x): three kernels, grid = (T, N_pad // tm).
# ---------------------------------------------------------------------------
def features_kernel(x_ref, wp1_ref, bp1_ref, wp2_ref, bp2_ref, wc1_ref, m1_ref):
    h = _leaky(jnp.dot(_bf16(x_ref[...]), wp1_ref[...],
                       preferred_element_type=jnp.float32) + bp1_ref[...])
    h = _leaky(jnp.dot(_bf16(h), wp2_ref[...],
                       preferred_element_type=jnp.float32) + bp2_ref[...])
    m1_ref[...] = _bf16(jnp.dot(_bf16(h), wc1_ref[...],
                                preferred_element_type=jnp.float32))


def agg1_kernel(a_ref, m1_ref, pc1_ref, bc1_ref, wm1_ref, wc2_ref, m2_ref):
    h = _leaky(jnp.dot(a_ref[...], m1_ref[...],
                       preferred_element_type=jnp.float32) + bc1_ref[...])
    h = jnp.dot(_bf16(h), wm1_ref[...],
                preferred_element_type=jnp.float32) + pc1_ref[...]
    m2_ref[...] = _bf16(jnp.dot(_bf16(h), wc2_ref[...],
                                preferred_element_type=jnp.float32))


def agg2_kernel(a_ref, m2_ref, pc2_ref, p_ref, bc2_ref, wm2_ref, out_ref):
    h = _leaky(jnp.dot(a_ref[...], m2_ref[...],
                       preferred_element_type=jnp.float32) + bc2_ref[...])
    h = jnp.dot(_bf16(h), wm2_ref[...],
                preferred_element_type=jnp.float32) + pc2_ref[...]
    # partial mean-pool for this row tile: pool_mat[:, rows] @ h_rows
    out_ref[...] = jnp.dot(p_ref[...], h, preferred_element_type=jnp.float32)


# ---------------------------------------------------------------------------
# Wrapper
# ---------------------------------------------------------------------------
def _pad2(w, rows, cols, dtype=None):
    dtype = w.dtype if dtype is None else dtype
    out = jnp.zeros((rows, cols), dtype)
    return out.at[:w.shape[0], :w.shape[1]].set(w.astype(dtype))


def _round_up(x, m):
    return (x + m - 1) // m * m


def _const_spec(arr, single_buffer):
    """Full-array spec whose block index is 0 for every grid step."""
    nd = arr.ndim
    idx = lambda *args, _nd=nd: (0,) * _nd
    if single_buffer:
        try:
            # Constant across grid steps -> no need for double buffering.
            return pl.BlockSpec(arr.shape, idx, pipeline_mode=pl.Buffered(1))
        except (TypeError, AttributeError):
            pass
    return pl.BlockSpec(arr.shape, idx)


def roland_forward(x_seq, a_seq, pool_mat, prev1, prev2, params,
                   force_row_tiled=False):
    T, N, D_in = x_seq.shape
    G = pool_mat.shape[0]

    # ---- one-time prep (outside the snapshot loop) -----------------------
    N_pad = max(_round_up(N, LANE), LANE)

    # bf16, lane-padded adjacency / features / pool matrix.  Zero-padded rows
    # and columns are inert: padded pool columns are zero, so padded nodes never
    # contribute to the pooled output.
    a_p = jnp.zeros((T, N_pad, N_pad), jnp.bfloat16)
    a_p = a_p.at[:, :N, :N].set(a_seq.astype(jnp.bfloat16))
    x_p = jnp.zeros((T, N_pad, D_in), jnp.float32)
    x_p = x_p.at[:, :N, :].set(x_seq.astype(jnp.float32))
    pool_p = jnp.zeros((G, N_pad), jnp.float32)
    pool_p = pool_p.at[:, :N].set(pool_mat.astype(jnp.float32))

    # Hoist the constant previous-embedding contributions (bias folded in).
    pc1 = _pad2(jnp.dot(prev1, params['wm1'][H1:, :]) + params['bm1'],
                N_pad, LANE, jnp.float32)
    pc2 = _pad2(jnp.dot(prev2, params['wm2'][H2:, :]) + params['bm2'],
                N_pad, LANE, jnp.float32)

    # bf16 weights (lane-padded to 128 output columns), f32 biases.
    wp1 = params['wp1'].astype(jnp.bfloat16)
    bp1 = params['bp1'].astype(jnp.float32)
    wp2 = params['wp2'].astype(jnp.bfloat16)
    bp2 = params['bp2'].astype(jnp.float32)
    wc1 = _pad2(params['wc1'], PRE2, LANE, jnp.bfloat16)
    bc1 = _pad2(params['bc1'], 1, LANE, jnp.float32)
    wm1 = _pad2(params['wm1'][:H1, :], LANE, LANE, jnp.bfloat16)
    wc2 = _pad2(params['wc2'], LANE, LANE, jnp.bfloat16)
    bc2 = _pad2(params['bc2'], 1, LANE, jnp.float32)
    wm2 = _pad2(params['wm2'][:H2, :], LANE, LANE, jnp.bfloat16)

    # Generation-aware VMEM limit (48 MiB on 64 MiB v7x parts, ~100 MiB on
    # 128 MiB v5e/v6e parts; conservative fallback if the query is unavailable).
    try:
        vmem_cap = int(pltpu.get_tpu_info().vmem_capacity_bytes)
    except Exception:
        vmem_cap = 64 << 20
    vmem_limit = int(min(max(vmem_cap - (16 << 20), 32 << 20), 100 << 20))

    # Explicit size check: does the monolithic (A resident) path fit?
    const_bytes = (pc1.nbytes + pc2.nbytes + pool_p.nbytes +
                   wp1.nbytes + bp1.nbytes + wp2.nbytes + bp2.nbytes +
                   wc1.nbytes + bc1.nbytes + wm1.nbytes +
                   wc2.nbytes + bc2.nbytes + wm2.nbytes)
    mono_need = (4 * N_pad * N_pad                # double-buffered bf16 A block
                 + 2 * const_bytes                # worst case: constants x2
                 + 2 * N_pad * D_in * 4           # double-buffered x block
                 + N_pad * (PRE1 + 3 * LANE) * 4  # live f32 intermediates
                 + (4 << 20))                     # headroom
    use_row_tiled = bool(force_row_tiled) or (mono_need > vmem_limit)

    # ------------------------------------------------------------------
    def _mono(single_buffer):
        cs = lambda arr: _const_spec(arr, single_buffer)
        in_specs = [
            pl.BlockSpec((pl.Squeezed(), N_pad, D_in), lambda t: (t, 0, 0)),
            pl.BlockSpec((pl.Squeezed(), N_pad, N_pad), lambda t: (t, 0, 0)),
            cs(pc1), cs(pc2), cs(pool_p),
            cs(wp1), cs(bp1), cs(wp2), cs(bp2),
            cs(wc1), cs(bc1), cs(wm1),
            cs(wc2), cs(bc2), cs(wm2),
        ]
        return pl.pallas_call(
            roland_snapshot_kernel,
            out_shape=jax.ShapeDtypeStruct((T, G, LANE), jnp.float32),
            grid_spec=pltpu.PrefetchScalarGridSpec(
                num_scalar_prefetch=0,
                grid=(T,),
                in_specs=in_specs,
                out_specs=pl.BlockSpec((pl.Squeezed(), G, LANE),
                                       lambda t: (t, 0, 0)),
            ),
            compiler_params=pltpu.CompilerParams(
                dimension_semantics=("parallel",),
                vmem_limit_bytes=vmem_limit),
        )(x_p, a_p, pc1, pc2, pool_p,
          wp1, bp1, wp2, bp2, wc1, bc1, wm1, wc2, bc2, wm2)

    # ------------------------------------------------------------------
    def _tiled(single_buffer):
        cs = lambda arr: _const_spec(arr, single_buffer)
        tm = min(256, N_pad)
        if N_pad % tm:
            tm = 128
        nrt = N_pad // tm
        cp = pltpu.CompilerParams(
            dimension_semantics=("parallel", "parallel"),
            vmem_limit_bytes=vmem_limit)

        # Stage 1: node features -> M1 = (leaky preprocess chain) @ Wc1   (bf16)
        m1 = pl.pallas_call(
            features_kernel,
            out_shape=jax.ShapeDtypeStruct((T, N_pad, LANE), jnp.bfloat16),
            grid_spec=pltpu.PrefetchScalarGridSpec(
                num_scalar_prefetch=0, grid=(T, nrt),
                in_specs=[
                    pl.BlockSpec((pl.Squeezed(), tm, D_in),
                                 lambda t, j: (t, j, 0)),
                    cs(wp1), cs(bp1), cs(wp2), cs(bp2), cs(wc1),
                ],
                out_specs=pl.BlockSpec((pl.Squeezed(), tm, LANE),
                                       lambda t, j: (t, j, 0)),
            ),
            compiler_params=cp,
        )(x_p, wp1, bp1, wp2, bp2, wc1)

        # Stage 2: row-tiled A @ M1 -> leaky -> mlp1 -> @ Wc2   (bf16)
        m2 = pl.pallas_call(
            agg1_kernel,
            out_shape=jax.ShapeDtypeStruct((T, N_pad, LANE), jnp.bfloat16),
            grid_spec=pltpu.PrefetchScalarGridSpec(
                num_scalar_prefetch=0, grid=(T, nrt),
                in_specs=[
                    pl.BlockSpec((pl.Squeezed(), tm, N_pad),
                                 lambda t, j: (t, j, 0)),
                    pl.BlockSpec((pl.Squeezed(), N_pad, LANE),
                                 lambda t, j: (t, 0, 0)),
                    pl.BlockSpec((tm, LANE), lambda t, j: (j, 0)),
                    cs(bc1), cs(wm1), cs(wc2),
                ],
                out_specs=pl.BlockSpec((pl.Squeezed(), tm, LANE),
                                       lambda t, j: (t, j, 0)),
            ),
            compiler_params=cp,
        )(a_p, m1, pc1, bc1, wm1, wc2)

        # Stage 3: row-tiled A @ M2 -> leaky -> mlp2 -> partial mean-pool
        parts = pl.pallas_call(
            agg2_kernel,
            out_shape=jax.ShapeDtypeStruct((T, nrt, G, LANE), jnp.float32),
            grid_spec=pltpu.PrefetchScalarGridSpec(
                num_scalar_prefetch=0, grid=(T, nrt),
                in_specs=[
                    pl.BlockSpec((pl.Squeezed(), tm, N_pad),
                                 lambda t, j: (t, j, 0)),
                    pl.BlockSpec((pl.Squeezed(), N_pad, LANE),
                                 lambda t, j: (t, 0, 0)),
                    pl.BlockSpec((tm, LANE), lambda t, j: (j, 0)),
                    pl.BlockSpec((G, tm), lambda t, j: (0, j)),
                    cs(bc2), cs(wm2),
                ],
                out_specs=pl.BlockSpec(
                    (pl.Squeezed(), pl.Squeezed(), G, LANE),
                    lambda t, j: (t, j, 0, 0)),
            ),
            compiler_params=cp,
        )(a_p, m2, pc2, pool_p, bc2, wm2)
        return parts.sum(axis=1)                        # (T, G, LANE)

    # ------------------------------------------------------------------
    def _run(single_buffer):
        pooled = _tiled(single_buffer) if use_row_tiled else _mono(single_buffer)
        # torch.stack(outputs, dim=1).mean(dim=1); columns >= H2 are exactly zero.
        m = jnp.mean(pooled, axis=0)                    # (G, LANE)
        # Tiny classifier matmul in plain JAX (separate Pallas launch not worth it).
        # torch .squeeze() is a no-op here since G > 1 and num_classes > 1.
        return m[:, :H2] @ params['wcls'] + params['bcls']

    try:
        return _run(True)
    except Exception:
        # e.g. pipeline_mode=pl.Buffered(1) unsupported -> plain double-buffered specs.
        return _run(False)


# ---------------------------------------------------------------------------
# Pure-JAX reference of the PyTorch forward (for a numerical sanity check).
# ---------------------------------------------------------------------------
def roland_reference(x_seq, a_seq, pool_mat, prev1, prev2, params):
    a_seq = a_seq.astype(jnp.float32)
    outs = []
    for t in range(x_seq.shape[0]):
        x, a = x_seq[t], a_seq[t]
        h = _leaky(x @ params['wp1'] + params['bp1'])
        h = _leaky(h @ params['wp2'] + params['bp2'])
        h = _leaky(a @ (h @ params['wc1']) + params['bc1'])
        h = jnp.concatenate([h, prev1], axis=1) @ params['wm1'] + params['bm1']
        h = _leaky(a @ (h @ params['wc2']) + params['bc2'])
        h = jnp.concatenate([h, prev2], axis=1) @ params['wm2'] + params['bm2']
        outs.append(pool_mat @ h)
    m = jnp.mean(jnp.stack(outs, axis=0), axis=0)
    return m @ params['wcls'] + params['bcls']


# ---------------------------------------------------------------------------
# Glue: deterministic parameter init + synthetic graph snapshot construction.
# ---------------------------------------------------------------------------
def init_params(key, input_dim, num_classes):
    ks = jax.random.split(key, 8)

    def lin(k, fan_in, fan_out):
        kw, kb = jax.random.split(k)
        scale = 1.0 / jnp.sqrt(jnp.float32(fan_in))
        w = jax.random.uniform(kw, (fan_in, fan_out), jnp.float32, -scale, scale)
        b = jax.random.uniform(kb, (1, fan_out), jnp.float32, -scale, scale)
        return w, b

    p = {}
    p['wp1'], p['bp1'] = lin(ks[0], input_dim, PRE1)       # preprocess1
    p['wp2'], p['bp2'] = lin(ks[1], PRE1, PRE2)            # preprocess2
    p['wc1'], p['bc1'] = lin(ks[2], PRE2, H1)              # conv1 (GCN weight+bias)
    p['wm1'], p['bm1'] = lin(ks[3], 2 * H1, H1)            # mlp1 (cat order: [h, prev])
    p['wc2'], p['bc2'] = lin(ks[4], H1, H2)                # conv2
    p['wm2'], p['bm2'] = lin(ks[5], 2 * H2, H2)            # mlp2
    p['wcls'], p['bcls'] = lin(ks[6], H2, num_classes)     # classifier
    return p


def make_norm_adj(src, dst, n):
    a = jnp.zeros((n, n), jnp.float32)
    a = a.at[dst, src].set(1.0)
    a = a.at[src, dst].set(1.0)              # treat edges as undirected
    a = a + jnp.eye(n, dtype=jnp.float32)    # add self-loops
    deg = a.sum(axis=1)
    dinv = 1.0 / jnp.sqrt(deg)
    return a * dinv[:, None] * dinv[None, :]


def build_example(key, T, G, nodes_per_graph, D_in):
    N = G * nodes_per_graph
    x_seq = jax.random.normal(key, (T, N, D_in), jnp.float32)
    a_list = []
    for t in range(T):
        src_l, dst_l = [], []
        for g in range(G):
            base = g * nodes_per_graph
            for i in range(nodes_per_graph):
                src_l.append(base + i)
                dst_l.append(base + (i + 1 + t) % nodes_per_graph)
        a_list.append(make_norm_adj(jnp.array(src_l, jnp.int32),
                                    jnp.array(dst_l, jnp.int32), N))
    a_seq = jnp.stack(a_list, axis=0)                           # (T, N, N) f32
    batch_idx = jnp.repeat(jnp.arange(G), nodes_per_graph)
    onehot = (batch_idx[None, :] == jnp.arange(G)[:, None]).astype(jnp.float32)
    pool_mat = onehot / onehot.sum(axis=1, keepdims=True)       # (G, N)
    return x_seq, a_seq, pool_mat


if __name__ == "__main__":
    key = jax.random.PRNGKey(0)
    k_param, k_x1, k_x2, k_p1, k_p2 = jax.random.split(key, 5)

    D_in = 8
    num_classes = 4
    params = init_params(k_param, D_in, num_classes)

    # ---- test 1: small graph, monolithic (A-resident) path ----------------
    T1, G1, npg1 = 3, 2, 8
    x1, a1, pool1 = build_example(k_x1, T1, G1, npg1, D_in)
    N1 = G1 * npg1
    prev1_a = jnp.zeros((N1, H1), jnp.float32)   # previous_embeddings init (zeros)
    prev2_a = jnp.zeros((N1, H2), jnp.float32)

    out1 = roland_forward(x1, a1, pool1, prev1_a, prev2_a, params)
    out1 = jax.block_until_ready(out1)
    assert out1.shape == (G1, num_classes)
    assert jnp.all(jnp.isfinite(out1))
    ref1 = roland_reference(x1, a1, pool1, prev1_a, prev2_a, params)
    assert jnp.allclose(out1, ref1, rtol=5e-2, atol=5e-2), \
        float(jnp.max(jnp.abs(out1 - ref1)))

    # ---- test 2: larger graph, forced row-tiled (v7x / large-N) path ------
    T2, G2, npg2 = 2, 3, 100
    x2, a2, pool2 = build_example(k_x2, T2, G2, npg2, D_in)
    N2 = G2 * npg2
    prev1_b = 0.1 * jax.random.normal(k_p1, (N2, H1), jnp.float32)
    prev2_b = 0.1 * jax.random.normal(k_p2, (N2, H2), jnp.float32)

    out2 = roland_forward(x2, a2, pool2, prev1_b, prev2_b, params,
                          force_row_tiled=True)
    out2 = jax.block_until_ready(out2)
    assert out2.shape == (G2, num_classes)
    assert jnp.all(jnp.isfinite(out2))
    ref2 = roland_reference(x2, a2, pool2, prev1_b, prev2_b, params)
    assert jnp.allclose(out2, ref2, rtol=5e-2, atol=5e-2), \
        float(jnp.max(jnp.abs(out2 - ref2)))

    print("KERNEL_OK")
</pallas_src>

<mosaic_0001>
module attributes {stable_mosaic.version = 11 : i64} {
  func.func @roland_snapshot_kernel(%arg0: i32, %arg1: memref<1x128x8xf32, #tpu.memory_space<vmem>>, %arg2: memref<1x128x128xbf16, #tpu.memory_space<vmem>>, %arg3: memref<128x128xf32, #tpu.memory_space<vmem>>, %arg4: memref<128x128xf32, #tpu.memory_space<vmem>>, %arg5: memref<2x128xf32, #tpu.memory_space<vmem>>, %arg6: memref<8x256xbf16, #tpu.memory_space<vmem>>, %arg7: memref<1x256xf32, #tpu.memory_space<vmem>>, %arg8: memref<256x128xbf16, #tpu.memory_space<vmem>>, %arg9: memref<1x128xf32, #tpu.memory_space<vmem>>, %arg10: memref<128x128xbf16, #tpu.memory_space<vmem>>, %arg11: memref<1x128xf32, #tpu.memory_space<vmem>>, %arg12: memref<128x128xbf16, #tpu.memory_space<vmem>>, %arg13: memref<128x128xbf16, #tpu.memory_space<vmem>>, %arg14: memref<1x128xf32, #tpu.memory_space<vmem>>, %arg15: memref<128x128xbf16, #tpu.memory_space<vmem>>, %arg16: memref<1x2x128xf32, #tpu.memory_space<vmem>>) attributes {dimension_semantics = [#tpu.dimension_semantics<parallel>], iteration_bounds = array<i64: 3>, scalar_prefetch = 0 : i64, scratch_operands = 0 : i64, tpu.core_type = #tpu.core_type<tc>, window_params = [{transform_indices = @transform_0, window_bounds = array<i64: 1, 128, 8>}, {transform_indices = @transform_1, window_bounds = array<i64: 1, 128, 128>}, {pipeline_mode = #tpu.pipeline_mode<synchronous>, transform_indices = @transform_2, window_bounds = array<i64: 128, 128>}, {pipeline_mode = #tpu.pipeline_mode<synchronous>, transform_indices = @transform_3, window_bounds = array<i64: 128, 128>}, {pipeline_mode = #tpu.pipeline_mode<synchronous>, transform_indices = @transform_4, window_bounds = array<i64: 2, 128>}, {pipeline_mode = #tpu.pipeline_mode<synchronous>, transform_indices = @transform_5, window_bounds = array<i64: 8, 256>}, {pipeline_mode = #tpu.pipeline_mode<synchronous>, transform_indices = @transform_6, window_bounds = array<i64: 1, 256>}, {pipeline_mode = #tpu.pipeline_mode<synchronous>, transform_indices = @transform_7, window_bounds = array<i64: 256, 128>}, {pipeline_mode = #tpu.pipeline_mode<synchronous>, transform_indices = @transform_8, window_bounds = array<i64: 1, 128>}, {pipeline_mode = #tpu.pipeline_mode<synchronous>, transform_indices = @transform_9, window_bounds = array<i64: 128, 128>}, {pipeline_mode = #tpu.pipeline_mode<synchronous>, transform_indices = @transform_10, window_bounds = array<i64: 1, 128>}, {pipeline_mode = #tpu.pipeline_mode<synchronous>, transform_indices = @transform_11, window_bounds = array<i64: 128, 128>}, {pipeline_mode = #tpu.pipeline_mode<synchronous>, transform_indices = @transform_12, window_bounds = array<i64: 128, 128>}, {pipeline_mode = #tpu.pipeline_mode<synchronous>, transform_indices = @transform_13, window_bounds = array<i64: 1, 128>}, {pipeline_mode = #tpu.pipeline_mode<synchronous>, transform_indices = @transform_14, window_bounds = array<i64: 128, 128>}, {transform_indices = @transform_15, window_bounds = array<i64: 1, 2, 128>}]} {
    %c0 = arith.constant 0 : index
    %c0_0 = arith.constant 0 : index
    %c0_1 = arith.constant 0 : index
    %0 = vector.load %arg2[%c0, %c0_0, %c0_1] : memref<1x128x128xbf16, #tpu.memory_space<vmem>>, vector<1x128x128xbf16>
    %1 = vector.shape_cast %0 : vector<1x128x128xbf16> to vector<128x128xbf16>
    %c0_2 = arith.constant 0 : index
    %c0_3 = arith.constant 0 : index
    %c0_4 = arith.constant 0 : index
    %2 = vector.load %arg1[%c0_2, %c0_3, %c0_4] : memref<1x128x8xf32, #tpu.memory_space<vmem>>, vector<1x128x8xf32>
    %3 = vector.shape_cast %2 : vector<1x128x8xf32> to vector<128x8xf32>
    %4 = arith.truncf %3 : vector<128x8xf32> to vector<128x8xbf16>
    %c0_5 = arith.constant 0 : index
    %c0_6 = arith.constant 0 : index
    %5 = vector.load %arg6[%c0_5, %c0_6] : memref<8x256xbf16, #tpu.memory_space<vmem>>, vector<8x256xbf16>
    %cst = arith.constant dense<0.000000e+00> : vector<128x256xf32>
    %6 = tpu.matmul %4, %5, %cst {dimension_numbers = #tpu.dot_dimension_numbers<[1], [0], [0], [1], [0, 0, 1, 1], [], []>} : vector<128x8xbf16>, vector<8x256xbf16>, vector<128x256xf32> -> vector<128x256xf32>
    %c0_7 = arith.constant 0 : index
    %c0_8 = arith.constant 0 : index
    %7 = vector.load %arg7[%c0_7, %c0_8] : memref<1x256xf32, #tpu.memory_space<vmem>>, vector<1x256xf32>
    %8 = vector.broadcast %7 : vector<1x256xf32> to vector<128x256xf32>
    %9 = arith.addf %6, %8 : vector<128x256xf32>
    %cst_9 = arith.constant 0.000000e+00 : f32
    %10 = vector.broadcast %cst_9 : f32 to vector<128x256xf32>
    %11 = arith.cmpf ogt, %9, %10 : vector<128x256xf32>
    %cst_10 = arith.constant 0.00999999977 : f32
    %12 = vector.broadcast %cst_10 : f32 to vector<128x256xf32>
    %13 = arith.mulf %12, %9 : vector<128x256xf32>
    %14 = arith.select %11, %9, %13 : vector<128x256xi1>, vector<128x256xf32>
    %15 = arith.truncf %14 : vector<128x256xf32> to vector<128x256xbf16>
    %c0_11 = arith.constant 0 : index
    %c0_12 = arith.constant 0 : index
    %16 = vector.load %arg8[%c0_11, %c0_12] : memref<256x128xbf16, #tpu.memory_space<vmem>>, vector<256x128xbf16>
    %cst_13 = arith.constant dense<0.000000e+00> : vector<128x128xf32>
    %17 = tpu.matmul %15, %16, %cst_13 {dimension_numbers = #tpu.dot_dimension_numbers<[1], [0], [0], [1], [0, 0, 1, 1], [], []>} : vector<128x256xbf16>, vector<256x128xbf16>, vector<128x128xf32> -> vector<128x128xf32>
    %c0_14 = arith.constant 0 : index
    %c0_15 = arith.constant 0 : index
    %18 = vector.load %arg9[%c0_14, %c0_15] : memref<1x128xf32, #tpu.memory_space<vmem>>, vector<1x128xf32>
    %19 = vector.broadcast %18 : vector<1x128xf32> to vector<128x128xf32>
    %20 = arith.addf %17, %19 : vector<128x128xf32>
    %cst_16 = arith.constant 0.000000e+00 : f32
    %21 = vector.broadcast %cst_16 : f32 to vector<128x128xf32>
    %22 = arith.cmpf ogt, %20, %21 : vector<128x128xf32>
    %cst_17 = arith.constant 0.00999999977 : f32
    %23 = vector.broadcast %cst_17 : f32 to vector<128x128xf32>
    %24 = arith.mulf %23, %20 : vector<128x128xf32>
    %25 = arith.select %22, %20, %24 : vector<128x128xi1>, vector<128x128xf32>
    %26 = arith.truncf %25 : vector<128x128xf32> to vector<128x128xbf16>
    %c0_18 = arith.constant 0 : index
    %c0_19 = arith.constant 0 : index
    %27 = vector.load %arg10[%c0_18, %c0_19] : memref<128x128xbf16, #tpu.memory_space<vmem>>, vector<128x128xbf16>
    %cst_20 = arith.constant dense<0.000000e+00> : vector<128x128xf32>
    %28 = tpu.matmul %26, %27, %cst_20 {dimension_numbers = #tpu.dot_dimension_numbers<[1], [0], [0], [1], [0, 0, 1, 1], [], []>} : vector<128x128xbf16>, vector<128x128xbf16>, vector<128x128xf32> -> vector<128x128xf32>
    %29 = arith.truncf %28 : vector<128x128xf32> to vector<128x128xbf16>
    %cst_21 = arith.constant dense<0.000000e+00> : vector<128x128xf32>
    %30 = tpu.matmul %1, %29, %cst_21 {dimension_numbers = #tpu.dot_dimension_numbers<[1], [0], [0], [1], [0, 0, 1, 1], [], []>} : vector<128x128xbf16>, vector<128x128xbf16>, vector<128x128xf32> -> vector<128x128xf32>
    %c0_22 = arith.constant 0 : index
    %c0_23 = arith.constant 0 : index
    %31 = vector.load %arg11[%c0_22, %c0_23] : memref<1x128xf32, #tpu.memory_space<vmem>>, vector<1x128xf32>
    %32 = vector.broadcast %31 : vector<1x128xf32> to vector<128x128xf32>
    %33 = arith.addf %30, %32 : vector<128x128xf32>
    %cst_24 = arith.constant 0.000000e+00 : f32
    %34 = vector.broadcast %cst_24 : f32 to vector<128x128xf32>
    %35 = arith.cmpf ogt, %33, %34 : vector<128x128xf32>
    %cst_25 = arith.constant 0.00999999977 : f32
    %36 = vector.broadcast %cst_25 : f32 to vector<128x128xf32>
    %37 = arith.mulf %36, %33 : vector<128x128xf32>
    %38 = arith.select %35, %33, %37 : vector<128x128xi1>, vector<128x128xf32>
    %39 = arith.truncf %38 : vector<128x128xf32> to vector<128x128xbf16>
    %c0_26 = arith.constant 0 : index
    %c0_27 = arith.constant 0 : index
    %40 = vector.load %arg12[%c0_26, %c0_27] : memref<128x128xbf16, #tpu.memory_space<vmem>>, vector<128x128xbf16>
    %cst_28 = arith.constant dense<0.000000e+00> : vector<128x128xf32>
    %41 = tpu.matmul %39, %40, %cst_28 {dimension_numbers = #tpu.dot_dimension_numbers<[1], [0], [0], [1], [0, 0, 1, 1], [], []>} : vector<128x128xbf16>, vector<128x128xbf16>, vector<128x128xf32> -> vector<128x128xf32>
    %c0_29 = arith.constant 0 : index
    %c0_30 = arith.constant 0 : index
    %42 = vector.load %arg3[%c0_29, %c0_30] : memref<128x128xf32, #tpu.memory_space<vmem>>, vector<128x128xf32>
    %43 = arith.addf %41, %42 : vector<128x128xf32>
    %44 = arith.truncf %43 : vector<128x128xf32> to vector<128x128xbf16>
    %c0_31 = arith.constant 0 : index
    %c0_32 = arith.constant 0 : index
    %45 = vector.load %arg13[%c0_31, %c0_32] : memref<128x128xbf16, #tpu.memory_space<vmem>>, vector<128x128xbf16>
    %cst_33 = arith.constant dense<0.000000e+00> : vector<128x128xf32>
    %46 = tpu.matmul %44, %45, %cst_33 {dimension_numbers = #tpu.dot_dimension_numbers<[1], [0], [0], [1], [0, 0, 1, 1], [], []>} : vector<128x128xbf16>, vector<128x128xbf16>, vector<128x128xf32> -> vector<128x128xf32>
    %47 = arith.truncf %46 : vector<128x128xf32> to vector<128x128xbf16>
    %cst_34 = arith.constant dense<0.000000e+00> : vector<128x128xf32>
    %48 = tpu.matmul %1, %47, %cst_34 {dimension_numbers = #tpu.dot_dimension_numbers<[1], [0], [0], [1], [0, 0, 1, 1], [], []>} : vector<128x128xbf16>, vector<128x128xbf16>, vector<128x128xf32> -> vector<128x128xf32>
    %c0_35 = arith.constant 0 : index
    %c0_36 = arith.constant 0 : index
    %49 = vector.load %arg14[%c0_35, %c0_36] : memref<1x128xf32, #tpu.memory_space<vmem>>, vector<1x128xf32>
    %50 = vector.broadcast %49 : vector<1x128xf32> to vector<128x128xf32>
    %51 = arith.addf %48, %50 : vector<128x128xf32>
    %cst_37 = arith.constant 0.000000e+00 : f32
    %52 = vector.broadcast %cst_37 : f32 to vector<128x128xf32>
    %53 = arith.cmpf ogt, %51, %52 : vector<128x128xf32>
    %cst_38 = arith.constant 0.00999999977 : f32
    %54 = vector.broadcast %cst_38 : f32 to vector<128x128xf32>
    %55 = arith.mulf %54, %51 : vector<128x128xf32>
    %56 = arith.select %53, %51, %55 : vector<128x128xi1>, vector<128x128xf32>
    %57 = arith.truncf %56 : vector<128x128xf32> to vector<128x128xbf16>
    %c0_39 = arith.constant 0 : index
    %c0_40 = arith.constant 0 : index
    %58 = vector.load %arg15[%c0_39, %c0_40] : memref<128x128xbf16, #tpu.memory_space<vmem>>, vector<128x128xbf16>
    %cst_41 = arith.constant dense<0.000000e+00> : vector<128x128xf32>
    %59 = tpu.matmul %57, %58, %cst_41 {dimension_numbers = #tpu.dot_dimension_numbers<[1], [0], [0], [1], [0, 0, 1, 1], [], []>} : vector<128x128xbf16>, vector<128x128xbf16>, vector<128x128xf32> -> vector<128x128xf32>
    %c0_42 = arith.constant 0 : index
    %c0_43 = arith.constant 0 : index
    %60 = vector.load %arg4[%c0_42, %c0_43] : memref<128x128xf32, #tpu.memory_space<vmem>>, vector<128x128xf32>
    %61 = arith.addf %59, %60 : vector<128x128xf32>
    %c0_44 = arith.constant 0 : index
    %c0_45 = arith.constant 0 : index
    %62 = vector.load %arg5[%c0_44, %c0_45] : memref<2x128xf32, #tpu.memory_space<vmem>>, vector<2x128xf32>
    %cst_46 = arith.constant dense<0.000000e+00> : vector<2x128xf32>
    %63 = tpu.matmul %62, %61, %cst_46 {dimension_numbers = #tpu.dot_dimension_numbers<[1], [0], [0], [1], [0, 0, 1, 1], [], []>} : vector<2x128xf32>, vector<128x128xf32>, vector<2x128xf32> -> vector<2x128xf32>
    %c0_47 = arith.constant 0 : index
    %c0_48 = arith.constant 0 : index
    %c0_49 = arith.constant 0 : index
    %64 = vector.load %arg16[%c0_47, %c0_48, %c0_49] : memref<1x2x128xf32, #tpu.memory_space<vmem>>, vector<1x2x128xf32>
    %65 = vector.shape_cast %64 : vector<1x2x128xf32> to vector<2x128xf32>
    %66 = vector.shape_cast %63 : vector<2x128xf32> to vector<1x2x128xf32>
    tpu.vector_store %arg16[%c0_47, %c0_48, %c0_49], %66 {strides = array<i32>} : memref<1x2x128xf32, #tpu.memory_space<vmem>>, vector<1x2x128xf32>,
    return
  }
  func.func @transform_0(%arg0: i32) -> (i32, i32, i32) {
    %c0_i32 = arith.constant 0 : i32
    %c0_i32_0 = arith.constant 0 : i32
    %c0_i32_1 = arith.constant 0 : i32
    return %arg0, %c0_i32, %c0_i32_0 : i32, i32, i32
  }
  func.func @transform_1(%arg0: i32) -> (i32, i32, i32) {
    %c0_i32 = arith.constant 0 : i32
    %c0_i32_0 = arith.constant 0 : i32
    %c0_i32_1 = arith.constant 0 : i32
    return %arg0, %c0_i32, %c0_i32_0 : i32, i32, i32
  }
  func.func @transform_2(%arg0: i32) -> (i32, i32) {
    %c0_i32 = arith.constant 0 : i32
    %c0_i32_0 = arith.constant 0 : i32
    %c0_i32_1 = arith.constant 0 : i32
    return %c0_i32, %c0_i32_0 : i32, i32
  }
  func.func @transform_3(%arg0: i32) -> (i32, i32) {
    %c0_i32 = arith.constant 0 : i32
    %c0_i32_0 = arith.constant 0 : i32
    %c0_i32_1 = arith.constant 0 : i32
    return %c0_i32, %c0_i32_0 : i32, i32
  }
  func.func @transform_4(%arg0: i32) -> (i32, i32) {
    %c0_i32 = arith.constant 0 : i32
    %c0_i32_0 = arith.constant 0 : i32
    %c0_i32_1 = arith.constant 0 : i32
    return %c0_i32, %c0_i32_0 : i32, i32
  }
  func.func @transform_5(%arg0: i32) -> (i32, i32) {
    %c0_i32 = arith.constant 0 : i32
    %c0_i32_0 = arith.constant 0 : i32
    %c0_i32_1 = arith.constant 0 : i32
    return %c0_i32, %c0_i32_0 : i32, i32
  }
  func.func @transform_6(%arg0: i32) -> (i32, i32) {
    %c0_i32 = arith.constant 0 : i32
    %c0_i32_0 = arith.constant 0 : i32
    %c0_i32_1 = arith.constant 0 : i32
    return %c0_i32, %c0_i32_0 : i32, i32
  }
  func.func @transform_7(%arg0: i32) -> (i32, i32) {
    %c0_i32 = arith.constant 0 : i32
    %c0_i32_0 = arith.constant 0 : i32
    %c0_i32_1 = arith.constant 0 : i32
    return %c0_i32, %c0_i32_0 : i32, i32
  }
  func.func @transform_8(%arg0: i32) -> (i32, i32) {
    %c0_i32 = arith.constant 0 : i32
    %c0_i32_0 = arith.constant 0 : i32
    %c0_i32_1 = arith.constant 0 : i32
    return %c0_i32, %c0_i32_0 : i32, i32
  }
  func.func @transform_9(%arg0: i32) -> (i32, i32) {
    %c0_i32 = arith.constant 0 : i32
    %c0_i32_0 = arith.constant 0 : i32
    %c0_i32_1 = arith.constant 0 : i32
    return %c0_i32, %c0_i32_0 : i32, i32
  }
  func.func @transform_10(%arg0: i32) -> (i32, i32) {
    %c0_i32 = arith.constant 0 : i32
    %c0_i32_0 = arith.constant 0 : i32
    %c0_i32_1 = arith.constant 0 : i32
    return %c0_i32, %c0_i32_0 : i32, i32
  }
  func.func @transform_11(%arg0: i32) -> (i32, i32) {
    %c0_i32 = arith.constant 0 : i32
    %c0_i32_0 = arith.constant 0 : i32
    %c0_i32_1 = arith.constant 0 : i32
    return %c0_i32, %c0_i32_0 : i32, i32
  }
  func.func @transform_12(%arg0: i32) -> (i32, i32) {
    %c0_i32 = arith.constant 0 : i32
    %c0_i32_0 = arith.constant 0 : i32
    %c0_i32_1 = arith.constant 0 : i32
    return %c0_i32, %c0_i32_0 : i32, i32
  }
  func.func @transform_13(%arg0: i32) -> (i32, i32) {
    %c0_i32 = arith.constant 0 : i32
    %c0_i32_0 = arith.constant 0 : i32
    %c0_i32_1 = arith.constant 0 : i32
    return %c0_i32, %c0_i32_0 : i32, i32
  }
  func.func @transform_14(%arg0: i32) -> (i32, i32) {
    %c0_i32 = arith.constant 0 : i32
    %c0_i32_0 = arith.constant 0 : i32
    %c0_i32_1 = arith.constant 0 : i32
    return %c0_i32, %c0_i32_0 : i32, i32
  }
  func.func @transform_15(%arg0: i32) -> (i32, i32, i32) {
    %c0_i32 = arith.constant 0 : i32
    %c0_i32_0 = arith.constant 0 : i32
    %c0_i32_1 = arith.constant 0 : i32
    return %arg0, %c0_i32, %c0_i32_0 : i32, i32, i32
  }
}

module attributes {stable_mosaic.version = 11 : i64} {
  func.func @roland_snapshot_kernel(%arg0: i32, %arg1: memref<1x128x8xf32, #tpu.memory_space<vmem>>, %arg2: memref<1x128x128xbf16, #tpu.memory_space<vmem>>, %arg3: memref<128x128xf32, #tpu.memory_space<vmem>>, %arg4: memref<128x128xf32, #tpu.memory_space<vmem>>, %arg5: memref<2x128xf32, #tpu.memory_space<vmem>>, %arg6: memref<8x256xbf16, #tpu.memory_space<vmem>>, %arg7: memref<1x256xf32, #tpu.memory_space<vmem>>, %arg8: memref<256x128xbf16, #tpu.memory_space<vmem>>, %arg9: memref<1x128xf32, #tpu.memory_space<vmem>>, %arg10: memref<128x128xbf16, #tpu.memory_space<vmem>>, %arg11: memref<1x128xf32, #tpu.memory_space<vmem>>, %arg12: memref<128x128xbf16, #tpu.memory_space<vmem>>, %arg13: memref<128x128xbf16, #tpu.memory_space<vmem>>, %arg14: memref<1x128xf32, #tpu.memory_space<vmem>>, %arg15: memref<128x128xbf16, #tpu.memory_space<vmem>>, %arg16: memref<1x2x128xf32, #tpu.memory_space<vmem>>) attributes {dimension_semantics = [#tpu.dimension_semantics<parallel>], iteration_bounds = array<i64: 3>, scalar_prefetch = 0 : i64, scratch_operands = 0 : i64, tpu.core_type = #tpu.core_type<tc>, window_params = [{transform_indices = @transform_0, window_bounds = array<i64: 1, 128, 8>}, {transform_indices = @transform_1, window_bounds = array<i64: 1, 128, 128>}, {pipeline_mode = #tpu.pipeline_mode<synchronous>, transform_indices = @transform_2, window_bounds = array<i64: 128, 128>}, {pipeline_mode = #tpu.pipeline_mode<synchronous>, transform_indices = @transform_3, window_bounds = array<i64: 128, 128>}, {pipeline_mode = #tpu.pipeline_mode<synchronous>, transform_indices = @transform_4, window_bounds = array<i64: 2, 128>}, {pipeline_mode = #tpu.pipeline_mode<synchronous>, transform_indices = @transform_5, window_bounds = array<i64: 8, 256>}, {pipeline_mode = #tpu.pipeline_mode<synchronous>, transform_indices = @transform_6, window_bounds = array<i64: 1, 256>}, {pipeline_mode = #tpu.pipeline_mode<synchronous>, transform_indices = @transform_7, window_bounds = array<i64: 256, 128>}, {pipeline_mode = #tpu.pipeline_mode<synchronous>, transform_indices = @transform_8, window_bounds = array<i64: 1, 128>}, {pipeline_mode = #tpu.pipeline_mode<synchronous>, transform_indices = @transform_9, window_bounds = array<i64: 128, 128>}, {pipeline_mode = #tpu.pipeline_mode<synchronous>, transform_indices = @transform_10, window_bounds = array<i64: 1, 128>}, {pipeline_mode = #tpu.pipeline_mode<synchronous>, transform_indices = @transform_11, window_bounds = array<i64: 128, 128>}, {pipeline_mode = #tpu.pipeline_mode<synchronous>, transform_indices = @transform_12, window_bounds = array<i64: 128, 128>}, {pipeline_mode = #tpu.pipeline_mode<synchronous>, transform_indices = @transform_13, window_bounds = array<i64: 1, 128>}, {pipeline_mode = #tpu.pipeline_mode<synchronous>, transform_indices = @transform_14, window_bounds = array<i64: 128, 128>}, {transform_indices = @transform_15, window_bounds = array<i64: 1, 2, 128>}]} {
    %c0 = arith.constant 0 : index
    %c0_0 = arith.constant 0 : index
    %c0_1 = arith.constant 0 : index
    %0 = vector.load %arg2[%c0, %c0_0, %c0_1] : memref<1x128x128xbf16, #tpu.memory_space<vmem>>, vector<1x128x128xbf16>
    %1 = vector.shape_cast %0 : vector<1x128x128xbf16> to vector<128x128xbf16>
    %c0_2 = arith.constant 0 : index
    %c0_3 = arith.constant 0 : index
    %c0_4 = arith.constant 0 : index
    %2 = vector.load %arg1[%c0_2, %c0_3, %c0_4] : memref<1x128x8xf32, #tpu.memory_space<vmem>>, vector<1x128x8xf32>
    %3 = vector.shape_cast %2 : vector<1x128x8xf32> to vector<128x8xf32>
    %4 = arith.truncf %3 : vector<128x8xf32> to vector<128x8xbf16>
    %c0_5 = arith.constant 0 : index
    %c0_6 = arith.constant 0 : index
    %5 = vector.load %arg6[%c0_5, %c0_6] : memref<8x256xbf16, #tpu.memory_space<vmem>>, vector<8x256xbf16>
    %cst = arith.constant dense<0.000000e+00> : vector<128x256xf32>
    %6 = tpu.matmul %4, %5, %cst {dimension_numbers = #tpu.dot_dimension_numbers<[1], [0], [0], [1], [0, 0, 1, 1], [], []>} : vector<128x8xbf16>, vector<8x256xbf16>, vector<128x256xf32> -> vector<128x256xf32>
    %c0_7 = arith.constant 0 : index
    %c0_8 = arith.constant 0 : index
    %7 = vector.load %arg7[%c0_7, %c0_8] : memref<1x256xf32, #tpu.memory_space<vmem>>, vector<1x256xf32>
    %8 = vector.broadcast %7 : vector<1x256xf32> to vector<128x256xf32>
    %9 = arith.addf %6, %8 : vector<128x256xf32>
    %cst_9 = arith.constant 0.000000e+00 : f32
    %10 = vector.broadcast %cst_9 : f32 to vector<128x256xf32>
    %11 = arith.cmpf ogt, %9, %10 : vector<128x256xf32>
    %cst_10 = arith.constant 0.00999999977 : f32
    %12 = vector.broadcast %cst_10 : f32 to vector<128x256xf32>
    %13 = arith.mulf %12, %9 : vector<128x256xf32>
    %14 = arith.select %11, %9, %13 : vector<128x256xi1>, vector<128x256xf32>
    %15 = arith.truncf %14 : vector<128x256xf32> to vector<128x256xbf16>
    %c0_11 = arith.constant 0 : index
    %c0_12 = arith.constant 0 : index
    %16 = vector.load %arg8[%c0_11, %c0_12] : memref<256x128xbf16, #tpu.memory_space<vmem>>, vector<256x128xbf16>
    %cst_13 = arith.constant dense<0.000000e+00> : vector<128x128xf32>
    %17 = tpu.matmul %15, %16, %cst_13 {dimension_numbers = #tpu.dot_dimension_numbers<[1], [0], [0], [1], [0, 0, 1, 1], [], []>} : vector<128x256xbf16>, vector<256x128xbf16>, vector<128x128xf32> -> vector<128x128xf32>
    %c0_14 = arith.constant 0 : index
    %c0_15 = arith.constant 0 : index
    %18 = vector.load %arg9[%c0_14, %c0_15] : memref<1x128xf32, #tpu.memory_space<vmem>>, vector<1x128xf32>
    %19 = vector.broadcast %18 : vector<1x128xf32> to vector<128x128xf32>
    %20 = arith.addf %17, %19 : vector<128x128xf32>
    %cst_16 = arith.constant 0.000000e+00 : f32
    %21 = vector.broadcast %cst_16 : f32 to vector<128x128xf32>
    %22 = arith.cmpf ogt, %20, %21 : vector<128x128xf32>
    %cst_17 = arith.constant 0.00999999977 : f32
    %23 = vector.broadcast %cst_17 : f32 to vector<128x128xf32>
    %24 = arith.mulf %23, %20 : vector<128x128xf32>
    %25 = arith.select %22, %20, %24 : vector<128x128xi1>, vector<128x128xf32>
    %26 = arith.truncf %25 : vector<128x128xf32> to vector<128x128xbf16>
    %c0_18 = arith.constant 0 : index
    %c0_19 = arith.constant 0 : index
    %27 = vector.load %arg10[%c0_18, %c0_19] : memref<128x128xbf16, #tpu.memory_space<vmem>>, vector<128x128xbf16>
    %cst_20 = arith.constant dense<0.000000e+00> : vector<128x128xf32>
    %28 = tpu.matmul %26, %27, %cst_20 {dimension_numbers = #tpu.dot_dimension_numbers<[1], [0], [0], [1], [0, 0, 1, 1], [], []>} : vector<128x128xbf16>, vector<128x128xbf16>, vector<128x128xf32> -> vector<128x128xf32>
    %29 = arith.truncf %28 : vector<128x128xf32> to vector<128x128xbf16>
    %cst_21 = arith.constant dense<0.000000e+00> : vector<128x128xf32>
    %30 = tpu.matmul %1, %29, %cst_21 {dimension_numbers = #tpu.dot_dimension_numbers<[1], [0], [0], [1], [0, 0, 1, 1], [], []>} : vector<128x128xbf16>, vector<128x128xbf16>, vector<128x128xf32> -> vector<128x128xf32>
    %c0_22 = arith.constant 0 : index
    %c0_23 = arith.constant 0 : index
    %31 = vector.load %arg11[%c0_22, %c0_23] : memref<1x128xf32, #tpu.memory_space<vmem>>, vector<1x128xf32>
    %32 = vector.broadcast %31 : vector<1x128xf32> to vector<128x128xf32>
    %33 = arith.addf %30, %32 : vector<128x128xf32>
    %cst_24 = arith.constant 0.000000e+00 : f32
    %34 = vector.broadcast %cst_24 : f32 to vector<128x128xf32>
    %35 = arith.cmpf ogt, %33, %34 : vector<128x128xf32>
    %cst_25 = arith.constant 0.00999999977 : f32
    %36 = vector.broadcast %cst_25 : f32 to vector<128x128xf32>
    %37 = arith.mulf %36, %33 : vector<128x128xf32>
    %38 = arith.select %35, %33, %37 : vector<128x128xi1>, vector<128x128xf32>
    %39 = arith.truncf %38 : vector<128x128xf32> to vector<128x128xbf16>
    %c0_26 = arith.constant 0 : index
    %c0_27 = arith.constant 0 : index
    %40 = vector.load %arg12[%c0_26, %c0_27] : memref<128x128xbf16, #tpu.memory_space<vmem>>, vector<128x128xbf16>
    %cst_28 = arith.constant dense<0.000000e+00> : vector<128x128xf32>
    %41 = tpu.matmul %39, %40, %cst_28 {dimension_numbers = #tpu.dot_dimension_numbers<[1], [0], [0], [1], [0, 0, 1, 1], [], []>} : vector<128x128xbf16>, vector<128x128xbf16>, vector<128x128xf32> -> vector<128x128xf32>
    %c0_29 = arith.constant 0 : index
    %c0_30 = arith.constant 0 : index
    %42 = vector.load %arg3[%c0_29, %c0_30] : memref<128x128xf32, #tpu.memory_space<vmem>>, vector<128x128xf32>
    %43 = arith.addf %41, %42 : vector<128x128xf32>
    %44 = arith.truncf %43 : vector<128x128xf32> to vector<128x128xbf16>
    %c0_31 = arith.constant 0 : index
    %c0_32 = arith.constant 0 : index
    %45 = vector.load %arg13[%c0_31, %c0_32] : memref<128x128xbf16, #tpu.memory_space<vmem>>, vector<128x128xbf16>
    %cst_33 = arith.constant dense<0.000000e+00> : vector<128x128xf32>
    %46 = tpu.matmul %44, %45, %cst_33 {dimension_numbers = #tpu.dot_dimension_numbers<[1], [0], [0], [1], [0, 0, 1, 1], [], []>} : vector<128x128xbf16>, vector<128x128xbf16>, vector<128x128xf32> -> vector<128x128xf32>
    %47 = arith.truncf %46 : vector<128x128xf32> to vector<128x128xbf16>
    %cst_34 = arith.constant dense<0.000000e+00> : vector<128x128xf32>
    %48 = tpu.matmul %1, %47, %cst_34 {dimension_numbers = #tpu.dot_dimension_numbers<[1], [0], [0], [1], [0, 0, 1, 1], [], []>} : vector<128x128xbf16>, vector<128x128xbf16>, vector<128x128xf32> -> vector<128x128xf32>
    %c0_35 = arith.constant 0 : index
    %c0_36 = arith.constant 0 : index
    %49 = vector.load %arg14[%c0_35, %c0_36] : memref<1x128xf32, #tpu.memory_space<vmem>>, vector<1x128xf32>
    %50 = vector.broadcast %49 : vector<1x128xf32> to vector<128x128xf32>
    %51 = arith.addf %48, %50 : vector<128x128xf32>
    %cst_37 = arith.constant 0.000000e+00 : f32
    %52 = vector.broadcast %cst_37 : f32 to vector<128x128xf32>
    %53 = arith.cmpf ogt, %51, %52 : vector<128x128xf32>
    %cst_38 = arith.constant 0.00999999977 : f32
    %54 = vector.broadcast %cst_38 : f32 to vector<128x128xf32>
    %55 = arith.mulf %54, %51 : vector<128x128xf32>
    %56 = arith.select %53, %51, %55 : vector<128x128xi1>, vector<128x128xf32>
    %57 = arith.truncf %56 : vector<128x128xf32> to vector<128x128xbf16>
    %c0_39 = arith.constant 0 : index
    %c0_40 = arith.constant 0 : index
    %58 = vector.load %arg15[%c0_39, %c0_40] : memref<128x128xbf16, #tpu.memory_space<vmem>>, vector<128x128xbf16>
    %cst_41 = arith.constant dense<0.000000e+00> : vector<128x128xf32>
    %59 = tpu.matmul %57, %58, %cst_41 {dimension_numbers = #tpu.dot_dimension_numbers<[1], [0], [0], [1], [0, 0, 1, 1], [], []>} : vector<128x128xbf16>, vector<128x128xbf16>, vector<128x128xf32> -> vector<128x128xf32>
    %c0_42 = arith.constant 0 : index
    %c0_43 = arith.constant 0 : index
    %60 = vector.load %arg4[%c0_42, %c0_43] : memref<128x128xf32, #tpu.memory_space<vmem>>, vector<128x128xf32>
    %61 = arith.addf %59, %60 : vector<128x128xf32>
    %c0_44 = arith.constant 0 : index
    %c0_45 = arith.constant 0 : index
    %62 = vector.load %arg5[%c0_44, %c0_45] : memref<2x128xf32, #tpu.memory_space<vmem>>, vector<2x128xf32>
    %cst_46 = arith.constant dense<0.000000e+00> : vector<2x128xf32>
    %63 = tpu.matmul %62, %61, %cst_46 {dimension_numbers = #tpu.dot_dimension_numbers<[1], [0], [0], [1], [0, 0, 1, 1], [], []>} : vector<2x128xf32>, vector<128x128xf32>, vector<2x128xf32> -> vector<2x128xf32>
    %c0_47 = arith.constant 0 : index
    %c0_48 = arith.constant 0 : index
    %c0_49 = arith.constant 0 : index
    %64 = vector.load %arg16[%c0_47, %c0_48, %c0_49] : memref<1x2x128xf32, #tpu.memory_space<vmem>>, vector<1x2x128xf32>
    %65 = vector.shape_cast %64 : vector<1x2x128xf32> to vector<2x128xf32>
    %66 = vector.shape_cast %63 : vector<2x128xf32> to vector<1x2x128xf32>
    tpu.vector_store %arg16[%c0_47, %c0_48, %c0_49], %66 {strides = array<i32>} : memref<1x2x128xf32, #tpu.memory_space<vmem>>, vector<1x2x128xf32>,
    return
  }
  func.func @transform_0(%arg0: i32) -> (i32, i32, i32) {
    %c0_i32 = arith.constant 0 : i32
    %c0_i32_0 = arith.constant 0 : i32
    %c0_i32_1 = arith.constant 0 : i32
    return %arg0, %c0_i32, %c0_i32_0 : i32, i32, i32
  }
  func.func @transform_1(%arg0: i32) -> (i32, i32, i32) {
    %c0_i32 = arith.constant 0 : i32
    %c0_i32_0 = arith.constant 0 : i32
    %c0_i32_1 = arith.constant 0 : i32
    return %arg0, %c0_i32, %c0_i32_0 : i32, i32, i32
  }
  func.func @transform_2(%arg0: i32) -> (i32, i32) {
    %c0_i32 = arith.constant 0 : i32
    %c0_i32_0 = arith.constant 0 : i32
    %c0_i32_1 = arith.constant 0 : i32
    return %c0_i32, %c0_i32_0 : i32, i32
  }
  func.func @transform_3(%arg0: i32) -> (i32, i32) {
    %c0_i32 = arith.constant 0 : i32
    %c0_i32_0 = arith.constant 0 : i32
    %c0_i32_1 = arith.constant 0 : i32
    return %c0_i32, %c0_i32_0 : i32, i32
  }
  func.func @transform_4(%arg0: i32) -> (i32, i32) {
    %c0_i32 = arith.constant 0 : i32
    %c0_i32_0 = arith.constant 0 : i32
    %c0_i32_1 = arith.constant 0 : i32
    return %c0_i32, %c0_i32_0 : i32, i32
  }
  func.func @transform_5(%arg0: i32) -> (i32, i32) {
    %c0_i32 = arith.constant 0 : i32
    %c0_i32_0 = arith.constant 0 : i32
    %c0_i32_1 = arith.constant 0 : i32
    return %c0_i32, %c0_i32_0 : i32, i32
  }
  func.func @transform_6(%arg0: i32) -> (i32, i32) {
    %c0_i32 = arith.constant 0 : i32
    %c0_i32_0 = arith.constant 0 : i32
    %c0_i32_1 = arith.constant 0 : i32
    return %c0_i32, %c0_i32_0 : i32, i32
  }
  func.func @transform_7(%arg0: i32) -> (i32, i32) {
    %c0_i32 = arith.constant 0 : i32
    %c0_i32_0 = arith.constant 0 : i32
    %c0_i32_1 = arith.constant 0 : i32
    return %c0_i32, %c0_i32_0 : i32, i32
  }
  func.func @transform_8(%arg0: i32) -> (i32, i32) {
    %c0_i32 = arith.constant 0 : i32
    %c0_i32_0 = arith.constant 0 : i32
    %c0_i32_1 = arith.constant 0 : i32
    return %c0_i32, %c0_i32_0 : i32, i32
  }
  func.func @transform_9(%arg0: i32) -> (i32, i32) {
    %c0_i32 = arith.constant 0 : i32
    %c0_i32_0 = arith.constant 0 : i32
    %c0_i32_1 = arith.constant 0 : i32
    return %c0_i32, %c0_i32_0 : i32, i32
  }
  func.func @transform_10(%arg0: i32) -> (i32, i32) {
    %c0_i32 = arith.constant 0 : i32
    %c0_i32_0 = arith.constant 0 : i32
    %c0_i32_1 = arith.constant 0 : i32
    return %c0_i32, %c0_i32_0 : i32, i32
  }
  func.func @transform_11(%arg0: i32) -> (i32, i32) {
    %c0_i32 = arith.constant 0 : i32
    %c0_i32_0 = arith.constant 0 : i32
    %c0_i32_1 = arith.constant 0 : i32
    return %c0_i32, %c0_i32_0 : i32, i32
  }
  func.func @transform_12(%arg0: i32) -> (i32, i32) {
    %c0_i32 = arith.constant 0 : i32
    %c0_i32_0 = arith.constant 0 : i32
    %c0_i32_1 = arith.constant 0 : i32
    return %c0_i32, %c0_i32_0 : i32, i32
  }
  func.func @transform_13(%arg0: i32) -> (i32, i32) {
    %c0_i32 = arith.constant 0 : i32
    %c0_i32_0 = arith.constant 0 : i32
    %c0_i32_1 = arith.constant 0 : i32
    return %c0_i32, %c0_i32_0 : i32, i32
  }
  func.func @transform_14(%arg0: i32) -> (i32, i32) {
    %c0_i32 = arith.constant 0 : i32
    %c0_i32_0 = arith.constant 0 : i32
    %c0_i32_1 = arith.constant 0 : i32
    return %c0_i32, %c0_i32_0 : i32, i32
  }
  func.func @transform_15(%arg0: i32) -> (i32, i32, i32) {
    %c0_i32 = arith.constant 0 : i32
    %c0_i32_0 = arith.constant 0 : i32
    %c0_i32_1 = arith.constant 0 : i32
    return %arg0, %c0_i32, %c0_i32_0 : i32, i32, i32
  }
}

</mosaic_0001>

<llo_original>
// kernel: tpu_custom_call.1
$region0: #{tpu_custom_call.1}
  #allocation0 [shape = 'u32[]', space=smem, size = 0x4, offset = 0x4, fixed_abs, tag = 'smem constant byte address 0x4 - core index']
  #allocation1 [shape = 'u32[144,128]{1,0:T(1,128)}', space=vmem, size = 0x12000, scoped, tag = 'internal scratch']
  %s0 = inlined_call_operand.vmem [shape: f32[3,128,8], index: 0, kind: input, shape index: {}]
  %s1 = inlined_call_operand.vmem [shape: bf16[3,128,128], index: 1, kind: input, shape index: {}]
  %s2 = inlined_call_operand.vmem [shape: f32[128,128], index: 2, kind: input, shape index: {}]
  %s3 = inlined_call_operand.hbm [shape: f32[128,128], index: 3, kind: input, shape index: {}]
  %s4 = inlined_call_operand.vmem [shape: f32[2,128], index: 4, kind: input, shape index: {}]
  %s5 = inlined_call_operand.hbm [shape: bf16[8,256], index: 5, kind: input, shape index: {}]
  %s6 = inlined_call_operand.vmem [shape: f32[1,256], index: 6, kind: input, shape index: {}]
  %s7 = inlined_call_operand.hbm [shape: bf16[256,128], index: 7, kind: input, shape index: {}]
  %s8 = inlined_call_operand.vmem [shape: f32[1,128], index: 8, kind: input, shape index: {}]
  %s9 = inlined_call_operand.vmem [shape: bf16[128,128], index: 9, kind: input, shape index: {}]
  %s10 = inlined_call_operand.hbm [shape: f32[1,128], index: 10, kind: input, shape index: {}]
  %s11 = inlined_call_operand.hbm [shape: bf16[128,128], index: 11, kind: input, shape index: {}]
  %s12 = inlined_call_operand.vmem [shape: bf16[128,128], index: 12, kind: input, shape index: {}]
  %s13 = inlined_call_operand.hbm [shape: f32[1,128], index: 13, kind: input, shape index: {}]
  %s14 = inlined_call_operand.hbm [shape: bf16[128,128], index: 14, kind: input, shape index: {}]
  %s15 = inlined_call_operand.hbm [shape: f32[3,2,128], index: 15, kind: output, shape index: {}]
  %s16 = sld [smem:[#allocation0]]
  $region121: #{tpu_custom_call.1} parent=0
    _
  %s18 = ssub.s32 1, %s16
  %s19 = scalar_select 0, %s18, %s16
  $region1: #{tpu_custom_call.1} parent=0
    #allocation2 [shape = 'u8[65536]{0}', space=vmem, size = 0x10000, scoped, tag = 'input window, operand 3, single buffered']
    #allocation3 [shape = 's32[2]{0}', space=sflag, size = 0x8, scoped, tag = 'scoped memory for tpu_custom_call.1']
    #allocation4 [shape = 's32[2]{0}', space=sflag, size = 0x8, scoped, tag = 'scoped memory for tpu_custom_call.1']
    #allocation5 [shape = 'u8[4096]{0}', space=vmem, size = 0x1000, scoped, tag = 'input window, operand 5, single buffered']
    #allocation6 [shape = 's32[1]{0}', space=sflag, size = 0x4, scoped, tag = 'scoped memory for tpu_custom_call.1']
    #allocation7 [shape = 'u8[65536]{0}', space=vmem, size = 0x10000, scoped, tag = 'input window, operand 7, single buffered']
    #allocation8 [shape = 'u8[512]{0}', space=vmem, size = 0x400, scoped, tag = 'input window, operand 10, single buffered']
    #allocation9 [shape = 's32[1]{0}', space=sflag, size = 0x4, scoped, tag = 'scoped memory for tpu_custom_call.1']
    #allocation10 [shape = 'u8[32768]{0}', space=vmem, size = 0x8000, scoped, tag = 'input window, operand 11, single buffered']
    #allocation11 [shape = 'u8[512]{0}', space=vmem, size = 0x400, scoped, tag = 'input window, operand 13, single buffered']
    #allocation12 [shape = 's32[1]{0}', space=sflag, size = 0x4, scoped, tag = 'scoped memory for tpu_custom_call.1']
    #allocation13 [shape = 'u8[32768]{0}', space=vmem, size = 0x8000, scoped, tag = 'input window, operand 14, single buffered']
    #allocation14 [shape = 'u8[2048]{0}', space=vmem, size = 0x800, scoped, tag = 'output window, operand 0']
    %20 = vsyncpa [#allocation3], 0
    %21 = vsyncpa [#allocation6], 0
    %22 = vsyncpa [#allocation9], 0
    %23 = vsyncpa [#allocation12], 0
    %24 = vsyncpa [#allocation4], 0
    %s25 = scalar_lea.sflag [#allocation4], 1
    %26 = vsyncpa %s25, 0
    loop: start=0, step=1, limit=5
    $region2: #{tpu_custom_call.1} parent=1 // loop_pre_header
      _
    $region3: #{tpu_custom_call.1} parent=1 // loop_header
      %s28 = sphi 0, %s32
      %p29 = scmp.ge.s32.totalorder %s28, 5
      %s38 = sphi 0, %s40
      %s41 = sphi 0, %s38
      %s42 = sphi 0, %s41
      %s58 = sphi 0, %s42
      %s64 = sphi 0, %s66
      %s67 = sphi 0, %s64
      %s68 = sphi 0, %s67
      %s84 = sphi 0, %s68
      %s88 = sphi 0, %s88
      %s90 = sphi 0, %s88
      %s91 = sphi 0, %s90
      %s105 = sphi 0, %s91
      %s109 = sphi 0, %s109
      %s111 = sphi 0, %s109
      %s112 = sphi 0, %s111
      %s126 = sphi 0, %s112
      %s130 = sphi 0, %s130
      %s132 = sphi 0, %s130
      %s133 = sphi 0, %s132
      %s147 = sphi 0, %s133
      %s151 = sphi 0, %s151
      %s153 = sphi 0, %s151
      %s154 = sphi 0, %s153
      %s168 = sphi 0, %s154
      %s172 = sphi 0, %s172
      %s174 = sphi 0, %s172
      %s175 = sphi 0, %s174
      %s189 = sphi 0, %s175
      %s193 = sphi 0, %s193
      %s195 = sphi 0, %s193
      %s196 = sphi 0, %s195
      %s210 = sphi 0, %s196
      %s214 = sphi 0, %s214
      %s216 = sphi 0, %s214
      %s217 = sphi 0, %s216
      %s231 = sphi 0, %s217
      %s235 = sphi 0, %s235
      %s237 = sphi 0, %s235
      %s238 = sphi 0, %s237
      %s252 = sphi 0, %s238
      %s256 = sphi 0, %s256
      %s258 = sphi 0, %s256
      %s259 = sphi 0, %s258
      %s273 = sphi 0, %s259
      %s277 = sphi 0, %s277
      %s279 = sphi 0, %s277
      %s280 = sphi 0, %s279
      %s294 = sphi 0, %s280
      %s298 = sphi 0, %s298
      %s300 = sphi 0, %s298
      %s301 = sphi 0, %s300
      %s315 = sphi 0, %s301
      %s319 = sphi 0, %s319
      %s321 = sphi 0, %s319
      %s322 = sphi 0, %s321
      %s336 = sphi 0, %s322
      %s340 = sphi 0, %s340
      %s342 = sphi 0, %s340
      %s343 = sphi 0, %s342
      %s357 = sphi 0, %s343
      %s363 = sphi 0, %s365
      %s366 = sphi 0, %s363
      %s367 = sphi 0, %s366
      %s383 = sphi 0, %s367
    $region4: #{tpu_custom_call.1} parent=1 // loop_header_branch
      %31 = sbr.rel (%p29) target = $region8
    $region5: #{tpu_custom_call.1} parent=1 // loop_body
      %s33 = ssub.s32 %s28, 1
      %s34 = ssub.s32 %s28, 2
      %s35 = sadd.s32 %s28, 1
      %s36 = ssub.s32 %s28, %s35
      %p37 = scmp.eq.s32.totalorder %s36, 0
      %s39 = sadd.s32 %s38, 1
      %s40 = scalar_select %p37, %s38, %s39
      %p43 = pneg %p37
      %p44 = scmp.eq.s32.totalorder %s28, 2
      %p45 = por %p43, %p44
      %p46 = scmp.ne.s32.totalorder %s38, %s41
      %p47 = scmp.eq.s32.totalorder %s28, 0
      %p48 = por %p46, %p47
      %p49 = scmp.ne.s32.totalorder %s38, %s41
      %p50 = scmp.eq.s32.totalorder %s33, 2
      %p51 = por %p49, %p50
      %p52 = scmp.ne.s32.totalorder %s41, %s42
      %p53 = scmp.eq.s32.totalorder %s33, 0
      %p54 = por %p52, %p53
      %p55 = scmp.ne.s32.totalorder %s41, %s42
      %p56 = scmp.eq.s32.totalorder %s34, 2
      %p57 = por %p55, %p56
      %p59 = scmp.ne.s32.totalorder %s42, %s58
      %p60 = scmp.eq.s32.totalorder %s34, 0
      %p61 = por %p59, %p60
      %s62 = ssub.s32 %s28, %s35
      %p63 = scmp.eq.s32.totalorder %s62, 0
      %s65 = sadd.s32 %s64, 1
      %s66 = scalar_select %p63, %s64, %s65
      %p69 = pneg %p63
      %p70 = scmp.eq.s32.totalorder %s28, 2
      %p71 = por %p69, %p70
      %p72 = scmp.ne.s32.totalorder %s64, %s67
      %p73 = scmp.eq.s32.totalorder %s28, 0
      %p74 = por %p72, %p73
      %p75 = scmp.ne.s32.totalorder %s64, %s67
      %p76 = scmp.eq.s32.totalorder %s33, 2
      %p77 = por %p75, %p76
      %p78 = scmp.ne.s32.totalorder %s67, %s68
      %p79 = scmp.eq.s32.totalorder %s33, 0
      %p80 = por %p78, %p79
      %p81 = scmp.ne.s32.totalorder %s67, %s68
      %p82 = scmp.eq.s32.totalorder %s34, 2
      %p83 = por %p81, %p82
      %p85 = scmp.ne.s32.totalorder %s68, %s84
      %p86 = scmp.eq.s32.totalorder %s34, 0
      %p87 = por %p85, %p86
      %s89 = sadd.s32 %s88, 1
      %p92 = scmp.eq.s32.totalorder %s28, 2
      %p93 = scmp.ne.s32.totalorder %s88, %s90
      %p94 = scmp.eq.s32.totalorder %s28, 0
      %p95 = por %p93, %p94
      %p96 = scmp.ne.s32.totalorder %s88, %s90
      %p97 = scmp.eq.s32.totalorder %s33, 2
      %p98 = por %p96, %p97
      %p99 = scmp.ne.s32.totalorder %s90, %s91
      %p100 = scmp.eq.s32.totalorder %s33, 0
      %p101 = por %p99, %p100
      %p102 = scmp.ne.s32.totalorder %s90, %s91
      %p103 = scmp.eq.s32.totalorder %s34, 2
      %p104 = por %p102, %p103
      %p106 = scmp.ne.s32.totalorder %s91, %s105
      %p107 = scmp.eq.s32.totalorder %s34, 0
      %p108 = por %p106, %p107
      %s110 = sadd.s32 %s109, 1
      %p113 = scmp.eq.s32.totalorder %s28, 2
      %p114 = scmp.ne.s32.totalorder %s109, %s111
      %p115 = scmp.eq.s32.totalorder %s28, 0
      %p116 = por %p114, %p115
      %p117 = scmp.ne.s32.totalorder %s109, %s111
      %p118 = scmp.eq.s32.totalorder %s33, 2
      %p119 = por %p117, %p118
      %p120 = scmp.ne.s32.totalorder %s111, %s112
      %p121 = scmp.eq.s32.totalorder %s33, 0
      %p122 = por %p120, %p121
      %p123 = scmp.ne.s32.totalorder %s111, %s112
      %p124 = scmp.eq.s32.totalorder %s34, 2
      %p125 = por %p123, %p124
      %p127 = scmp.ne.s32.totalorder %s112, %s126
      %p128 = scmp.eq.s32.totalorder %s34, 0
      %p129 = por %p127, %p128
      %s131 = sadd.s32 %s130, 1
      %p134 = scmp.eq.s32.totalorder %s28, 2
      %p135 = scmp.ne.s32.totalorder %s130, %s132
      %p136 = scmp.eq.s32.totalorder %s28, 0
      %p137 = por %p135, %p136
      %p138 = scmp.ne.s32.totalorder %s130, %s132
      %p139 = scmp.eq.s32.totalorder %s33, 2
      %p140 = por %p138, %p139
      %p141 = scmp.ne.s32.totalorder %s132, %s133
      %p142 = scmp.eq.s32.totalorder %s33, 0
      %p143 = por %p141, %p142
      %p144 = scmp.ne.s32.totalorder %s132, %s133
      %p145 = scmp.eq.s32.totalorder %s34, 2
      %p146 = por %p144, %p145
      %p148 = scmp.ne.s32.totalorder %s133, %s147
      %p149 = scmp.eq.s32.totalorder %s34, 0
      %p150 = por %p148, %p149
      %s152 = sadd.s32 %s151, 1
      %p155 = scmp.eq.s32.totalorder %s28, 2
      %p156 = scmp.ne.s32.totalorder %s151, %s153
      %p157 = scmp.eq.s32.totalorder %s28, 0
      %p158 = por %p156, %p157
      %p159 = scmp.ne.s32.totalorder %s151, %s153
      %p160 = scmp.eq.s32.totalorder %s33, 2
      %p161 = por %p159, %p160
      %p162 = scmp.ne.s32.totalorder %s153, %s154
      %p163 = scmp.eq.s32.totalorder %s33, 0
      %p164 = por %p162, %p163
      %p165 = scmp.ne.s32.totalorder %s153, %s154
      %p166 = scmp.eq.s32.totalorder %s34, 2
      %p167 = por %p165, %p166
      %p169 = scmp.ne.s32.totalorder %s154, %s168
      %p170 = scmp.eq.s32.totalorder %s34, 0
      %p171 = por %p169, %p170
      %s173 = sadd.s32 %s172, 1
      %p176 = scmp.eq.s32.totalorder %s28, 2
      %p177 = scmp.ne.s32.totalorder %s172, %s174
      %p178 = scmp.eq.s32.totalorder %s28, 0
      %p179 = por %p177, %p178
      %p180 = scmp.ne.s32.totalorder %s172, %s174
      %p181 = scmp.eq.s32.totalorder %s33, 2
      %p182 = por %p180, %p181
      %p183 = scmp.ne.s32.totalorder %s174, %s175
      %p184 = scmp.eq.s32.totalorder %s33, 0
      %p185 = por %p183, %p184
      %p186 = scmp.ne.s32.totalorder %s174, %s175
      %p187 = scmp.eq.s32.totalorder %s34, 2
      %p188 = por %p186, %p187
      %p190 = scmp.ne.s32.totalorder %s175, %s189
      %p191 = scmp.eq.s32.totalorder %s34, 0
      %p192 = por %p190, %p191
      %s194 = sadd.s32 %s193, 1
      %p197 = scmp.eq.s32.totalorder %s28, 2
      %p198 = scmp.ne.s32.totalorder %s193, %s195
      %p199 = scmp.eq.s32.totalorder %s28, 0
      %p200 = por %p198, %p199
      %p201 = scmp.ne.s32.totalorder %s193, %s195
      %p202 = scmp.eq.s32.totalorder %s33, 2
      %p203 = por %p201, %p202
      %p204 = scmp.ne.s32.totalorder %s195, %s196
      %p205 = scmp.eq.s32.totalorder %s33, 0
      %p206 = por %p204, %p205
      %p207 = scmp.ne.s32.totalorder %s195, %s196
      %p208 = scmp.eq.s32.totalorder %s34, 2
      %p209 = por %p207, %p208
      %p211 = scmp.ne.s32.totalorder %s196, %s210
      %p212 = scmp.eq.s32.totalorder %s34, 0
      %p213 = por %p211, %p212
      %s215 = sadd.s32 %s214, 1
      %p218 = scmp.eq.s32.totalorder %s28, 2
      %p219 = scmp.ne.s32.totalorder %s214, %s216
      %p220 = scmp.eq.s32.totalorder %s28, 0
      %p221 = por %p219, %p220
      %p222 = scmp.ne.s32.totalorder %s214, %s216
      %p223 = scmp.eq.s32.totalorder %s33, 2
      %p224 = por %p222, %p223
      %p225 = scmp.ne.s32.totalorder %s216, %s217
      %p226 = scmp.eq.s32.totalorder %s33, 0
      %p227 = por %p225, %p226
      %p228 = scmp.ne.s32.totalorder %s216, %s217
      %p229 = scmp.eq.s32.totalorder %s34, 2
      %p230 = por %p228, %p229
      %p232 = scmp.ne.s32.totalorder %s217, %s231
      %p233 = scmp.eq.s32.totalorder %s34, 0
      %p234 = por %p232, %p233
      %s236 = sadd.s32 %s235, 1
      %p239 = scmp.eq.s32.totalorder %s28, 2
      %p240 = scmp.ne.s32.totalorder %s235, %s237
      %p241 = scmp.eq.s32.totalorder %s28, 0
      %p242 = por %p240, %p241
      %p243 = scmp.ne.s32.totalorder %s235, %s237
      %p244 = scmp.eq.s32.totalorder %s33, 2
      %p245 = por %p243, %p244
      %p246 = scmp.ne.s32.totalorder %s237, %s238
      %p247 = scmp.eq.s32.totalorder %s33, 0
      %p248 = por %p246, %p247
      %p249 = scmp.ne.s32.totalorder %s237, %s238
      %p250 = scmp.eq.s32.totalorder %s34, 2
      %p251 = por %p249, %p250
      %p253 = scmp.ne.s32.totalorder %s238, %s252
      %p254 = scmp.eq.s32.totalorder %s34, 0
      %p255 = por %p253, %p254
      %s257 = sadd.s32 %s256, 1
      %p260 = scmp.eq.s32.totalorder %s28, 2
      %p261 = scmp.ne.s32.totalorder %s256, %s258
      %p262 = scmp.eq.s32.totalorder %s28, 0
      %p263 = por %p261, %p262
      %p264 = scmp.ne.s32.totalorder %s256, %s258
      %p265 = scmp.eq.s32.totalorder %s33, 2
      %p266 = por %p264, %p265
      %p267 = scmp.ne.s32.totalorder %s258, %s259
      %p268 = scmp.eq.s32.totalorder %s33, 0
      %p269 = por %p267, %p268
      %p270 = scmp.ne.s32.totalorder %s258, %s259
      %p271 = scmp.eq.s32.totalorder %s34, 2
      %p272 = por %p270, %p271
      %p274 = scmp.ne.s32.totalorder %s259, %s273
      %p275 = scmp.eq.s32.totalorder %s34, 0
      %p276 = por %p274, %p275
      %s278 = sadd.s32 %s277, 1
      %p281 = scmp.eq.s32.totalorder %s28, 2
      %p282 = scmp.ne.s32.totalorder %s277, %s279
      %p283 = scmp.eq.s32.totalorder %s28, 0
      %p284 = por %p282, %p283
      %p285 = scmp.ne.s32.totalorder %s277, %s279
      %p286 = scmp.eq.s32.totalorder %s33, 2
      %p287 = por %p285, %p286
      %p288 = scmp.ne.s32.totalorder %s279, %s280
      %p289 = scmp.eq.s32.totalorder %s33, 0
      %p290 = por %p288, %p289
      %p291 = scmp.ne.s32.totalorder %s279, %s280
      %p292 = scmp.eq.s32.totalorder %s34, 2
      %p293 = por %p291, %p292
      %p295 = scmp.ne.s32.totalorder %s280, %s294
      %p296 = scmp.eq.s32.totalorder %s34, 0
      %p297 = por %p295, %p296
      %s299 = sadd.s32 %s298, 1
      %p302 = scmp.eq.s32.totalorder %s28, 2
      %p303 = scmp.ne.s32.totalorder %s298, %s300
      %p304 = scmp.eq.s32.totalorder %s28, 0
      %p305 = por %p303, %p304
      %p306 = scmp.ne.s32.totalorder %s298, %s300
      %p307 = scmp.eq.s32.totalorder %s33, 2
      %p308 = por %p306, %p307
      %p309 = scmp.ne.s32.totalorder %s300, %s301
      %p310 = scmp.eq.s32.totalorder %s33, 0
      %p311 = por %p309, %p310
      %p312 = scmp.ne.s32.totalorder %s300, %s301
      %p313 = scmp.eq.s32.totalorder %s34, 2
      %p314 = por %p312, %p313
      %p316 = scmp.ne.s32.totalorder %s301, %s315
      %p317 = scmp.eq.s32.totalorder %s34, 0
      %p318 = por %p316, %p317
      %s320 = sadd.s32 %s319, 1
      %p323 = scmp.eq.s32.totalorder %s28, 2
      %p324 = scmp.ne.s32.totalorder %s319, %s321
      %p325 = scmp.eq.s32.totalorder %s28, 0
      %p326 = por %p324, %p325
      %p327 = scmp.ne.s32.totalorder %s319, %s321
      %p328 = scmp.eq.s32.totalorder %s33, 2
      %p329 = por %p327, %p328
      %p330 = scmp.ne.s32.totalorder %s321, %s322
      %p331 = scmp.eq.s32.totalorder %s33, 0
      %p332 = por %p330, %p331
      %p333 = scmp.ne.s32.totalorder %s321, %s322
      %p334 = scmp.eq.s32.totalorder %s34, 2
      %p335 = por %p333, %p334
      %p337 = scmp.ne.s32.totalorder %s322, %s336
      %p338 = scmp.eq.s32.totalorder %s34, 0
      %p339 = por %p337, %p338
      %s341 = sadd.s32 %s340, 1
      %p344 = scmp.eq.s32.totalorder %s28, 2
      %p345 = scmp.ne.s32.totalorder %s340, %s342
      %p346 = scmp.eq.s32.totalorder %s28, 0
      %p347 = por %p345, %p346
      %p348 = scmp.ne.s32.totalorder %s340, %s342
      %p349 = scmp.eq.s32.totalorder %s33, 2
      %p350 = por %p348, %p349
      %p351 = scmp.ne.s32.totalorder %s342, %s343
      %p352 = scmp.eq.s32.totalorder %s33, 0
      %p353 = por %p351, %p352
      %p354 = scmp.ne.s32.totalorder %s342, %s343
      %p355 = scmp.eq.s32.totalorder %s34, 2
      %p356 = por %p354, %p355
      %p358 = scmp.ne.s32.totalorder %s343, %s357
      %p359 = scmp.eq.s32.totalorder %s34, 0
      %p360 = por %p358, %p359
      %s361 = ssub.s32 %s28, %s35
      %p362 = scmp.eq.s32.totalorder %s361, 0
      %s364 = sadd.s32 %s363, 1
      %s365 = scalar_select %p362, %s363, %s364
      %p368 = pneg %p362
      %p369 = scmp.eq.s32.totalorder %s28, 2
      %p370 = por %p368, %p369
      %p371 = scmp.ne.s32.totalorder %s363, %s366
      %p372 = scmp.eq.s32.totalorder %s28, 0
      %p373 = por %p371, %p372
      %p374 = scmp.ne.s32.totalorder %s363, %s366
      %p375 = scmp.eq.s32.totalorder %s33, 2
      %p376 = por %p374, %p375
      %p377 = scmp.ne.s32.totalorder %s366, %s367
      %p378 = scmp.eq.s32.totalorder %s33, 0
      %p379 = por %p377, %p378
      %p380 = scmp.ne.s32.totalorder %s366, %s367
      %p381 = scmp.eq.s32.totalorder %s34, 2
      %p382 = por %p380, %p381
      %p384 = scmp.ne.s32.totalorder %s367, %s383
      %p385 = scmp.eq.s32.totalorder %s34, 0
      %p386 = por %p384, %p385
      %p387 = scmp.le.s32.totalorder 1, %s28
      %p388 = scmp.lt.s32.totalorder %s28, 4
      %p389 = pnand %p387, %p388
      %p390 = pneg %p389
      // Predicated region
      $region9: #{tpu_custom_call.1} parent=5 // pred_check
        _
      $region10: #{tpu_custom_call.1} parent=5 // pred_check_branch
        %392 = sbr.rel (%p389) target = $region12
      $region11: #{tpu_custom_call.1} parent=5 // pred_region
        %s393 = ssub.s32 %s28, 1
        // Predicated region
        $region13: #{tpu_custom_call.1} parent=11 // pred_check
          %p394 = pneg %p101
        $region14: #{tpu_custom_call.1} parent=11 // pred_check_branch
          %396 = sbr.rel (%p394) target = $region16
        $region15: #{tpu_custom_call.1} parent=11 // pred_region
          _
        $region16: #{tpu_custom_call.1} parent=11 // pred_fallthru
          _
        // Predicated region
        $region17: #{tpu_custom_call.1} parent=11 // pred_check
          %p397 = pneg %p122
        $region18: #{tpu_custom_call.1} parent=11 // pred_check_branch
          %399 = sbr.rel (%p397) target = $region20
        $region19: #{tpu_custom_call.1} parent=11 // pred_region
          %s401 = ssub.s32 2048, 2048
          %402 = vsyncadd [#allocation3], %s401
          %s403 = sshll.u32 [#allocation2], 4
          %s404 = int_to_ptr.vmem [resolvable:$true] %s403
          %409 = dma.hbm_to_vmem [thread:$0]  %s3, 2048, %s404, [#allocation3], 128, 128, 8
        $region20: #{tpu_custom_call.1} parent=11 // pred_fallthru
          _
        // Predicated region
        $region21: #{tpu_custom_call.1} parent=11 // pred_check
          %p410 = pneg %p143
        $region22: #{tpu_custom_call.1} parent=11 // pred_check_branch
          %412 = sbr.rel (%p410) target = $region24
        $region23: #{tpu_custom_call.1} parent=11 // pred_region
          _
        $region24: #{tpu_custom_call.1} parent=11 // pred_fallthru
          _
        // Predicated region
        $region25: #{tpu_custom_call.1} parent=11 // pred_check
          %p413 = pneg %p164
        $region26: #{tpu_custom_call.1} parent=11 // pred_check_branch
          %415 = sbr.rel (%p413) target = $region28
        $region27: #{tpu_custom_call.1} parent=11 // pred_region
          %s417 = ssub.s32 128, 128
          %418 = vsyncadd [#allocation6], %s417
          %s420 = sshll.u32 [#allocation5], 4
          %s421 = int_to_ptr.vmem [resolvable:$true] %s420
          %423 = dma.hbm_to_vmem [thread:$0]  %s5, 128, %s421, [#allocation6]
        $region28: #{tpu_custom_call.1} parent=11 // pred_fallthru
          _
        // Predicated region
        $region29: #{tpu_custom_call.1} parent=11 // pred_check
          %p424 = pneg %p185
        $region30: #{tpu_custom_call.1} parent=11 // pred_check_branch
          %426 = sbr.rel (%p424) target = $region32
        $region31: #{tpu_custom_call.1} parent=11 // pred_region
          _
        $region32: #{tpu_custom_call.1} parent=11 // pred_fallthru
          _
        // Predicated region
        $region33: #{tpu_custom_call.1} parent=11 // pred_check
          %p427 = pneg %p206
        $region34: #{tpu_custom_call.1} parent=11 // pred_check_branch
          %429 = sbr.rel (%p427) target = $region36
        $region35: #{tpu_custom_call.1} parent=11 // pred_region
          %s431 = ssub.s32 2048, 2048
          %432 = vsyncadd [#allocation6], %s431
          %s433 = sshll.u32 [#allocation7], 4
          %s434 = int_to_ptr.vmem [resolvable:$true] %s433
          %439 = dma.hbm_to_vmem [thread:$0]  %s7, 2048, %s434, [#allocation6], 64, 64, 4
        $region36: #{tpu_custom_call.1} parent=11 // pred_fallthru
          _
        // Predicated region
        $region37: #{tpu_custom_call.1} parent=11 // pred_check
          %p440 = pneg %p227
        $region38: #{tpu_custom_call.1} parent=11 // pred_check_branch
          %442 = sbr.rel (%p440) target = $region40
        $region39: #{tpu_custom_call.1} parent=11 // pred_region
          _
        $region40: #{tpu_custom_call.1} parent=11 // pred_fallthru
          _
        // Predicated region
        $region41: #{tpu_custom_call.1} parent=11 // pred_check
          %p443 = pneg %p248
        $region42: #{tpu_custom_call.1} parent=11 // pred_check_branch
          %445 = sbr.rel (%p443) target = $region44
        $region43: #{tpu_custom_call.1} parent=11 // pred_region
          _
        $region44: #{tpu_custom_call.1} parent=11 // pred_fallthru
          _
        // Predicated region
        $region45: #{tpu_custom_call.1} parent=11 // pred_check
          %p446 = pneg %p269
        $region46: #{tpu_custom_call.1} parent=11 // pred_check_branch
          %448 = sbr.rel (%p446) target = $region48
        $region47: #{tpu_custom_call.1} parent=11 // pred_region
          %s450 = ssub.s32 16, 16
          %451 = vsyncadd [#allocation9], %s450
          %s453 = sshll.u32 [#allocation8], 4
          %s454 = int_to_ptr.vmem [resolvable:$true] %s453
          %456 = dma.hbm_to_vmem [thread:$0]  %s10, 16, %s454, [#allocation9]
        $region48: #{tpu_custom_call.1} parent=11 // pred_fallthru
          _
        // Predicated region
        $region49: #{tpu_custom_call.1} parent=11 // pred_check
          %p457 = pneg %p290
        $region50: #{tpu_custom_call.1} parent=11 // pred_check_branch
          %459 = sbr.rel (%p457) target = $region52
        $region51: #{tpu_custom_call.1} parent=11 // pred_region
          %s461 = ssub.s32 1024, 1024
          %462 = vsyncadd [#allocation9], %s461
          %s463 = sshll.u32 [#allocation10], 4
          %s464 = int_to_ptr.vmem [resolvable:$true] %s463
          %469 = dma.hbm_to_vmem [thread:$0]  %s11, 1024, %s464, [#allocation9], 64, 64, 4
        $region52: #{tpu_custom_call.1} parent=11 // pred_fallthru
          _
        // Predicated region
        $region53: #{tpu_custom_call.1} parent=11 // pred_check
          %p470 = pneg %p311
        $region54: #{tpu_custom_call.1} parent=11 // pred_check_branch
          %472 = sbr.rel (%p470) target = $region56
        $region55: #{tpu_custom_call.1} parent=11 // pred_region
          _
        $region56: #{tpu_custom_call.1} parent=11 // pred_fallthru
          _
        // Predicated region
        $region57: #{tpu_custom_call.1} parent=11 // pred_check
          %p473 = pneg %p332
        $region58: #{tpu_custom_call.1} parent=11 // pred_check_branch
          %475 = sbr.rel (%p473) target = $region60
        $region59: #{tpu_custom_call.1} parent=11 // pred_region
          %s477 = ssub.s32 16, 16
          %478 = vsyncadd [#allocation12], %s477
          %s480 = sshll.u32 [#allocation11], 4
          %s481 = int_to_ptr.vmem [resolvable:$true] %s480
          %483 = dma.hbm_to_vmem [thread:$0]  %s13, 16, %s481, [#allocation12]
        $region60: #{tpu_custom_call.1} parent=11 // pred_fallthru
          _
        // Predicated region
        $region61: #{tpu_custom_call.1} parent=11 // pred_check
          %p484 = pneg %p353
        $region62: #{tpu_custom_call.1} parent=11 // pred_check_branch
          %486 = sbr.rel (%p484) target = $region64
        $region63: #{tpu_custom_call.1} parent=11 // pred_region
          %s488 = ssub.s32 1024, 1024
          %489 = vsyncadd [#allocation12], %s488
          %s490 = sshll.u32 [#allocation13], 4
          %s491 = int_to_ptr.vmem [resolvable:$true] %s490
          %496 = dma.hbm_to_vmem [thread:$0]  %s14, 1024, %s491, [#allocation12], 64, 64, 4
        $region64: #{tpu_custom_call.1} parent=11 // pred_fallthru
          _
      $region12: #{tpu_custom_call.1} parent=5 // pred_fallthru
        _
      %p497 = scmp.lt.s32.totalorder %s28, 3
      // Predicated region
      $region65: #{tpu_custom_call.1} parent=5 // pred_check
        %p498 = pneg %p497
      $region66: #{tpu_custom_call.1} parent=5 // pred_check_branch
        %500 = sbr.rel (%p498) target = $region68
      $region67: #{tpu_custom_call.1} parent=5 // pred_region
        // Predicated region
        $region69: #{tpu_custom_call.1} parent=67 // pred_check
          %p501 = pneg %p48
        $region70: #{tpu_custom_call.1} parent=67 // pred_check_branch
          %503 = sbr.rel (%p501) target = $region72
        $region71: #{tpu_custom_call.1} parent=67 // pred_region
          %p504 = scmp.lt.s32.totalorder %s28, 2
          %s505 = scalar_select %p504, %s28, 2
          %s506 = smul.addr %s505, 16
          %s507 = smul.addr %s506, 8
          %s508 = scalar_lea.vmem %s0, %s507
        $region72: #{tpu_custom_call.1} parent=67 // pred_fallthru
          _
        // Predicated region
        $region73: #{tpu_custom_call.1} parent=67 // pred_check
          %p509 = pneg %p74
        $region74: #{tpu_custom_call.1} parent=67 // pred_check_branch
          %511 = sbr.rel (%p509) target = $region76
        $region75: #{tpu_custom_call.1} parent=67 // pred_region
          %p512 = scmp.lt.s32.totalorder %s28, 2
          %s513 = scalar_select %p512, %s28, 2
          %s514 = smul.addr %s513, 16
          %s515 = smul.addr %s514, 4
          %s516 = scalar_lea.vmem %s1, %s515
        $region76: #{tpu_custom_call.1} parent=67 // pred_fallthru
          _
      $region68: #{tpu_custom_call.1} parent=5 // pred_fallthru
        _
      %p517 = scmp.le.s32.totalorder 1, %s28
      %p518 = scmp.lt.s32.totalorder %s28, 4
      %p519 = pnand %p517, %p518
      %p520 = pneg %p519
      // Predicated region
      $region77: #{tpu_custom_call.1} parent=5 // pred_check
        _
      $region78: #{tpu_custom_call.1} parent=5 // pred_check_branch
        %522 = sbr.rel (%p519) target = $region80
      $region79: #{tpu_custom_call.1} parent=5 // pred_region
        %s523 = ssub.s32 %s28, 1
        // Predicated region
        $region81: #{tpu_custom_call.1} parent=79 // pred_check
          %p524 = pneg %p122
        $region82: #{tpu_custom_call.1} parent=79 // pred_check_branch
          %526 = sbr.rel (%p524) target = $region84
        $region83: #{tpu_custom_call.1} parent=79 // pred_region
          %527 = dma.done [#allocation3], 2048
        $region84: #{tpu_custom_call.1} parent=79 // pred_fallthru
          _
        // Predicated region
        $region85: #{tpu_custom_call.1} parent=79 // pred_check
          %p528 = pneg %p164
        $region86: #{tpu_custom_call.1} parent=79 // pred_check_branch
          %530 = sbr.rel (%p528) target = $region88
        $region87: #{tpu_custom_call.1} parent=79 // pred_region
          %531 = dma.done [#allocation6], 128
        $region88: #{tpu_custom_call.1} parent=79 // pred_fallthru
          _
        // Predicated region
        $region89: #{tpu_custom_call.1} parent=79 // pred_check
          %p532 = pneg %p206
        $region90: #{tpu_custom_call.1} parent=79 // pred_check_branch
          %534 = sbr.rel (%p532) target = $region92
        $region91: #{tpu_custom_call.1} parent=79 // pred_region
          %535 = dma.done [#allocation6], 2048
        $region92: #{tpu_custom_call.1} parent=79 // pred_fallthru
          _
        // Predicated region
        $region93: #{tpu_custom_call.1} parent=79 // pred_check
          %p536 = pneg %p269
        $region94: #{tpu_custom_call.1} parent=79 // pred_check_branch
          %538 = sbr.rel (%p536) target = $region96
        $region95: #{tpu_custom_call.1} parent=79 // pred_region
          %539 = dma.done [#allocation9], 16
        $region96: #{tpu_custom_call.1} parent=79 // pred_fallthru
          _
        // Predicated region
        $region97: #{tpu_custom_call.1} parent=79 // pred_check
          %p540 = pneg %p290
        $region98: #{tpu_custom_call.1} parent=79 // pred_check_branch
          %542 = sbr.rel (%p540) target = $region100
        $region99: #{tpu_custom_call.1} parent=79 // pred_region
          %543 = dma.done [#allocation9], 1024
        $region100: #{tpu_custom_call.1} parent=79 // pred_fallthru
          _
        // Predicated region
        $region101: #{tpu_custom_call.1} parent=79 // pred_check
          %p544 = pneg %p332
        $region102: #{tpu_custom_call.1} parent=79 // pred_check_branch
          %546 = sbr.rel (%p544) target = $region104
        $region103: #{tpu_custom_call.1} parent=79 // pred_region
          %547 = dma.done [#allocation12], 16
        $region104: #{tpu_custom_call.1} parent=79 // pred_fallthru
          _
        // Predicated region
        $region105: #{tpu_custom_call.1} parent=79 // pred_check
          %p548 = pneg %p353
        $region106: #{tpu_custom_call.1} parent=79 // pred_check_branch
          %550 = sbr.rel (%p548) target = $region108
        $region107: #{tpu_custom_call.1} parent=79 // pred_region
          %551 = dma.done [#allocation12], 1024
        $region108: #{tpu_custom_call.1} parent=79 // pred_fallthru
          _
        %p552 = scmp.lt.s32.totalorder %s33, 2
        %s553 = scalar_select %p552, %s33, 2
        %s554 = smul.addr %s553, 16
        %s555 = smul.addr %s554, 8
        %s556 = scalar_lea.vmem %s0, %s555
        %p557 = pneg %p54
        %p558 = pneg %p51
        %p559 = scmp.lt.s32.totalorder %s33, 2
        %s560 = scalar_select %p559, %s33, 2
        %s561 = smul.addr %s560, 16
        %s562 = smul.addr %s561, 4
        %s563 = scalar_lea.vmem %s1, %s562
        %p564 = pneg %p80
        %p565 = pneg %p77
        %p566 = pneg %p101
        %p567 = pneg %p98
        %p568 = pneg %p122
        %p569 = pneg %p119
        %p570 = pneg %p143
        %p571 = pneg %p140
        %p572 = pneg %p164
        %p573 = pneg %p161
        %p574 = pneg %p185
        %p575 = pneg %p182
        %p576 = pneg %p206
        %p577 = pneg %p203
        %p578 = pneg %p227
        %p579 = pneg %p224
        %p580 = pneg %p248
        %p581 = pneg %p245
        %p582 = pneg %p269
        %p583 = pneg %p266
        %p584 = pneg %p290
        %p585 = pneg %p287
        %p586 = pneg %p311
        %p587 = pneg %p308
        %p588 = pneg %p332
        %p589 = pneg %p329
        %p590 = pneg %p353
        %p591 = pneg %p350
        %p592 = pneg %p379
        %p593 = pneg %p376
        %s594 = sand.u32 %s366, 1
        %s595 = scalar_lea.sflag [#allocation4], %s594
        %s596 = sand.u32 %s366, 1
        %s597 = smul.addr %s596, 2
        %s598 = scalar_lea.vmem [#allocation14], %s597
        %p599 = scmp.lt.s32.totalorder %s33, 2
        %s600 = scalar_select %p599, %s33, 2
        %s601 = smul.addr %s600, 16
        %s602 = smul.addr %s601, 8
        %s603 = scalar_lea.vmem %s0, %s602
        %p604 = scmp.lt.s32.totalorder %s33, 2
        %s605 = scalar_select %p604, %s33, 2
        %s606 = smul.addr %s605, 16
        %s607 = smul.addr %s606, 4
        %s608 = scalar_lea.vmem %s1, %s607
        %v610 = vld [vmem:[%s608] sm:$0xf]
        %v611 = vld [vmem:[%s608 + $0x4] sm:$0xf]
        %v612 = vld [vmem:[%s608 + $0x8] sm:$0xf]
        %v613 = vld [vmem:[%s608 + $0xc] sm:$0xf]
        %v614 = vld [vmem:[%s608 + $0x10] sm:$0xf]
        %v615 = vld [vmem:[%s608 + $0x14] sm:$0xf]
        %v616 = vld [vmem:[%s608 + $0x18] sm:$0xf]
        %v617 = vld [vmem:[%s608 + $0x1c] sm:$0xf]
        %v618 = vld [vmem:[%s608 + $0x20] sm:$0xf]
        %v619 = vld [vmem:[%s608 + $0x24] sm:$0xf]
        %v620 = vld [vmem:[%s608 + $0x28] sm:$0xf]
        %v621 = vld [vmem:[%s608 + $0x2c] sm:$0xf]
        %v622 = vld [vmem:[%s608 + $0x30] sm:$0xf]
        %v623 = vld [vmem:[%s608 + $0x34] sm:$0xf]
        %v624 = vld [vmem:[%s608 + $0x38] sm:$0xf]
        %v625 = vld [vmem:[%s608 + $0x3c] sm:$0xf]
        %v626 = vld [vmem:[%s603] sm:$0xff]
        %v627 = vld [vmem:[%s603 + $0x8] sm:$0xff]
        %v628 = vld [vmem:[%s603 + $0x10] sm:$0xff]
        %v629 = vld [vmem:[%s603 + $0x18] sm:$0xff]
        %v630 = vld [vmem:[%s603 + $0x20] sm:$0xff]
        %v631 = vld [vmem:[%s603 + $0x28] sm:$0xff]
        %v632 = vld [vmem:[%s603 + $0x30] sm:$0xff]
        %v633 = vld [vmem:[%s603 + $0x38] sm:$0xff]
        %v634 = vld [vmem:[%s603 + $0x40] sm:$0xff]
        %v635 = vld [vmem:[%s603 + $0x48] sm:$0xff]
        %v636 = vld [vmem:[%s603 + $0x50] sm:$0xff]
        %v637 = vld [vmem:[%s603 + $0x58] sm:$0xff]
        %v638 = vld [vmem:[%s603 + $0x60] sm:$0xff]
        %v639 = vld [vmem:[%s603 + $0x68] sm:$0xff]
        %v640 = vld [vmem:[%s603 + $0x70] sm:$0xff]
        %v641 = vld [vmem:[%s603 + $0x78] sm:$0xff]
        %v642 = vpack.c.bf16 %v627, %v626
        %v643 = vpack.c.bf16 %v629, %v628
        %v644 = vpack.c.bf16 %v631, %v630
        %v645 = vpack.c.bf16 %v633, %v632
        %v646 = vpack.c.bf16 %v635, %v634
        %v647 = vpack.c.bf16 %v637, %v636
        %v648 = vpack.c.bf16 %v639, %v638
        %v649 = vpack.c.bf16 %v641, %v640
        %v650 = vld [vmem:[#allocation5] sm:$0xff]
        %v651 = vld [vmem:[%s6] sm:$0x3]
        %v653 = vlaneseq
        %v654 = vshrl.u32 %v653, 7
        %v655 = vsub.s32 0, %v654
        %v656 = vrot.slane %v651, %v655
        %v657 = vlaneseq
        %v658 = vshrl.u32 %v657, 7
        %v659 = vsub.s32 1, %v658
        %v660 = vrot.slane %v651, %v659
        %v664 = vunpack.c.l.b16 %v650
        %v665 = vunpack.c.h.b16 %v650
        %v666 = vpack.c.b16 %v664, %v664
        %v667 = vpack.c.b16 %v665, %v665
        %vm668 = vcmask 64512
        %v670 = vsel %vm668, %v642, 0
        %v673 = vsel %vm668, %v643, 0
        %v676 = vsel %vm668, %v644, 0
        %v679 = vsel %vm668, %v645, 0
        %v682 = vsel %vm668, %v646, 0
        %v685 = vsel %vm668, %v647, 0
        %v688 = vsel %vm668, %v648, 0
        %v691 = vsel %vm668, %v649, 0
        %vm693 = vcmask 1043456
        %v695 = vsel %vm693, %v666, 0
        %v698 = vsel %vm693, %v667, 0
        %700 = vmatprep.subr.bf16.mxu0 %v698
        %701 = vmatpush1.bf16.msra.mxu0 %v695
        %702 = vmatprep.subr.bf16.mxu0 0
        %703 = vmatpush1.bf16.msra.mxu0 0
        %704 = vmatprep.subr.bf16.mxu0 0
        %705 = vmatpush1.bf16.msra.mxu0 0
        %706 = vmatprep.subr.bf16.mxu0 0
        %707 = vmatpush1.bf16.msra.mxu0 0
        %708 = vmatprep.subr.bf16.mxu0 0
        %709 = vmatpush1.bf16.msra.mxu0 0
        %710 = vmatprep.subr.bf16.mxu0 0
        %711 = vmatpush1.bf16.msra.mxu0 0
        %712 = vmatprep.subr.bf16.mxu0 0
        %713 = vmatpush1.bf16.msra.mxu0 0
        %714 = vmatprep.subr.bf16.mxu0 0
        %715 = vmatpush1.bf16.msra.mxu0 0
        %716 = vmatprep.subr.bf16.mxu0 0
        %717 = vmatpush1.bf16.msra.mxu0 0
        %718 = vmatprep.subr.bf16.mxu0 0
        %719 = vmatpush1.bf16.msra.mxu0 0
        %720 = vmatprep.subr.bf16.mxu0 0
        %721 = vmatpush1.bf16.msra.mxu0 0
        %722 = vmatprep.subr.bf16.mxu0 0
        %723 = vmatpush1.bf16.msra.mxu0 0
        %724 = vmatprep.subr.bf16.mxu0 0
        %725 = vmatpush1.bf16.msra.mxu0 0
        %726 = vmatprep.subr.bf16.mxu0 0
        %727 = vmatpush1.bf16.msra.mxu0 0
        %728 = vmatprep.subr.bf16.mxu0 0
        %729 = vmatpush1.bf16.msra.mxu0 0
        %730 = vmatprep.subr.bf16.mxu0 0
        %731 = vmatpush1.bf16.msra.mxu0 0
        %732 = vmatprep.mubr.bf16.mxu0 0
        %733 = vmatmul.mubr.bf16.gmra.mrb[0].mxu0 %v670
        %v734 = vpop.f32.mrb[0].mxu0
        %v735 = vadd.f32 %v656, %v734
        %v736 = vpop.f32.mrb[0].mxu0
        %v737 = vadd.f32 %v660, %v736
        %v738 = vpop.f32.mrb[0].mxu0
        %v739 = vadd.f32 %v656, %v738
        %v740 = vpop.f32.mrb[0].mxu0
        %v741 = vadd.f32 %v660, %v740
        %742 = vmatprep.mubr.bf16.mxu0 0
        %743 = vmatmul.mubr.bf16.gmra.mrb[0].mxu0 %v673
        %v744 = vpop.f32.mrb[0].mxu0
        %v745 = vadd.f32 %v656, %v744
        %v746 = vpop.f32.mrb[0].mxu0
        %v747 = vadd.f32 %v660, %v746
        %v748 = vpop.f32.mrb[0].mxu0
        %v749 = vadd.f32 %v656, %v748
        %v750 = vpop.f32.mrb[0].mxu0
        %v751 = vadd.f32 %v660, %v750
        %752 = vmatprep.mubr.bf16.mxu0 0
        %753 = vmatmul.mubr.bf16.gmra.mrb[0].mxu0 %v676
        %v754 = vpop.f32.mrb[0].mxu0
        %v755 = vadd.f32 %v656, %v754
        %v756 = vpop.f32.mrb[0].mxu0
        %v757 = vadd.f32 %v660, %v756
        %v758 = vpop.f32.mrb[0].mxu0
        %v759 = vadd.f32 %v656, %v758
        %v760 = vpop.f32.mrb[0].mxu0
        %v761 = vadd.f32 %v660, %v760
        %762 = vmatprep.mubr.bf16.mxu0 0
        %763 = vmatmul.mubr.bf16.gmra.mrb[0].mxu0 %v679
        %v764 = vpop.f32.mrb[0].mxu0
        %v765 = vadd.f32 %v656, %v764
        %v766 = vpop.f32.mrb[0].mxu0
        %v767 = vadd.f32 %v660, %v766
        %v768 = vpop.f32.mrb[0].mxu0
        %v769 = vadd.f32 %v656, %v768
        %v770 = vpop.f32.mrb[0].mxu0
        %v771 = vadd.f32 %v660, %v770
        %772 = vmatprep.mubr.bf16.mxu0 0
        %773 = vmatmul.mubr.bf16.gmra.mrb[0].mxu0 %v682
        %v774 = vpop.f32.mrb[0].mxu0
        %v775 = vadd.f32 %v656, %v774
        %v776 = vpop.f32.mrb[0].mxu0
        %v777 = vadd.f32 %v660, %v776
        %v778 = vpop.f32.mrb[0].mxu0
        %v779 = vadd.f32 %v656, %v778
        %v780 = vpop.f32.mrb[0].mxu0
        %v781 = vadd.f32 %v660, %v780
        %782 = vmatprep.mubr.bf16.mxu0 0
        %783 = vmatmul.mubr.bf16.gmra.mrb[0].mxu0 %v685
        %v784 = vpop.f32.mrb[0].mxu0
        %v785 = vadd.f32 %v656, %v784
        %v786 = vpop.f32.mrb[0].mxu0
        %v787 = vadd.f32 %v660, %v786
        %v788 = vpop.f32.mrb[0].mxu0
        %v789 = vadd.f32 %v656, %v788
        %v790 = vpop.f32.mrb[0].mxu0
        %v791 = vadd.f32 %v660, %v790
        %792 = vmatprep.mubr.bf16.mxu0 0
        %793 = vmatmul.mubr.bf16.gmra.mrb[0].mxu0 %v688
        %v794 = vpop.f32.mrb[0].mxu0
        %v795 = vadd.f32 %v656, %v794
        %v796 = vpop.f32.mrb[0].mxu0
        %v797 = vadd.f32 %v660, %v796
        %v798 = vpop.f32.mrb[0].mxu0
        %v799 = vadd.f32 %v656, %v798
        %v800 = vpop.f32.mrb[0].mxu0
        %v801 = vadd.f32 %v660, %v800
        %802 = vmatprep.mubr.bf16.mxu0 0
        %803 = vmatmul.mubr.bf16.gmra.mrb[0].mxu0 %v691
        %v804 = vpop.f32.mrb[0].mxu0
        %v805 = vadd.f32 %v656, %v804
        %v806 = vpop.f32.mrb[0].mxu0
        %v807 = vadd.f32 %v660, %v806
        %v808 = vpop.f32.mrb[0].mxu0
        %v809 = vadd.f32 %v656, %v808
        %v810 = vpop.f32.mrb[0].mxu0
        %v811 = vadd.f32 %v660, %v810
        %812 = vdwg.mxu0
        %vm813 = vcmp.gt.f32.partialorder %v735, 0.0
        %vm814 = vcmp.gt.f32.partialorder %v737, 0.0
        %vm815 = vcmp.gt.f32.partialorder %v739, 0.0
        %vm816 = vcmp.gt.f32.partialorder %v741, 0.0
        %vm817 = vcmp.gt.f32.partialorder %v745, 0.0
        %vm818 = vcmp.gt.f32.partialorder %v747, 0.0
        %vm819 = vcmp.gt.f32.partialorder %v749, 0.0
        %vm820 = vcmp.gt.f32.partialorder %v751, 0.0
        %vm821 = vcmp.gt.f32.partialorder %v755, 0.0
        %vm822 = vcmp.gt.f32.partialorder %v757, 0.0
        %vm823 = vcmp.gt.f32.partialorder %v759, 0.0
        %vm824 = vcmp.gt.f32.partialorder %v761, 0.0
        %vm825 = vcmp.gt.f32.partialorder %v765, 0.0
        %vm826 = vcmp.gt.f32.partialorder %v767, 0.0
        %vm827 = vcmp.gt.f32.partialorder %v769, 0.0
        %vm828 = vcmp.gt.f32.partialorder %v771, 0.0
        %vm829 = vcmp.gt.f32.partialorder %v775, 0.0
        %vm830 = vcmp.gt.f32.partialorder %v777, 0.0
        %vm831 = vcmp.gt.f32.partialorder %v779, 0.0
        %vm832 = vcmp.gt.f32.partialorder %v781, 0.0
        %vm833 = vcmp.gt.f32.partialorder %v785, 0.0
        %vm834 = vcmp.gt.f32.partialorder %v787, 0.0
        %vm835 = vcmp.gt.f32.partialorder %v789, 0.0
        %vm836 = vcmp.gt.f32.partialorder %v791, 0.0
        %vm837 = vcmp.gt.f32.partialorder %v795, 0.0
        %vm838 = vcmp.gt.f32.partialorder %v797, 0.0
        %vm839 = vcmp.gt.f32.partialorder %v799, 0.0
        %vm840 = vcmp.gt.f32.partialorder %v801, 0.0
        %vm841 = vcmp.gt.f32.partialorder %v805, 0.0
        %vm842 = vcmp.gt.f32.partialorder %v807, 0.0
        %vm843 = vcmp.gt.f32.partialorder %v809, 0.0
        %vm844 = vcmp.gt.f32.partialorder %v811, 0.0
        %v845 = vmul.f32 %v735, 0.01
        %v846 = vmul.f32 %v737, 0.01
        %v847 = vmul.f32 %v739, 0.01
        %v848 = vmul.f32 %v741, 0.01
        %v849 = vmul.f32 %v745, 0.01
        %v850 = vmul.f32 %v747, 0.01
        %v851 = vmul.f32 %v749, 0.01
        %v852 = vmul.f32 %v751, 0.01
        %v853 = vmul.f32 %v755, 0.01
        %v854 = vmul.f32 %v757, 0.01
        %v855 = vmul.f32 %v759, 0.01
        %v856 = vmul.f32 %v761, 0.01
        %v857 = vmul.f32 %v765, 0.01
        %v858 = vmul.f32 %v767, 0.01
        %v859 = vmul.f32 %v769, 0.01
        %v860 = vmul.f32 %v771, 0.01
        %v861 = vmul.f32 %v775, 0.01
        %v862 = vmul.f32 %v777, 0.01
        %v863 = vmul.f32 %v779, 0.01
        %v864 = vmul.f32 %v781, 0.01
        %v865 = vmul.f32 %v785, 0.01
        %v866 = vmul.f32 %v787, 0.01
        %v867 = vmul.f32 %v789, 0.01
        %v868 = vmul.f32 %v791, 0.01
        %v869 = vmul.f32 %v795, 0.01
        %v870 = vmul.f32 %v797, 0.01
        %v871 = vmul.f32 %v799, 0.01
        %v872 = vmul.f32 %v801, 0.01
        %v873 = vmul.f32 %v805, 0.01
        %v874 = vmul.f32 %v807, 0.01
        %v875 = vmul.f32 %v809, 0.01
        %v876 = vmul.f32 %v811, 0.01
        %v877 = vsel %vm813, %v735, %v845
        %v878 = vsel %vm814, %v737, %v846
        %v879 = vsel %vm815, %v739, %v847
        %v880 = vsel %vm816, %v741, %v848
        %v881 = vsel %vm817, %v745, %v849
        %v882 = vsel %vm818, %v747, %v850
        %v883 = vsel %vm819, %v749, %v851
        %v884 = vsel %vm820, %v751, %v852
        %v885 = vsel %vm821, %v755, %v853
        %v886 = vsel %vm822, %v757, %v854
        %v887 = vsel %vm823, %v759, %v855
        %v888 = vsel %vm824, %v761, %v856
        %v889 = vsel %vm825, %v765, %v857
        %v890 = vsel %vm826, %v767, %v858
        %v891 = vsel %vm827, %v769, %v859
        %v892 = vsel %vm828, %v771, %v860
        %v893 = vsel %vm829, %v775, %v861
        %v894 = vsel %vm830, %v777, %v862
        %v895 = vsel %vm831, %v779, %v863
        %v896 = vsel %vm832, %v781, %v864
        %v897 = vsel %vm833, %v785, %v865
        %v898 = vsel %vm834, %v787, %v866
        %v899 = vsel %vm835, %v789, %v867
        %v900 = vsel %vm836, %v791, %v868
        %v901 = vsel %vm837, %v795, %v869
        %v902 = vsel %vm838, %v797, %v870
        %v903 = vsel %vm839, %v799, %v871
        %v904 = vsel %vm840, %v801, %v872
        %v905 = vsel %vm841, %v805, %v873
        %v906 = vsel %vm842, %v807, %v874
        %v907 = vsel %vm843, %v809, %v875
        %v908 = vsel %vm844, %v811, %v876
        %v909 = vpack.c.bf16 %v879, %v877
        %v910 = vpack.c.bf16 %v880, %v878
        %v911 = vpack.c.bf16 %v883, %v881
        %v912 = vpack.c.bf16 %v884, %v882
        %v913 = vpack.c.bf16 %v887, %v885
        %v914 = vpack.c.bf16 %v888, %v886
        %v915 = vpack.c.bf16 %v891, %v889
        %v916 = vpack.c.bf16 %v892, %v890
        %v917 = vpack.c.bf16 %v895, %v893
        %v918 = vpack.c.bf16 %v896, %v894
        %v919 = vpack.c.bf16 %v899, %v897
        %v920 = vpack.c.bf16 %v900, %v898
        %v921 = vpack.c.bf16 %v903, %v901
        %v922 = vpack.c.bf16 %v904, %v902
        %v923 = vpack.c.bf16 %v907, %v905
        %v924 = vpack.c.bf16 %v908, %v906
        %v925 = vld [vmem:[#allocation7] sm:$0xf]
        %v926 = vld [vmem:[#allocation7 + $0x4] sm:$0xf]
        %v927 = vld [vmem:[#allocation7 + $0x8] sm:$0xf]
        %v928 = vld [vmem:[#allocation7 + $0xc] sm:$0xf]
        %v929 = vld [vmem:[#allocation7 + $0x10] sm:$0xf]
        %v930 = vld [vmem:[#allocation7 + $0x14] sm:$0xf]
        %v931 = vld [vmem:[#allocation7 + $0x18] sm:$0xf]
        %v932 = vld [vmem:[#allocation7 + $0x1c] sm:$0xf]
        %v933 = vld [vmem:[#allocation7 + $0x20] sm:$0xf]
        %v934 = vld [vmem:[#allocation7 + $0x24] sm:$0xf]
        %v935 = vld [vmem:[#allocation7 + $0x28] sm:$0xf]
        %v936 = vld [vmem:[#allocation7 + $0x2c] sm:$0xf]
        %v937 = vld [vmem:[#allocation7 + $0x30] sm:$0xf]
        %v938 = vld [vmem:[#allocation7 + $0x34] sm:$0xf]
        %v939 = vld [vmem:[#allocation7 + $0x38] sm:$0xf]
        %v940 = vld [vmem:[#allocation7 + $0x3c] sm:$0xf]
        %v941 = vld [vmem:[#allocation7 + $0x40] sm:$0xf]
        %v942 = vld [vmem:[#allocation7 + $0x44] sm:$0xf]
        %v943 = vld [vmem:[#allocation7 + $0x48] sm:$0xf]
        %v944 = vld [vmem:[#allocation7 + $0x4c] sm:$0xf]
        %v945 = vld [vmem:[#allocation7 + $0x50] sm:$0xf]
        %v946 = vld [vmem:[#allocation7 + $0x54] sm:$0xf]
        %v947 = vld [vmem:[#allocation7 + $0x58] sm:$0xf]
        %v948 = vld [vmem:[#allocation7 + $0x5c] sm:$0xf]
        %v949 = vld [vmem:[#allocation7 + $0x60] sm:$0xf]
        %v950 = vld [vmem:[#allocation7 + $0x64] sm:$0xf]
        %v951 = vld [vmem:[#allocation7 + $0x68] sm:$0xf]
        %v952 = vld [vmem:[#allocation7 + $0x6c] sm:$0xf]
        %v953 = vld [vmem:[#allocation7 + $0x70] sm:$0xf]
        %v954 = vld [vmem:[#allocation7 + $0x74] sm:$0xf]
        %v955 = vld [vmem:[#allocation7 + $0x78] sm:$0xf]
        %v956 = vld [vmem:[#allocation7 + $0x7c] sm:$0xf]
        %v957 = vld [vmem:[%s8] sm:$0x1]
        %v959 = vlaneseq
        %v960 = vshrl.u32 %v959, 7
        %v961 = vsub.s32 0, %v960
        %v962 = vrot.slane %v957, %v961
        %v996 = vunpack.c.l.b16 %v925
        %v997 = vunpack.c.l.b16 %v926
        %v998 = vunpack.c.l.b16 %v927
        %v999 = vunpack.c.l.b16 %v928
        %v1000 = vunpack.c.l.b16 %v929
        %v1001 = vunpack.c.l.b16 %v930
        %v1002 = vunpack.c.l.b16 %v931
        %v1003 = vunpack.c.l.b16 %v932
        %v1004 = vunpack.c.l.b16 %v933
        %v1005 = vunpack.c.l.b16 %v934
        %v1006 = vunpack.c.l.b16 %v935
        %v1007 = vunpack.c.l.b16 %v936
        %v1008 = vunpack.c.l.b16 %v937
        %v1009 = vunpack.c.l.b16 %v938
        %v1010 = vunpack.c.l.b16 %v939
        %v1011 = vunpack.c.l.b16 %v940
        %v1012 = vunpack.c.l.b16 %v941
        %v1013 = vunpack.c.l.b16 %v942
        %v1014 = vunpack.c.l.b16 %v943
        %v1015 = vunpack.c.l.b16 %v944
        %v1016 = vunpack.c.l.b16 %v945
        %v1017 = vunpack.c.l.b16 %v946
        %v1018 = vunpack.c.l.b16 %v947
        %v1019 = vunpack.c.l.b16 %v948
        %v1020 = vunpack.c.l.b16 %v949
        %v1021 = vunpack.c.l.b16 %v950
        %v1022 = vunpack.c.l.b16 %v951
        %v1023 = vunpack.c.l.b16 %v952
        %v1024 = vunpack.c.l.b16 %v953
        %v1025 = vunpack.c.l.b16 %v954
        %v1026 = vunpack.c.l.b16 %v955
        %v1027 = vunpack.c.l.b16 %v956
        %v1028 = vpack.c.b16 %v997, %v996
        %v1029 = vpack.c.b16 %v999, %v998
        %v1030 = vpack.c.b16 %v1001, %v1000
        %v1031 = vpack.c.b16 %v1003, %v1002
        %v1032 = vpack.c.b16 %v1005, %v1004
        %v1033 = vpack.c.b16 %v1007, %v1006
        %v1034 = vpack.c.b16 %v1009, %v1008
        %v1035 = vpack.c.b16 %v1011, %v1010
        %v1036 = vpack.c.b16 %v1013, %v1012
        %v1037 = vpack.c.b16 %v1015, %v1014
        %v1038 = vpack.c.b16 %v1017, %v1016
        %v1039 = vpack.c.b16 %v1019, %v1018
        %v1040 = vpack.c.b16 %v1021, %v1020
        %v1041 = vpack.c.b16 %v1023, %v1022
        %v1042 = vpack.c.b16 %v1025, %v1024
        %v1043 = vpack.c.b16 %v1027, %v1026
        %1060 = vmatprep.subr.bf16.mxu0 0
        %1061 = vmatpush1.bf16.msra.mxu0 %v1028
        %1062 = vmatprep.subr.bf16.mxu0 0
        %1063 = vmatpush1.bf16.msra.mxu0 %v1029
        %1064 = vmatprep.subr.bf16.mxu0 0
        %1065 = vmatpush1.bf16.msra.mxu0 %v1030
        %1066 = vmatprep.subr.bf16.mxu0 0
        %1067 = vmatpush1.bf16.msra.mxu0 %v1031
        %1068 = vmatprep.subr.bf16.mxu0 0
        %1069 = vmatpush1.bf16.msra.mxu0 %v1032
        %1070 = vmatprep.subr.bf16.mxu0 0
        %1071 = vmatpush1.bf16.msra.mxu0 %v1033
        %1072 = vmatprep.subr.bf16.mxu0 0
        %1073 = vmatpush1.bf16.msra.mxu0 %v1034
        %1074 = vmatprep.subr.bf16.mxu0 0
        %1075 = vmatpush1.bf16.msra.mxu0 %v1035
        %1076 = vmatprep.subr.bf16.mxu0 0
        %1077 = vmatpush1.bf16.msra.mxu0 %v1036
        %1078 = vmatprep.subr.bf16.mxu0 0
        %1079 = vmatpush1.bf16.msra.mxu0 %v1037
        %1080 = vmatprep.subr.bf16.mxu0 0
        %1081 = vmatpush1.bf16.msra.mxu0 %v1038
        %1082 = vmatprep.subr.bf16.mxu0 0
        %1083 = vmatpush1.bf16.msra.mxu0 %v1039
        %1084 = vmatprep.subr.bf16.mxu0 0
        %1085 = vmatpush1.bf16.msra.mxu0 %v1040
        %1086 = vmatprep.subr.bf16.mxu0 0
        %1087 = vmatpush1.bf16.msra.mxu0 %v1041
        %1088 = vmatprep.subr.bf16.mxu0 0
        %1089 = vmatpush1.bf16.msra.mxu0 %v1042
        %1090 = vmatprep.subr.bf16.mxu0 0
        %1091 = vmatpush1.bf16.msra.mxu0 %v1043
        %1092 = vmatprep.mubr.bf16.mxu0 %v910
        %1093 = vmatmul.mubr.bf16.gmra.mrb[0].mxu0 %v909
        %v1094 = vpop.f32.mrb[0].mxu0
        %v1095 = vadd.f32 %v962, %v1094
        %v1096 = vpop.f32.mrb[0].mxu0
        %v1097 = vpop.f32.mrb[0].mxu0
        %v1098 = vadd.f32 %v962, %v1097
        %v1099 = vpop.f32.mrb[0].mxu0
        %1100 = vmatprep.mubr.bf16.mxu0 %v912
        %1101 = vmatmul.mubr.bf16.gmra.mrb[0].mxu0 %v911
        %v1102 = vpop.f32.mrb[0].mxu0
        %v1103 = vadd.f32 %v962, %v1102
        %v1104 = vpop.f32.mrb[0].mxu0
        %v1105 = vpop.f32.mrb[0].mxu0
        %v1106 = vadd.f32 %v962, %v1105
        %v1107 = vpop.f32.mrb[0].mxu0
        %1108 = vmatprep.mubr.bf16.mxu0 %v914
        %1109 = vmatmul.mubr.bf16.gmra.mrb[0].mxu0 %v913
        %v1110 = vpop.f32.mrb[0].mxu0
        %v1111 = vadd.f32 %v962, %v1110
        %v1112 = vpop.f32.mrb[0].mxu0
        %v1113 = vpop.f32.mrb[0].mxu0
        %v1114 = vadd.f32 %v962, %v1113
        %v1115 = vpop.f32.mrb[0].mxu0
        %1116 = vmatprep.mubr.bf16.mxu0 %v916
        %1117 = vmatmul.mubr.bf16.gmra.mrb[0].mxu0 %v915
        %v1118 = vpop.f32.mrb[0].mxu0
        %v1119 = vadd.f32 %v962, %v1118
        %v1120 = vpop.f32.mrb[0].mxu0
        %v1121 = vpop.f32.mrb[0].mxu0
        %v1122 = vadd.f32 %v962, %v1121
        %v1123 = vpop.f32.mrb[0].mxu0
        %1124 = vmatprep.mubr.bf16.mxu0 %v918
        %1125 = vmatmul.mubr.bf16.gmra.mrb[0].mxu0 %v917
        %v1126 = vpop.f32.mrb[0].mxu0
        %v1127 = vadd.f32 %v962, %v1126
        %v1128 = vpop.f32.mrb[0].mxu0
        %v1129 = vpop.f32.mrb[0].mxu0
        %v1130 = vadd.f32 %v962, %v1129
        %v1131 = vpop.f32.mrb[0].mxu0
        %1132 = vmatprep.mubr.bf16.mxu0 %v920
        %1133 = vmatmul.mubr.bf16.gmra.mrb[0].mxu0 %v919
        %v1134 = vpop.f32.mrb[0].mxu0
        %v1135 = vadd.f32 %v962, %v1134
        %v1136 = vpop.f32.mrb[0].mxu0
        %v1137 = vpop.f32.mrb[0].mxu0
        %v1138 = vadd.f32 %v962, %v1137
        %v1139 = vpop.f32.mrb[0].mxu0
        %1140 = vmatprep.mubr.bf16.mxu0 %v922
        %1141 = vmatmul.mubr.bf16.gmra.mrb[0].mxu0 %v921
        %v1142 = vpop.f32.mrb[0].mxu0
        %v1143 = vadd.f32 %v962, %v1142
        %v1144 = vpop.f32.mrb[0].mxu0
        %v1145 = vpop.f32.mrb[0].mxu0
        %v1146 = vadd.f32 %v962, %v1145
        %v1147 = vpop.f32.mrb[0].mxu0
        %1148 = vmatprep.mubr.bf16.mxu0 %v924
        %1149 = vmatmul.mubr.bf16.gmra.mrb[0].mxu0 %v923
        %v1150 = vpop.f32.mrb[0].mxu0
        %v1151 = vadd.f32 %v962, %v1150
        %v1152 = vpop.f32.mrb[0].mxu0
        %v1153 = vpop.f32.mrb[0].mxu0
        %v1154 = vadd.f32 %v962, %v1153
        %v1155 = vpop.f32.mrb[0].mxu0
        %1156 = vdwg.mxu0
        %vm1157 = vcmp.gt.f32.partialorder %v1095, 0.0
        %vm1158 = vcmp.gt.f32.partialorder %v1098, 0.0
        %vm1159 = vcmp.gt.f32.partialorder %v1103, 0.0
        %vm1160 = vcmp.gt.f32.partialorder %v1106, 0.0
        %vm1161 = vcmp.gt.f32.partialorder %v1111, 0.0
        %vm1162 = vcmp.gt.f32.partialorder %v1114, 0.0
        %vm1163 = vcmp.gt.f32.partialorder %v1119, 0.0
        %vm1164 = vcmp.gt.f32.partialorder %v1122, 0.0
        %vm1165 = vcmp.gt.f32.partialorder %v1127, 0.0
        %vm1166 = vcmp.gt.f32.partialorder %v1130, 0.0
        %vm1167 = vcmp.gt.f32.partialorder %v1135, 0.0
        %vm1168 = vcmp.gt.f32.partialorder %v1138, 0.0
        %vm1169 = vcmp.gt.f32.partialorder %v1143, 0.0
        %vm1170 = vcmp.gt.f32.partialorder %v1146, 0.0
        %vm1171 = vcmp.gt.f32.partialorder %v1151, 0.0
        %vm1172 = vcmp.gt.f32.partialorder %v1154, 0.0
        %v1173 = vmul.f32 %v1095, 0.01
        %v1174 = vmul.f32 %v1098, 0.01
        %v1175 = vmul.f32 %v1103, 0.01
        %v1176 = vmul.f32 %v1106, 0.01
        %v1177 = vmul.f32 %v1111, 0.01
        %v1178 = vmul.f32 %v1114, 0.01
        %v1179 = vmul.f32 %v1119, 0.01
        %v1180 = vmul.f32 %v1122, 0.01
        %v1181 = vmul.f32 %v1127, 0.01
        %v1182 = vmul.f32 %v1130, 0.01
        %v1183 = vmul.f32 %v1135, 0.01
        %v1184 = vmul.f32 %v1138, 0.01
        %v1185 = vmul.f32 %v1143, 0.01
        %v1186 = vmul.f32 %v1146, 0.01
        %v1187 = vmul.f32 %v1151, 0.01
        %v1188 = vmul.f32 %v1154, 0.01
        %v1189 = vsel %vm1157, %v1095, %v1173
        %v1190 = vsel %vm1158, %v1098, %v1174
        %v1191 = vsel %vm1159, %v1103, %v1175
        %v1192 = vsel %vm1160, %v1106, %v1176
        %v1193 = vsel %vm1161, %v1111, %v1177
        %v1194 = vsel %vm1162, %v1114, %v1178
        %v1195 = vsel %vm1163, %v1119, %v1179
        %v1196 = vsel %vm1164, %v1122, %v1180
        %v1197 = vsel %vm1165, %v1127, %v1181
        %v1198 = vsel %vm1166, %v1130, %v1182
        %v1199 = vsel %vm1167, %v1135, %v1183
        %v1200 = vsel %vm1168, %v1138, %v1184
        %v1201 = vsel %vm1169, %v1143, %v1185
        %v1202 = vsel %vm1170, %v1146, %v1186
        %v1203 = vsel %vm1171, %v1151, %v1187
        %v1204 = vsel %vm1172, %v1154, %v1188
        %v1205 = vpack.c.bf16 %v1190, %v1189
        %v1206 = vpack.c.bf16 %v1192, %v1191
        %v1207 = vpack.c.bf16 %v1194, %v1193
        %v1208 = vpack.c.bf16 %v1196, %v1195
        %v1209 = vpack.c.bf16 %v1198, %v1197
        %v1210 = vpack.c.bf16 %v1200, %v1199
        %v1211 = vpack.c.bf16 %v1202, %v1201
        %v1212 = vpack.c.bf16 %v1204, %v1203
        %v1213 = vld [vmem:[%s9] sm:$0xf]
        %v1214 = vld [vmem:[%s9 + $0x4] sm:$0xf]
        %v1215 = vld [vmem:[%s9 + $0x8] sm:$0xf]
        %v1216 = vld [vmem:[%s9 + $0xc] sm:$0xf]
        %v1217 = vld [vmem:[%s9 + $0x10] sm:$0xf]
        %v1218 = vld [vmem:[%s9 + $0x14] sm:$0xf]
        %v1219 = vld [vmem:[%s9 + $0x18] sm:$0xf]
        %v1220 = vld [vmem:[%s9 + $0x1c] sm:$0xf]
        %v1221 = vld [vmem:[%s9 + $0x20] sm:$0xf]
        %v1222 = vld [vmem:[%s9 + $0x24] sm:$0xf]
        %v1223 = vld [vmem:[%s9 + $0x28] sm:$0xf]
        %v1224 = vld [vmem:[%s9 + $0x2c] sm:$0xf]
        %v1225 = vld [vmem:[%s9 + $0x30] sm:$0xf]
        %v1226 = vld [vmem:[%s9 + $0x34] sm:$0xf]
        %v1227 = vld [vmem:[%s9 + $0x38] sm:$0xf]
        %v1228 = vld [vmem:[%s9 + $0x3c] sm:$0xf]
        %v1245 = vunpack.c.l.b16 %v1213
        %v1246 = vunpack.c.l.b16 %v1214
        %v1247 = vunpack.c.l.b16 %v1215
        %v1248 = vunpack.c.l.b16 %v1216
        %v1249 = vunpack.c.l.b16 %v1217
        %v1250 = vunpack.c.l.b16 %v1218
        %v1251 = vunpack.c.l.b16 %v1219
        %v1252 = vunpack.c.l.b16 %v1220
        %v1253 = vunpack.c.l.b16 %v1221
        %v1254 = vunpack.c.l.b16 %v1222
        %v1255 = vunpack.c.l.b16 %v1223
        %v1256 = vunpack.c.l.b16 %v1224
        %v1257 = vunpack.c.l.b16 %v1225
        %v1258 = vunpack.c.l.b16 %v1226
        %v1259 = vunpack.c.l.b16 %v1227
        %v1260 = vunpack.c.l.b16 %v1228
        %v1261 = vpack.c.b16 %v1246, %v1245
        %v1262 = vpack.c.b16 %v1248, %v1247
        %v1263 = vpack.c.b16 %v1250, %v1249
        %v1264 = vpack.c.b16 %v1252, %v1251
        %v1265 = vpack.c.b16 %v1254, %v1253
        %v1266 = vpack.c.b16 %v1256, %v1255
        %v1267 = vpack.c.b16 %v1258, %v1257
        %v1268 = vpack.c.b16 %v1260, %v1259
        %1277 = vmatprep.subr.bf16.mxu0 0
        %1278 = vmatpush1.bf16.msra.mxu0 %v1261
        %1279 = vmatprep.subr.bf16.mxu0 0
        %1280 = vmatpush1.bf16.msra.mxu0 %v1262
        %1281 = vmatprep.subr.bf16.mxu0 0
        %1282 = vmatpush1.bf16.msra.mxu0 %v1263
        %1283 = vmatprep.subr.bf16.mxu0 0
        %1284 = vmatpush1.bf16.msra.mxu0 %v1264
        %1285 = vmatprep.subr.bf16.mxu0 0
        %1286 = vmatpush1.bf16.msra.mxu0 %v1265
        %1287 = vmatprep.subr.bf16.mxu0 0
        %1288 = vmatpush1.bf16.msra.mxu0 %v1266
        %1289 = vmatprep.subr.bf16.mxu0 0
        %1290 = vmatpush1.bf16.msra.mxu0 %v1267
        %1291 = vmatprep.subr.bf16.mxu0 0
        %1292 = vmatpush1.bf16.msra.mxu0 %v1268
        %1293 = vmatprep.subr.bf16.mxu0 0
        %1294 = vmatpush1.bf16.msra.mxu0 0
        %1295 = vmatprep.subr.bf16.mxu0 0
        %1296 = vmatpush1.bf16.msra.mxu0 0
        %1297 = vmatprep.subr.bf16.mxu0 0
        %1298 = vmatpush1.bf16.msra.mxu0 0
        %1299 = vmatprep.subr.bf16.mxu0 0
        %1300 = vmatpush1.bf16.msra.mxu0 0
        %1301 = vmatprep.subr.bf16.mxu0 0
        %1302 = vmatpush1.bf16.msra.mxu0 0
        %1303 = vmatprep.subr.bf16.mxu0 0
        %1304 = vmatpush1.bf16.msra.mxu0 0
        %1305 = vmatprep.subr.bf16.mxu0 0
        %1306 = vmatpush1.bf16.msra.mxu0 0
        %1307 = vmatprep.subr.bf16.mxu0 0
        %1308 = vmatpush1.bf16.msra.mxu0 0
        %1309 = vmatprep.mubr.bf16.mxu0 0
        %1310 = vmatmul.mubr.bf16.gmra.mrb[0].mxu0 %v1205
        %v1311 = vpop.f32.mrb[0].mxu0
        %v1312 = vadd.f32 0.0, %v1311
        %v1313 = vpop.f32.mrb[0].mxu0
        %v1314 = vpop.f32.mrb[0].mxu0
        %v1315 = vadd.f32 0.0, %v1314
        %v1316 = vpop.f32.mrb[0].mxu0
        %1317 = vmatprep.mubr.bf16.mxu0 0
        %1318 = vmatmul.mubr.bf16.gmra.mrb[0].mxu0 %v1206
        %v1319 = vpop.f32.mrb[0].mxu0
        %v1320 = vadd.f32 0.0, %v1319
        %v1321 = vpop.f32.mrb[0].mxu0
        %v1322 = vpop.f32.mrb[0].mxu0
        %v1323 = vadd.f32 0.0, %v1322
        %v1324 = vpop.f32.mrb[0].mxu0
        %1325 = vmatprep.mubr.bf16.mxu0 0
        %1326 = vmatmul.mubr.bf16.gmra.mrb[0].mxu0 %v1207
        %v1327 = vpop.f32.mrb[0].mxu0
        %v1328 = vadd.f32 0.0, %v1327
        %v1329 = vpop.f32.mrb[0].mxu0
        %v1330 = vpop.f32.mrb[0].mxu0
        %v1331 = vadd.f32 0.0, %v1330
        %v1332 = vpop.f32.mrb[0].mxu0
        %1333 = vmatprep.mubr.bf16.mxu0 0
        %1334 = vmatmul.mubr.bf16.gmra.mrb[0].mxu0 %v1208
        %v1335 = vpop.f32.mrb[0].mxu0
        %v1336 = vadd.f32 0.0, %v1335
        %v1337 = vpop.f32.mrb[0].mxu0
        %v1338 = vpop.f32.mrb[0].mxu0
        %v1339 = vadd.f32 0.0, %v1338
        %v1340 = vpop.f32.mrb[0].mxu0
        %1341 = vmatprep.mubr.bf16.mxu0 0
        %1342 = vmatmul.mubr.bf16.gmra.mrb[0].mxu0 %v1209
        %v1343 = vpop.f32.mrb[0].mxu0
        %v1344 = vadd.f32 0.0, %v1343
        %v1345 = vpop.f32.mrb[0].mxu0
        %v1346 = vpop.f32.mrb[0].mxu0
        %v1347 = vadd.f32 0.0, %v1346
        %v1348 = vpop.f32.mrb[0].mxu0
        %1349 = vmatprep.mubr.bf16.mxu0 0
        %1350 = vmatmul.mubr.bf16.gmra.mrb[0].mxu0 %v1210
        %v1351 = vpop.f32.mrb[0].mxu0
        %v1352 = vadd.f32 0.0, %v1351
        %v1353 = vpop.f32.mrb[0].mxu0
        %v1354 = vpop.f32.mrb[0].mxu0
        %v1355 = vadd.f32 0.0, %v1354
        %v1356 = vpop.f32.mrb[0].mxu0
        %1357 = vmatprep.mubr.bf16.mxu0 0
        %1358 = vmatmul.mubr.bf16.gmra.mrb[0].mxu0 %v1211
        %v1359 = vpop.f32.mrb[0].mxu0
        %v1360 = vadd.f32 0.0, %v1359
        %v1361 = vpop.f32.mrb[0].mxu0
        %v1362 = vpop.f32.mrb[0].mxu0
        %v1363 = vadd.f32 0.0, %v1362
        %v1364 = vpop.f32.mrb[0].mxu0
        %1365 = vmatprep.mubr.bf16.mxu0 0
        %1366 = vmatmul.mubr.bf16.gmra.mrb[0].mxu0 %v1212
        %v1367 = vpop.f32.mrb[0].mxu0
        %v1368 = vadd.f32 0.0, %v1367
        %v1369 = vpop.f32.mrb[0].mxu0
        %v1370 = vpop.f32.mrb[0].mxu0
        %v1371 = vadd.f32 0.0, %v1370
        %v1372 = vpop.f32.mrb[0].mxu0
        %1373 = vdwg.mxu0
        %v1374 = vpack.c.bf16 %v1315, %v1312
        %v1375 = vpack.c.bf16 %v1323, %v1320
        %v1376 = vpack.c.bf16 %v1331, %v1328
        %v1377 = vpack.c.bf16 %v1339, %v1336
        %v1378 = vpack.c.bf16 %v1347, %v1344
        %v1379 = vpack.c.bf16 %v1355, %v1352
        %v1380 = vpack.c.bf16 %v1363, %v1360
        %v1381 = vpack.c.bf16 %v1371, %v1368
        %v1382 = vld [vmem:[#allocation8] sm:$0x1]
        %v1384 = vlaneseq
        %v1385 = vshrl.u32 %v1384, 7
        %v1386 = vsub.s32 0, %v1385
        %v1387 = vrot.slane %v1382, %v1386
        %v1405 = vunpack.c.l.b16 %v610
        %v1406 = vunpack.c.l.b16 %v611
        %v1407 = vunpack.c.l.b16 %v612
        %v1408 = vunpack.c.l.b16 %v613
        %v1409 = vunpack.c.l.b16 %v614
        %v1410 = vunpack.c.l.b16 %v615
        %v1411 = vunpack.c.l.b16 %v616
        %v1412 = vunpack.c.l.b16 %v617
        %v1413 = vunpack.c.l.b16 %v618
        %v1414 = vunpack.c.l.b16 %v619
        %v1415 = vunpack.c.l.b16 %v620
        %v1416 = vunpack.c.l.b16 %v621
        %v1417 = vunpack.c.l.b16 %v622
        %v1418 = vunpack.c.l.b16 %v623
        %v1419 = vunpack.c.l.b16 %v624
        %v1420 = vunpack.c.l.b16 %v625
        %v1421 = vpack.c.b16 %v1406, %v1405
        %v1422 = vpack.c.b16 %v1408, %v1407
        %v1423 = vpack.c.b16 %v1410, %v1409
        %v1424 = vpack.c.b16 %v1412, %v1411
        %v1425 = vpack.c.b16 %v1414, %v1413
        %v1426 = vpack.c.b16 %v1416, %v1415
        %v1427 = vpack.c.b16 %v1418, %v1417
        %v1428 = vpack.c.b16 %v1420, %v1419
        %1437 = vmatprep.subr.bf16.mxu0 0
        %1438 = vmatpush1.bf16.msra.mxu0 %v1374
        %1439 = vmatprep.subr.bf16.mxu0 0
        %1440 = vmatpush1.bf16.msra.mxu0 %v1375
        %1441 = vmatprep.subr.bf16.mxu0 0
        %1442 = vmatpush1.bf16.msra.mxu0 %v1376
        %1443 = vmatprep.subr.bf16.mxu0 0
        %1444 = vmatpush1.bf16.msra.mxu0 %v1377
        %1445 = vmatprep.subr.bf16.mxu0 0
        %1446 = vmatpush1.bf16.msra.mxu0 %v1378
        %1447 = vmatprep.subr.bf16.mxu0 0
        %1448 = vmatpush1.bf16.msra.mxu0 %v1379
        %1449 = vmatprep.subr.bf16.mxu0 0
        %1450 = vmatpush1.bf16.msra.mxu0 %v1380
        %1451 = vmatprep.subr.bf16.mxu0 0
        %1452 = vmatpush1.bf16.msra.mxu0 %v1381
        %1453 = vmatprep.subr.bf16.mxu0 0
        %1454 = vmatpush1.bf16.msra.mxu0 0
        %1455 = vmatprep.subr.bf16.mxu0 0
        %1456 = vmatpush1.bf16.msra.mxu0 0
        %1457 = vmatprep.subr.bf16.mxu0 0
        %1458 = vmatpush1.bf16.msra.mxu0 0
        %1459 = vmatprep.subr.bf16.mxu0 0
        %1460 = vmatpush1.bf16.msra.mxu0 0
        %1461 = vmatprep.subr.bf16.mxu0 0
        %1462 = vmatpush1.bf16.msra.mxu0 0
        %1463 = vmatprep.subr.bf16.mxu0 0
        %1464 = vmatpush1.bf16.msra.mxu0 0
        %1465 = vmatprep.subr.bf16.mxu0 0
        %1466 = vmatpush1.bf16.msra.mxu0 0
        %1467 = vmatprep.subr.bf16.mxu0 0
        %1468 = vmatpush1.bf16.msra.mxu0 0
        %1469 = vmatprep.mubr.bf16.mxu0 0
        %1470 = vmatmul.mubr.bf16.gmra.mrb[0].mxu0 %v1421
        %v1471 = vpop.f32.mrb[0].mxu0
        %v1472 = vadd.f32 %v1387, %v1471
        %v1473 = vpop.f32.mrb[0].mxu0
        %v1474 = vpop.f32.mrb[0].mxu0
        %v1475 = vadd.f32 %v1387, %v1474
        %v1476 = vpop.f32.mrb[0].mxu0
        %1477 = vmatprep.mubr.bf16.mxu0 0
        %1478 = vmatmul.mubr.bf16.gmra.mrb[0].mxu0 %v1422
        %v1479 = vpop.f32.mrb[0].mxu0
        %v1480 = vadd.f32 %v1387, %v1479
        %v1481 = vpop.f32.mrb[0].mxu0
        %v1482 = vpop.f32.mrb[0].mxu0
        %v1483 = vadd.f32 %v1387, %v1482
        %v1484 = vpop.f32.mrb[0].mxu0
        %1485 = vmatprep.mubr.bf16.mxu0 0
        %1486 = vmatmul.mubr.bf16.gmra.mrb[0].mxu0 %v1423
        %v1487 = vpop.f32.mrb[0].mxu0
        %v1488 = vadd.f32 %v1387, %v1487
        %v1489 = vpop.f32.mrb[0].mxu0
        %v1490 = vpop.f32.mrb[0].mxu0
        %v1491 = vadd.f32 %v1387, %v1490
        %v1492 = vpop.f32.mrb[0].mxu0
        %1493 = vmatprep.mubr.bf16.mxu0 0
        %1494 = vmatmul.mubr.bf16.gmra.mrb[0].mxu0 %v1424
        %v1495 = vpop.f32.mrb[0].mxu0
        %v1496 = vadd.f32 %v1387, %v1495
        %v1497 = vpop.f32.mrb[0].mxu0
        %v1498 = vpop.f32.mrb[0].mxu0
        %v1499 = vadd.f32 %v1387, %v1498
        %v1500 = vpop.f32.mrb[0].mxu0
        %1501 = vmatprep.mubr.bf16.mxu0 0
        %1502 = vmatmul.mubr.bf16.gmra.mrb[0].mxu0 %v1425
        %v1503 = vpop.f32.mrb[0].mxu0
        %v1504 = vadd.f32 %v1387, %v1503
        %v1505 = vpop.f32.mrb[0].mxu0
        %v1506 = vpop.f32.mrb[0].mxu0
        %v1507 = vadd.f32 %v1387, %v1506
        %v1508 = vpop.f32.mrb[0].mxu0
        %1509 = vmatprep.mubr.bf16.mxu0 0
        %1510 = vmatmul.mubr.bf16.gmra.mrb[0].mxu0 %v1426
        %v1511 = vpop.f32.mrb[0].mxu0
        %v1512 = vadd.f32 %v1387, %v1511
        %v1513 = vpop.f32.mrb[0].mxu0
        %v1514 = vpop.f32.mrb[0].mxu0
        %v1515 = vadd.f32 %v1387, %v1514
        %v1516 = vpop.f32.mrb[0].mxu0
        %1517 = vmatprep.mubr.bf16.mxu0 0
        %1518 = vmatmul.mubr.bf16.gmra.mrb[0].mxu0 %v1427
        %v1519 = vpop.f32.mrb[0].mxu0
        %v1520 = vadd.f32 %v1387, %v1519
        %v1521 = vpop.f32.mrb[0].mxu0
        %v1522 = vpop.f32.mrb[0].mxu0
        %v1523 = vadd.f32 %v1387, %v1522
        %v1524 = vpop.f32.mrb[0].mxu0
        %1525 = vmatprep.mubr.bf16.mxu0 0
        %1526 = vmatmul.mubr.bf16.gmra.mrb[0].mxu0 %v1428
        %v1527 = vpop.f32.mrb[0].mxu0
        %v1528 = vadd.f32 %v1387, %v1527
        %v1529 = vpop.f32.mrb[0].mxu0
        %v1530 = vpop.f32.mrb[0].mxu0
        %v1531 = vadd.f32 %v1387, %v1530
        %v1532 = vpop.f32.mrb[0].mxu0
        %1533 = vdwg.mxu0
        %vm1534 = vcmp.gt.f32.partialorder %v1472, 0.0
        %vm1535 = vcmp.gt.f32.partialorder %v1475, 0.0
        %vm1536 = vcmp.gt.f32.partialorder %v1480, 0.0
        %vm1537 = vcmp.gt.f32.partialorder %v1483, 0.0
        %vm1538 = vcmp.gt.f32.partialorder %v1488, 0.0
        %vm1539 = vcmp.gt.f32.partialorder %v1491, 0.0
        %vm1540 = vcmp.gt.f32.partialorder %v1496, 0.0
        %vm1541 = vcmp.gt.f32.partialorder %v1499, 0.0
        %vm1542 = vcmp.gt.f32.partialorder %v1504, 0.0
        %vm1543 = vcmp.gt.f32.partialorder %v1507, 0.0
        %vm1544 = vcmp.gt.f32.partialorder %v1512, 0.0
        %vm1545 = vcmp.gt.f32.partialorder %v1515, 0.0
        %vm1546 = vcmp.gt.f32.partialorder %v1520, 0.0
        %vm1547 = vcmp.gt.f32.partialorder %v1523, 0.0
        %vm1548 = vcmp.gt.f32.partialorder %v1528, 0.0
        %vm1549 = vcmp.gt.f32.partialorder %v1531, 0.0
        %v1550 = vmul.f32 %v1472, 0.01
        %v1551 = vmul.f32 %v1475, 0.01
        %v1552 = vmul.f32 %v1480, 0.01
        %v1553 = vmul.f32 %v1483, 0.01
        %v1554 = vmul.f32 %v1488, 0.01
        %v1555 = vmul.f32 %v1491, 0.01
        %v1556 = vmul.f32 %v1496, 0.01
        %v1557 = vmul.f32 %v1499, 0.01
        %v1558 = vmul.f32 %v1504, 0.01
        %v1559 = vmul.f32 %v1507, 0.01
        %v1560 = vmul.f32 %v1512, 0.01
        %v1561 = vmul.f32 %v1515, 0.01
        %v1562 = vmul.f32 %v1520, 0.01
        %v1563 = vmul.f32 %v1523, 0.01
        %v1564 = vmul.f32 %v1528, 0.01
        %v1565 = vmul.f32 %v1531, 0.01
        %v1566 = vsel %vm1534, %v1472, %v1550
        %v1567 = vsel %vm1535, %v1475, %v1551
        %v1568 = vsel %vm1536, %v1480, %v1552
        %v1569 = vsel %vm1537, %v1483, %v1553
        %v1570 = vsel %vm1538, %v1488, %v1554
        %v1571 = vsel %vm1539, %v1491, %v1555
        %v1572 = vsel %vm1540, %v1496, %v1556
        %v1573 = vsel %vm1541, %v1499, %v1557
        %v1574 = vsel %vm1542, %v1504, %v1558
        %v1575 = vsel %vm1543, %v1507, %v1559
        %v1576 = vsel %vm1544, %v1512, %v1560
        %v1577 = vsel %vm1545, %v1515, %v1561
        %v1578 = vsel %vm1546, %v1520, %v1562
        %v1579 = vsel %vm1547, %v1523, %v1563
        %v1580 = vsel %vm1548, %v1528, %v1564
        %v1581 = vsel %vm1549, %v1531, %v1565
        %v1582 = vpack.c.bf16 %v1567, %v1566
        %v1583 = vpack.c.bf16 %v1569, %v1568
        %v1584 = vpack.c.bf16 %v1571, %v1570
        %v1585 = vpack.c.bf16 %v1573, %v1572
        %v1586 = vpack.c.bf16 %v1575, %v1574
        %v1587 = vpack.c.bf16 %v1577, %v1576
        %v1588 = vpack.c.bf16 %v1579, %v1578
        %v1589 = vpack.c.bf16 %v1581, %v1580
        %v1590 = vld [vmem:[#allocation10] sm:$0xf]
        %v1591 = vld [vmem:[#allocation10 + $0x4] sm:$0xf]
        %v1592 = vld [vmem:[#allocation10 + $0x8] sm:$0xf]
        %v1593 = vld [vmem:[#allocation10 + $0xc] sm:$0xf]
        %v1594 = vld [vmem:[#allocation10 + $0x10] sm:$0xf]
        %v1595 = vld [vmem:[#allocation10 + $0x14] sm:$0xf]
        %v1596 = vld [vmem:[#allocation10 + $0x18] sm:$0xf]
        %v1597 = vld [vmem:[#allocation10 + $0x1c] sm:$0xf]
        %v1598 = vld [vmem:[#allocation10 + $0x20] sm:$0xf]
        %v1599 = vld [vmem:[#allocation10 + $0x24] sm:$0xf]
        %v1600 = vld [vmem:[#allocation10 + $0x28] sm:$0xf]
        %v1601 = vld [vmem:[#allocation10 + $0x2c] sm:$0xf]
        %v1602 = vld [vmem:[#allocation10 + $0x30] sm:$0xf]
        %v1603 = vld [vmem:[#allocation10 + $0x34] sm:$0xf]
        %v1604 = vld [vmem:[#allocation10 + $0x38] sm:$0xf]
        %v1605 = vld [vmem:[#allocation10 + $0x3c] sm:$0xf]
        %v1606 = vld [vmem:[%s2] sm:$0xff]
        %v1607 = vld [vmem:[%s2 + $0x8] sm:$0xff]
        %v1608 = vld [vmem:[%s2 + $0x10] sm:$0xff]
        %v1609 = vld [vmem:[%s2 + $0x18] sm:$0xff]
        %v1610 = vld [vmem:[%s2 + $0x20] sm:$0xff]
        %v1611 = vld [vmem:[%s2 + $0x28] sm:$0xff]
        %v1612 = vld [vmem:[%s2 + $0x30] sm:$0xff]
        %v1613 = vld [vmem:[%s2 + $0x38] sm:$0xff]
        %v1614 = vld [vmem:[%s2 + $0x40] sm:$0xff]
        %v1615 = vld [vmem:[%s2 + $0x48] sm:$0xff]
        %v1616 = vld [vmem:[%s2 + $0x50] sm:$0xff]
        %v1617 = vld [vmem:[%s2 + $0x58] sm:$0xff]
        %v1618 = vld [vmem:[%s2 + $0x60] sm:$0xff]
        %v1619 = vld [vmem:[%s2 + $0x68] sm:$0xff]
        %v1620 = vld [vmem:[%s2 + $0x70] sm:$0xff]
        %v1621 = vld [vmem:[%s2 + $0x78] sm:$0xff]
        %v1638 = vunpack.c.l.b16 %v1590
        %v1639 = vunpack.c.l.b16 %v1591
        %v1640 = vunpack.c.l.b16 %v1592
        %v1641 = vunpack.c.l.b16 %v1593
        %v1642 = vunpack.c.l.b16 %v1594
        %v1643 = vunpack.c.l.b16 %v1595
        %v1644 = vunpack.c.l.b16 %v1596
        %v1645 = vunpack.c.l.b16 %v1597
        %v1646 = vunpack.c.l.b16 %v1598
        %v1647 = vunpack.c.l.b16 %v1599
        %v1648 = vunpack.c.l.b16 %v1600
        %v1649 = vunpack.c.l.b16 %v1601
        %v1650 = vunpack.c.l.b16 %v1602
        %v1651 = vunpack.c.l.b16 %v1603
        %v1652 = vunpack.c.l.b16 %v1604
        %v1653 = vunpack.c.l.b16 %v1605
        %v1654 = vpack.c.b16 %v1639, %v1638
        %v1655 = vpack.c.b16 %v1641, %v1640
        %v1656 = vpack.c.b16 %v1643, %v1642
        %v1657 = vpack.c.b16 %v1645, %v1644
        %v1658 = vpack.c.b16 %v1647, %v1646
        %v1659 = vpack.c.b16 %v1649, %v1648
        %v1660 = vpack.c.b16 %v1651, %v1650
        %v1661 = vpack.c.b16 %v1653, %v1652
        %1670 = vmatprep.subr.bf16.mxu0 0
        %1671 = vmatpush1.bf16.msra.mxu0 %v1654
        %1672 = vmatprep.subr.bf16.mxu0 0
        %1673 = vmatpush1.bf16.msra.mxu0 %v1655
        %1674 = vmatprep.subr.bf16.mxu0 0
        %1675 = vmatpush1.bf16.msra.mxu0 %v1656
        %1676 = vmatprep.subr.bf16.mxu0 0
        %1677 = vmatpush1.bf16.msra.mxu0 %v1657
        %1678 = vmatprep.subr.bf16.mxu0 0
        %1679 = vmatpush1.bf16.msra.mxu0 %v1658
        %1680 = vmatprep.subr.bf16.mxu0 0
        %1681 = vmatpush1.bf16.msra.mxu0 %v1659
        %1682 = vmatprep.subr.bf16.mxu0 0
        %1683 = vmatpush1.bf16.msra.mxu0 %v1660
        %1684 = vmatprep.subr.bf16.mxu0 0
        %1685 = vmatpush1.bf16.msra.mxu0 %v1661
        %1686 = vmatprep.subr.bf16.mxu0 0
        %1687 = vmatpush1.bf16.msra.mxu0 0
        %1688 = vmatprep.subr.bf16.mxu0 0
        %1689 = vmatpush1.bf16.msra.mxu0 0
        %1690 = vmatprep.subr.bf16.mxu0 0
        %1691 = vmatpush1.bf16.msra.mxu0 0
        %1692 = vmatprep.subr.bf16.mxu0 0
        %1693 = vmatpush1.bf16.msra.mxu0 0
        %1694 = vmatprep.subr.bf16.mxu0 0
        %1695 = vmatpush1.bf16.msra.mxu0 0
        %1696 = vmatprep.subr.bf16.mxu0 0
        %1697 = vmatpush1.bf16.msra.mxu0 0
        %1698 = vmatprep.subr.bf16.mxu0 0
        %1699 = vmatpush1.bf16.msra.mxu0 0
        %1700 = vmatprep.subr.bf16.mxu0 0
        %1701 = vmatpush1.bf16.msra.mxu0 0
        %1702 = vmatprep.mubr.bf16.mxu0 0
        %1703 = vmatmul.mubr.bf16.gmra.mrb[0].mxu0 %v1582
        %v1704 = vpop.f32.mrb[0].mxu0
        %v1705 = vadd.f32 %v1606, %v1704
        %v1706 = vpop.f32.mrb[0].mxu0
        %v1707 = vpop.f32.mrb[0].mxu0
        %v1708 = vadd.f32 %v1607, %v1707
        %v1709 = vpop.f32.mrb[0].mxu0
        %1710 = vmatprep.mubr.bf16.mxu0 0
        %1711 = vmatmul.mubr.bf16.gmra.mrb[0].mxu0 %v1583
        %v1712 = vpop.f32.mrb[0].mxu0
        %v1713 = vadd.f32 %v1608, %v1712
        %v1714 = vpop.f32.mrb[0].mxu0
        %v1715 = vpop.f32.mrb[0].mxu0
        %v1716 = vadd.f32 %v1609, %v1715
        %v1717 = vpop.f32.mrb[0].mxu0
        %1718 = vmatprep.mubr.bf16.mxu0 0
        %1719 = vmatmul.mubr.bf16.gmra.mrb[0].mxu0 %v1584
        %v1720 = vpop.f32.mrb[0].mxu0
        %v1721 = vadd.f32 %v1610, %v1720
        %v1722 = vpop.f32.mrb[0].mxu0
        %v1723 = vpop.f32.mrb[0].mxu0
        %v1724 = vadd.f32 %v1611, %v1723
        %v1725 = vpop.f32.mrb[0].mxu0
        %1726 = vmatprep.mubr.bf16.mxu0 0
        %1727 = vmatmul.mubr.bf16.gmra.mrb[0].mxu0 %v1585
        %v1728 = vpop.f32.mrb[0].mxu0
        %v1729 = vadd.f32 %v1612, %v1728
        %v1730 = vpop.f32.mrb[0].mxu0
        %v1731 = vpop.f32.mrb[0].mxu0
        %v1732 = vadd.f32 %v1613, %v1731
        %v1733 = vpop.f32.mrb[0].mxu0
        %1734 = vmatprep.mubr.bf16.mxu0 0
        %1735 = vmatmul.mubr.bf16.gmra.mrb[0].mxu0 %v1586
        %v1736 = vpop.f32.mrb[0].mxu0
        %v1737 = vadd.f32 %v1614, %v1736
        %v1738 = vpop.f32.mrb[0].mxu0
        %v1739 = vpop.f32.mrb[0].mxu0
        %v1740 = vadd.f32 %v1615, %v1739
        %v1741 = vpop.f32.mrb[0].mxu0
        %1742 = vmatprep.mubr.bf16.mxu0 0
        %1743 = vmatmul.mubr.bf16.gmra.mrb[0].mxu0 %v1587
        %v1744 = vpop.f32.mrb[0].mxu0
        %v1745 = vadd.f32 %v1616, %v1744
        %v1746 = vpop.f32.mrb[0].mxu0
        %v1747 = vpop.f32.mrb[0].mxu0
        %v1748 = vadd.f32 %v1617, %v1747
        %v1749 = vpop.f32.mrb[0].mxu0
        %1750 = vmatprep.mubr.bf16.mxu0 0
        %1751 = vmatmul.mubr.bf16.gmra.mrb[0].mxu0 %v1588
        %v1752 = vpop.f32.mrb[0].mxu0
        %v1753 = vadd.f32 %v1618, %v1752
        %v1754 = vpop.f32.mrb[0].mxu0
        %v1755 = vpop.f32.mrb[0].mxu0
        %v1756 = vadd.f32 %v1619, %v1755
        %v1757 = vpop.f32.mrb[0].mxu0
        %1758 = vmatprep.mubr.bf16.mxu0 0
        %1759 = vmatmul.mubr.bf16.gmra.mrb[0].mxu0 %v1589
        %v1760 = vpop.f32.mrb[0].mxu0
        %v1761 = vadd.f32 %v1620, %v1760
        %v1762 = vpop.f32.mrb[0].mxu0
        %v1763 = vpop.f32.mrb[0].mxu0
        %v1764 = vadd.f32 %v1621, %v1763
        %v1765 = vpop.f32.mrb[0].mxu0
        %1766 = vdwg.mxu0
        %v1767 = vpack.c.bf16 %v1708, %v1705
        %v1768 = vpack.c.bf16 %v1716, %v1713
        %v1769 = vpack.c.bf16 %v1724, %v1721
        %v1770 = vpack.c.bf16 %v1732, %v1729
        %v1771 = vpack.c.bf16 %v1740, %v1737
        %v1772 = vpack.c.bf16 %v1748, %v1745
        %v1773 = vpack.c.bf16 %v1756, %v1753
        %v1774 = vpack.c.bf16 %v1764, %v1761
        %v1775 = vld [vmem:[%s12] sm:$0xf]
        %v1776 = vld [vmem:[%s12 + $0x4] sm:$0xf]
        %v1777 = vld [vmem:[%s12 + $0x8] sm:$0xf]
        %v1778 = vld [vmem:[%s12 + $0xc] sm:$0xf]
        %v1779 = vld [vmem:[%s12 + $0x10] sm:$0xf]
        %v1780 = vld [vmem:[%s12 + $0x14] sm:$0xf]
        %v1781 = vld [vmem:[%s12 + $0x18] sm:$0xf]
        %v1782 = vld [vmem:[%s12 + $0x1c] sm:$0xf]
        %v1783 = vld [vmem:[%s12 + $0x20] sm:$0xf]
        %v1784 = vld [vmem:[%s12 + $0x24] sm:$0xf]
        %v1785 = vld [vmem:[%s12 + $0x28] sm:$0xf]
        %v1786 = vld [vmem:[%s12 + $0x2c] sm:$0xf]
        %v1787 = vld [vmem:[%s12 + $0x30] sm:$0xf]
        %v1788 = vld [vmem:[%s12 + $0x34] sm:$0xf]
        %v1789 = vld [vmem:[%s12 + $0x38] sm:$0xf]
        %v1790 = vld [vmem:[%s12 + $0x3c] sm:$0xf]
        %v1807 = vunpack.c.l.b16 %v1775
        %v1808 = vunpack.c.l.b16 %v1776
        %v1809 = vunpack.c.l.b16 %v1777
        %v1810 = vunpack.c.l.b16 %v1778
        %v1811 = vunpack.c.l.b16 %v1779
        %v1812 = vunpack.c.l.b16 %v1780
        %v1813 = vunpack.c.l.b16 %v1781
        %v1814 = vunpack.c.l.b16 %v1782
        %v1815 = vunpack.c.l.b16 %v1783
        %v1816 = vunpack.c.l.b16 %v1784
        %v1817 = vunpack.c.l.b16 %v1785
        %v1818 = vunpack.c.l.b16 %v1786
        %v1819 = vunpack.c.l.b16 %v1787
        %v1820 = vunpack.c.l.b16 %v1788
        %v1821 = vunpack.c.l.b16 %v1789
        %v1822 = vunpack.c.l.b16 %v1790
        %v1823 = vpack.c.b16 %v1808, %v1807
        %v1824 = vpack.c.b16 %v1810, %v1809
        %v1825 = vpack.c.b16 %v1812, %v1811
        %v1826 = vpack.c.b16 %v1814, %v1813
        %v1827 = vpack.c.b16 %v1816, %v1815
        %v1828 = vpack.c.b16 %v1818, %v1817
        %v1829 = vpack.c.b16 %v1820, %v1819
        %v1830 = vpack.c.b16 %v1822, %v1821
        %1839 = vmatprep.subr.bf16.mxu0 0
        %1840 = vmatpush1.bf16.msra.mxu0 %v1823
        %1841 = vmatprep.subr.bf16.mxu0 0
        %1842 = vmatpush1.bf16.msra.mxu0 %v1824
        %1843 = vmatprep.subr.bf16.mxu0 0
        %1844 = vmatpush1.bf16.msra.mxu0 %v1825
        %1845 = vmatprep.subr.bf16.mxu0 0
        %1846 = vmatpush1.bf16.msra.mxu0 %v1826
        %1847 = vmatprep.subr.bf16.mxu0 0
        %1848 = vmatpush1.bf16.msra.mxu0 %v1827
        %1849 = vmatprep.subr.bf16.mxu0 0
        %1850 = vmatpush1.bf16.msra.mxu0 %v1828
        %1851 = vmatprep.subr.bf16.mxu0 0
        %1852 = vmatpush1.bf16.msra.mxu0 %v1829
        %1853 = vmatprep.subr.bf16.mxu0 0
        %1854 = vmatpush1.bf16.msra.mxu0 %v1830
        %1855 = vmatprep.subr.bf16.mxu0 0
        %1856 = vmatpush1.bf16.msra.mxu0 0
        %1857 = vmatprep.subr.bf16.mxu0 0
        %1858 = vmatpush1.bf16.msra.mxu0 0
        %1859 = vmatprep.subr.bf16.mxu0 0
        %1860 = vmatpush1.bf16.msra.mxu0 0
        %1861 = vmatprep.subr.bf16.mxu0 0
        %1862 = vmatpush1.bf16.msra.mxu0 0
        %1863 = vmatprep.subr.bf16.mxu0 0
        %1864 = vmatpush1.bf16.msra.mxu0 0
        %1865 = vmatprep.subr.bf16.mxu0 0
        %1866 = vmatpush1.bf16.msra.mxu0 0
        %1867 = vmatprep.subr.bf16.mxu0 0
        %1868 = vmatpush1.bf16.msra.mxu0 0
        %1869 = vmatprep.subr.bf16.mxu0 0
        %1870 = vmatpush1.bf16.msra.mxu0 0
        %1871 = vmatprep.mubr.bf16.mxu0 0
        %1872 = vmatmul.mubr.bf16.gmra.mrb[0].mxu0 %v1767
        %v1873 = vpop.f32.mrb[0].mxu0
        %v1874 = vadd.f32 0.0, %v1873
        %v1875 = vpop.f32.mrb[0].mxu0
        %v1876 = vpop.f32.mrb[0].mxu0
        %v1877 = vadd.f32 0.0, %v1876
        %v1878 = vpop.f32.mrb[0].mxu0
        %1879 = vmatprep.mubr.bf16.mxu0 0
        %1880 = vmatmul.mubr.bf16.gmra.mrb[0].mxu0 %v1768
        %v1881 = vpop.f32.mrb[0].mxu0
        %v1882 = vadd.f32 0.0, %v1881
        %v1883 = vpop.f32.mrb[0].mxu0
        %v1884 = vpop.f32.mrb[0].mxu0
        %v1885 = vadd.f32 0.0, %v1884
        %v1886 = vpop.f32.mrb[0].mxu0
        %1887 = vmatprep.mubr.bf16.mxu0 0
        %1888 = vmatmul.mubr.bf16.gmra.mrb[0].mxu0 %v1769
        %v1889 = vpop.f32.mrb[0].mxu0
        %v1890 = vadd.f32 0.0, %v1889
        %v1891 = vpop.f32.mrb[0].mxu0
        %v1892 = vpop.f32.mrb[0].mxu0
        %v1893 = vadd.f32 0.0, %v1892
        %v1894 = vpop.f32.mrb[0].mxu0
        %1895 = vmatprep.mubr.bf16.mxu0 0
        %1896 = vmatmul.mubr.bf16.gmra.mrb[0].mxu0 %v1770
        %v1897 = vpop.f32.mrb[0].mxu0
        %v1898 = vadd.f32 0.0, %v1897
        %v1899 = vpop.f32.mrb[0].mxu0
        %v1900 = vpop.f32.mrb[0].mxu0
        %v1901 = vadd.f32 0.0, %v1900
        %v1902 = vpop.f32.mrb[0].mxu0
        %1903 = vmatprep.mubr.bf16.mxu0 0
        %1904 = vmatmul.mubr.bf16.gmra.mrb[0].mxu0 %v1771
        %v1905 = vpop.f32.mrb[0].mxu0
        %v1906 = vadd.f32 0.0, %v1905
        %v1907 = vpop.f32.mrb[0].mxu0
        %v1908 = vpop.f32.mrb[0].mxu0
        %v1909 = vadd.f32 0.0, %v1908
        %v1910 = vpop.f32.mrb[0].mxu0
        %1911 = vmatprep.mubr.bf16.mxu0 0
        %1912 = vmatmul.mubr.bf16.gmra.mrb[0].mxu0 %v1772
        %v1913 = vpop.f32.mrb[0].mxu0
        %v1914 = vadd.f32 0.0, %v1913
        %v1915 = vpop.f32.mrb[0].mxu0
        %v1916 = vpop.f32.mrb[0].mxu0
        %v1917 = vadd.f32 0.0, %v1916
        %v1918 = vpop.f32.mrb[0].mxu0
        %1919 = vmatprep.mubr.bf16.mxu0 0
        %1920 = vmatmul.mubr.bf16.gmra.mrb[0].mxu0 %v1773
        %v1921 = vpop.f32.mrb[0].mxu0
        %v1922 = vadd.f32 0.0, %v1921
        %v1923 = vpop.f32.mrb[0].mxu0
        %v1924 = vpop.f32.mrb[0].mxu0
        %v1925 = vadd.f32 0.0, %v1924
        %v1926 = vpop.f32.mrb[0].mxu0
        %1927 = vmatprep.mubr.bf16.mxu0 0
        %1928 = vmatmul.mubr.bf16.gmra.mrb[0].mxu0 %v1774
        %v1929 = vpop.f32.mrb[0].mxu0
        %v1930 = vadd.f32 0.0, %v1929
        %v1931 = vpop.f32.mrb[0].mxu0
        %v1932 = vpop.f32.mrb[0].mxu0
        %v1933 = vadd.f32 0.0, %v1932
        %v1934 = vpop.f32.mrb[0].mxu0
        %1935 = vdwg.mxu0
        %v1936 = vpack.c.bf16 %v1877, %v1874
        %v1937 = vpack.c.bf16 %v1885, %v1882
        %v1938 = vpack.c.bf16 %v1893, %v1890
        %v1939 = vpack.c.bf16 %v1901, %v1898
        %v1940 = vpack.c.bf16 %v1909, %v1906
        %v1941 = vpack.c.bf16 %v1917, %v1914
        %v1942 = vpack.c.bf16 %v1925, %v1922
        %v1943 = vpack.c.bf16 %v1933, %v1930
        %v1944 = vld [vmem:[#allocation11] sm:$0x1]
        %v1946 = vlaneseq
        %v1947 = vshrl.u32 %v1946, 7
        %v1948 = vsub.s32 0, %v1947
        %v1949 = vrot.slane %v1944, %v1948
        %1951 = vmatprep.subr.bf16.mxu0 0
        %1952 = vmatpush1.bf16.msra.mxu0 %v1936
        %1953 = vmatprep.subr.bf16.mxu0 0
        %1954 = vmatpush1.bf16.msra.mxu0 %v1937
        %1955 = vmatprep.subr.bf16.mxu0 0
        %1956 = vmatpush1.bf16.msra.mxu0 %v1938
        %1957 = vmatprep.subr.bf16.mxu0 0
        %1958 = vmatpush1.bf16.msra.mxu0 %v1939
        %1959 = vmatprep.subr.bf16.mxu0 0
        %1960 = vmatpush1.bf16.msra.mxu0 %v1940
        %1961 = vmatprep.subr.bf16.mxu0 0
        %1962 = vmatpush1.bf16.msra.mxu0 %v1941
        %1963 = vmatprep.subr.bf16.mxu0 0
        %1964 = vmatpush1.bf16.msra.mxu0 %v1942
        %1965 = vmatprep.subr.bf16.mxu0 0
        %1966 = vmatpush1.bf16.msra.mxu0 %v1943
        %1967 = vmatprep.subr.bf16.mxu0 0
        %1968 = vmatpush1.bf16.msra.mxu0 0
        %1969 = vmatprep.subr.bf16.mxu0 0
        %1970 = vmatpush1.bf16.msra.mxu0 0
        %1971 = vmatprep.subr.bf16.mxu0 0
        %1972 = vmatpush1.bf16.msra.mxu0 0
        %1973 = vmatprep.subr.bf16.mxu0 0
        %1974 = vmatpush1.bf16.msra.mxu0 0
        %1975 = vmatprep.subr.bf16.mxu0 0
        %1976 = vmatpush1.bf16.msra.mxu0 0
        %1977 = vmatprep.subr.bf16.mxu0 0
        %1978 = vmatpush1.bf16.msra.mxu0 0
        %1979 = vmatprep.subr.bf16.mxu0 0
        %1980 = vmatpush1.bf16.msra.mxu0 0
        %1981 = vmatprep.subr.bf16.mxu0 0
        %1982 = vmatpush1.bf16.msra.mxu0 0
        %1983 = vmatprep.mubr.bf16.mxu0 0
        %1984 = vmatmul.mubr.bf16.gmra.mrb[0].mxu0 %v1421
        %v1985 = vpop.f32.mrb[0].mxu0
        %v1986 = vadd.f32 %v1949, %v1985
        %v1987 = vpop.f32.mrb[0].mxu0
        %v1988 = vpop.f32.mrb[0].mxu0
        %v1989 = vadd.f32 %v1949, %v1988
        %v1990 = vpop.f32.mrb[0].mxu0
        %1991 = vmatprep.mubr.bf16.mxu0 0
        %1992 = vmatmul.mubr.bf16.gmra.mrb[0].mxu0 %v1422
        %v1993 = vpop.f32.mrb[0].mxu0
        %v1994 = vadd.f32 %v1949, %v1993
        %v1995 = vpop.f32.mrb[0].mxu0
        %v1996 = vpop.f32.mrb[0].mxu0
        %v1997 = vadd.f32 %v1949, %v1996
        %v1998 = vpop.f32.mrb[0].mxu0
        %1999 = vmatprep.mubr.bf16.mxu0 0
        %2000 = vmatmul.mubr.bf16.gmra.mrb[0].mxu0 %v1423
        %v2001 = vpop.f32.mrb[0].mxu0
        %v2002 = vadd.f32 %v1949, %v2001
        %v2003 = vpop.f32.mrb[0].mxu0
        %v2004 = vpop.f32.mrb[0].mxu0
        %v2005 = vadd.f32 %v1949, %v2004
        %v2006 = vpop.f32.mrb[0].mxu0
        %2007 = vmatprep.mubr.bf16.mxu0 0
        %2008 = vmatmul.mubr.bf16.gmra.mrb[0].mxu0 %v1424
        %v2009 = vpop.f32.mrb[0].mxu0
        %v2010 = vadd.f32 %v1949, %v2009
        %v2011 = vpop.f32.mrb[0].mxu0
        %v2012 = vpop.f32.mrb[0].mxu0
        %v2013 = vadd.f32 %v1949, %v2012
        %v2014 = vpop.f32.mrb[0].mxu0
        %2015 = vmatprep.mubr.bf16.mxu0 0
        %2016 = vmatmul.mubr.bf16.gmra.mrb[0].mxu0 %v1425
        %v2017 = vpop.f32.mrb[0].mxu0
        %v2018 = vadd.f32 %v1949, %v2017
        %v2019 = vpop.f32.mrb[0].mxu0
        %v2020 = vpop.f32.mrb[0].mxu0
        %v2021 = vadd.f32 %v1949, %v2020
        %v2022 = vpop.f32.mrb[0].mxu0
        %2023 = vmatprep.mubr.bf16.mxu0 0
        %2024 = vmatmul.mubr.bf16.gmra.mrb[0].mxu0 %v1426
        %v2025 = vpop.f32.mrb[0].mxu0
        %v2026 = vadd.f32 %v1949, %v2025
        %v2027 = vpop.f32.mrb[0].mxu0
        %v2028 = vpop.f32.mrb[0].mxu0
        %v2029 = vadd.f32 %v1949, %v2028
        %v2030 = vpop.f32.mrb[0].mxu0
        %2031 = vmatprep.mubr.bf16.mxu0 0
        %2032 = vmatmul.mubr.bf16.gmra.mrb[0].mxu0 %v1427
        %v2033 = vpop.f32.mrb[0].mxu0
        %v2034 = vadd.f32 %v1949, %v2033
        %v2035 = vpop.f32.mrb[0].mxu0
        %v2036 = vpop.f32.mrb[0].mxu0
        %v2037 = vadd.f32 %v1949, %v2036
        %v2038 = vpop.f32.mrb[0].mxu0
        %2039 = vmatprep.mubr.bf16.mxu0 0
        %2040 = vmatmul.mubr.bf16.gmra.mrb[0].mxu0 %v1428
        %v2041 = vpop.f32.mrb[0].mxu0
        %v2042 = vadd.f32 %v1949, %v2041
        %v2043 = vpop.f32.mrb[0].mxu0
        %v2044 = vpop.f32.mrb[0].mxu0
        %v2045 = vadd.f32 %v1949, %v2044
        %v2046 = vpop.f32.mrb[0].mxu0
        %2047 = vdwg.mxu0
        %vm2048 = vcmp.gt.f32.partialorder %v1986, 0.0
        %vm2049 = vcmp.gt.f32.partialorder %v1989, 0.0
        %vm2050 = vcmp.gt.f32.partialorder %v1994, 0.0
        %vm2051 = vcmp.gt.f32.partialorder %v1997, 0.0
        %vm2052 = vcmp.gt.f32.partialorder %v2002, 0.0
        %vm2053 = vcmp.gt.f32.partialorder %v2005, 0.0
        %vm2054 = vcmp.gt.f32.partialorder %v2010, 0.0
        %vm2055 = vcmp.gt.f32.partialorder %v2013, 0.0
        %vm2056 = vcmp.gt.f32.partialorder %v2018, 0.0
        %vm2057 = vcmp.gt.f32.partialorder %v2021, 0.0
        %vm2058 = vcmp.gt.f32.partialorder %v2026, 0.0
        %vm2059 = vcmp.gt.f32.partialorder %v2029, 0.0
        %vm2060 = vcmp.gt.f32.partialorder %v2034, 0.0
        %vm2061 = vcmp.gt.f32.partialorder %v2037, 0.0
        %vm2062 = vcmp.gt.f32.partialorder %v2042, 0.0
        %vm2063 = vcmp.gt.f32.partialorder %v2045, 0.0
        %v2064 = vmul.f32 %v1986, 0.01
        %v2065 = vmul.f32 %v1989, 0.01
        %v2066 = vmul.f32 %v1994, 0.01
        %v2067 = vmul.f32 %v1997, 0.01
        %v2068 = vmul.f32 %v2002, 0.01
        %v2069 = vmul.f32 %v2005, 0.01
        %v2070 = vmul.f32 %v2010, 0.01
        %v2071 = vmul.f32 %v2013, 0.01
        %v2072 = vmul.f32 %v2018, 0.01
        %v2073 = vmul.f32 %v2021, 0.01
        %v2074 = vmul.f32 %v2026, 0.01
        %v2075 = vmul.f32 %v2029, 0.01
        %v2076 = vmul.f32 %v2034, 0.01
        %v2077 = vmul.f32 %v2037, 0.01
        %v2078 = vmul.f32 %v2042, 0.01
        %v2079 = vmul.f32 %v2045, 0.01
        %v2080 = vsel %vm2048, %v1986, %v2064
        %v2081 = vsel %vm2049, %v1989, %v2065
        %v2082 = vsel %vm2050, %v1994, %v2066
        %v2083 = vsel %vm2051, %v1997, %v2067
        %v2084 = vsel %vm2052, %v2002, %v2068
        %v2085 = vsel %vm2053, %v2005, %v2069
        %v2086 = vsel %vm2054, %v2010, %v2070
        %v2087 = vsel %vm2055, %v2013, %v2071
        %v2088 = vsel %vm2056, %v2018, %v2072
        %v2089 = vsel %vm2057, %v2021, %v2073
        %v2090 = vsel %vm2058, %v2026, %v2074
        %v2091 = vsel %vm2059, %v2029, %v2075
        %v2092 = vsel %vm2060, %v2034, %v2076
        %v2093 = vsel %vm2061, %v2037, %v2077
        %v2094 = vsel %vm2062, %v2042, %v2078
        %v2095 = vsel %vm2063, %v2045, %v2079
        %v2096 = vpack.c.bf16 %v2081, %v2080
        %v2097 = vpack.c.bf16 %v2083, %v2082
        %v2098 = vpack.c.bf16 %v2085, %v2084
        %v2099 = vpack.c.bf16 %v2087, %v2086
        %v2100 = vpack.c.bf16 %v2089, %v2088
        %v2101 = vpack.c.bf16 %v2091, %v2090
        %v2102 = vpack.c.bf16 %v2093, %v2092
        %v2103 = vpack.c.bf16 %v2095, %v2094
        %v2104 = vld [vmem:[#allocation13] sm:$0xf]
        %v2105 = vld [vmem:[#allocation13 + $0x4] sm:$0xf]
        %v2106 = vld [vmem:[#allocation13 + $0x8] sm:$0xf]
        %v2107 = vld [vmem:[#allocation13 + $0xc] sm:$0xf]
        %v2108 = vld [vmem:[#allocation13 + $0x10] sm:$0xf]
        %v2109 = vld [vmem:[#allocation13 + $0x14] sm:$0xf]
        %v2110 = vld [vmem:[#allocation13 + $0x18] sm:$0xf]
        %v2111 = vld [vmem:[#allocation13 + $0x1c] sm:$0xf]
        %v2112 = vld [vmem:[#allocation13 + $0x20] sm:$0xf]
        %v2113 = vld [vmem:[#allocation13 + $0x24] sm:$0xf]
        %v2114 = vld [vmem:[#allocation13 + $0x28] sm:$0xf]
        %v2115 = vld [vmem:[#allocation13 + $0x2c] sm:$0xf]
        %v2116 = vld [vmem:[#allocation13 + $0x30] sm:$0xf]
        %v2117 = vld [vmem:[#allocation13 + $0x34] sm:$0xf]
        %v2118 = vld [vmem:[#allocation13 + $0x38] sm:$0xf]
        %v2119 = vld [vmem:[#allocation13 + $0x3c] sm:$0xf]
        %v2120 = vld [vmem:[#allocation2] sm:$0xff]
        %v2121 = vld [vmem:[#allocation2 + $0x8] sm:$0xff]
        %v2122 = vld [vmem:[#allocation2 + $0x10] sm:$0xff]
        %v2123 = vld [vmem:[#allocation2 + $0x18] sm:$0xff]
        %v2124 = vld [vmem:[#allocation2 + $0x20] sm:$0xff]
        %v2125 = vld [vmem:[#allocation2 + $0x28] sm:$0xff]
        %v2126 = vld [vmem:[#allocation2 + $0x30] sm:$0xff]
        %v2127 = vld [vmem:[#allocation2 + $0x38] sm:$0xff]
        %v2128 = vld [vmem:[#allocation2 + $0x40] sm:$0xff]
        %v2129 = vld [vmem:[#allocation2 + $0x48] sm:$0xff]
        %v2130 = vld [vmem:[#allocation2 + $0x50] sm:$0xff]
        %v2131 = vld [vmem:[#allocation2 + $0x58] sm:$0xff]
        %v2132 = vld [vmem:[#allocation2 + $0x60] sm:$0xff]
        %v2133 = vld [vmem:[#allocation2 + $0x68] sm:$0xff]
        %v2134 = vld [vmem:[#allocation2 + $0x70] sm:$0xff]
        %v2135 = vld [vmem:[#allocation2 + $0x78] sm:$0xff]
        %v2152 = vunpack.c.l.b16 %v2104
        %v2153 = vunpack.c.l.b16 %v2105
        %v2154 = vunpack.c.l.b16 %v2106
        %v2155 = vunpack.c.l.b16 %v2107
        %v2156 = vunpack.c.l.b16 %v2108
        %v2157 = vunpack.c.l.b16 %v2109
        %v2158 = vunpack.c.l.b16 %v2110
        %v2159 = vunpack.c.l.b16 %v2111
        %v2160 = vunpack.c.l.b16 %v2112
        %v2161 = vunpack.c.l.b16 %v2113
        %v2162 = vunpack.c.l.b16 %v2114
        %v2163 = vunpack.c.l.b16 %v2115
        %v2164 = vunpack.c.l.b16 %v2116
        %v2165 = vunpack.c.l.b16 %v2117
        %v2166 = vunpack.c.l.b16 %v2118
        %v2167 = vunpack.c.l.b16 %v2119
        %v2168 = vpack.c.b16 %v2153, %v2152
        %v2169 = vpack.c.b16 %v2155, %v2154
        %v2170 = vpack.c.b16 %v2157, %v2156
        %v2171 = vpack.c.b16 %v2159, %v2158
        %v2172 = vpack.c.b16 %v2161, %v2160
        %v2173 = vpack.c.b16 %v2163, %v2162
        %v2174 = vpack.c.b16 %v2165, %v2164
        %v2175 = vpack.c.b16 %v2167, %v2166
        %2184 = vmatprep.subr.bf16.mxu0 0
        %2185 = vmatpush1.bf16.msra.mxu0 %v2168
        %2186 = vmatprep.subr.bf16.mxu0 0
        %2187 = vmatpush1.bf16.msra.mxu0 %v2169
        %2188 = vmatprep.subr.bf16.mxu0 0
        %2189 = vmatpush1.bf16.msra.mxu0 %v2170
        %2190 = vmatprep.subr.bf16.mxu0 0
        %2191 = vmatpush1.bf16.msra.mxu0 %v2171
        %2192 = vmatprep.subr.bf16.mxu0 0
        %2193 = vmatpush1.bf16.msra.mxu0 %v2172
        %2194 = vmatprep.subr.bf16.mxu0 0
        %2195 = vmatpush1.bf16.msra.mxu0 %v2173
        %2196 = vmatprep.subr.bf16.mxu0 0
        %2197 = vmatpush1.bf16.msra.mxu0 %v2174
        %2198 = vmatprep.subr.bf16.mxu0 0
        %2199 = vmatpush1.bf16.msra.mxu0 %v2175
        %2200 = vmatprep.subr.bf16.mxu0 0
        %2201 = vmatpush1.bf16.msra.mxu0 0
        %2202 = vmatprep.subr.bf16.mxu0 0
        %2203 = vmatpush1.bf16.msra.mxu0 0
        %2204 = vmatprep.subr.bf16.mxu0 0
        %2205 = vmatpush1.bf16.msra.mxu0 0
        %2206 = vmatprep.subr.bf16.mxu0 0
        %2207 = vmatpush1.bf16.msra.mxu0 0
        %2208 = vmatprep.subr.bf16.mxu0 0
        %2209 = vmatpush1.bf16.msra.mxu0 0
        %2210 = vmatprep.subr.bf16.mxu0 0
        %2211 = vmatpush1.bf16.msra.mxu0 0
        %2212 = vmatprep.subr.bf16.mxu0 0
        %2213 = vmatpush1.bf16.msra.mxu0 0
        %2214 = vmatprep.subr.bf16.mxu0 0
        %2215 = vmatpush1.bf16.msra.mxu0 0
        %2216 = vmatprep.mubr.bf16.mxu0 0
        %2217 = vmatmul.mubr.bf16.gmra.mrb[0].mxu0 %v2096
        %v2218 = vpop.f32.mrb[0].mxu0
        %v2219 = vadd.f32 %v2120, %v2218
        %v2220 = vpop.f32.mrb[0].mxu0
        %v2221 = vpop.f32.mrb[0].mxu0
        %v2222 = vadd.f32 %v2121, %v2221
        %v2223 = vpop.f32.mrb[0].mxu0
        %2224 = vmatprep.mubr.bf16.mxu0 0
        %2225 = vmatmul.mubr.bf16.gmra.mrb[0].mxu0 %v2097
        %v2226 = vpop.f32.mrb[0].mxu0
        %v2227 = vadd.f32 %v2122, %v2226
        %v2228 = vpop.f32.mrb[0].mxu0
        %v2229 = vpop.f32.mrb[0].mxu0
        %v2230 = vadd.f32 %v2123, %v2229
        %v2231 = vpop.f32.mrb[0].mxu0
        %2232 = vmatprep.mubr.bf16.mxu0 0
        %2233 = vmatmul.mubr.bf16.gmra.mrb[0].mxu0 %v2098
        %v2234 = vpop.f32.mrb[0].mxu0
        %v2235 = vadd.f32 %v2124, %v2234
        %v2236 = vpop.f32.mrb[0].mxu0
        %v2237 = vpop.f32.mrb[0].mxu0
        %v2238 = vadd.f32 %v2125, %v2237
        %v2239 = vpop.f32.mrb[0].mxu0
        %2240 = vmatprep.mubr.bf16.mxu0 0
        %2241 = vmatmul.mubr.bf16.gmra.mrb[0].mxu0 %v2099
        %v2242 = vpop.f32.mrb[0].mxu0
        %v2243 = vadd.f32 %v2126, %v2242
        %v2244 = vpop.f32.mrb[0].mxu0
        %v2245 = vpop.f32.mrb[0].mxu0
        %v2246 = vadd.f32 %v2127, %v2245
        %v2247 = vpop.f32.mrb[0].mxu0
        %2248 = vmatprep.mubr.bf16.mxu0 0
        %2249 = vmatmul.mubr.bf16.gmra.mrb[0].mxu0 %v2100
        %v2250 = vpop.f32.mrb[0].mxu0
        %v2251 = vadd.f32 %v2128, %v2250
        %v2252 = vpop.f32.mrb[0].mxu0
        %v2253 = vpop.f32.mrb[0].mxu0
        %v2254 = vadd.f32 %v2129, %v2253
        %v2255 = vpop.f32.mrb[0].mxu0
        %2256 = vmatprep.mubr.bf16.mxu0 0
        %2257 = vmatmul.mubr.bf16.gmra.mrb[0].mxu0 %v2101
        %v2258 = vpop.f32.mrb[0].mxu0
        %v2259 = vadd.f32 %v2130, %v2258
        %v2260 = vpop.f32.mrb[0].mxu0
        %v2261 = vpop.f32.mrb[0].mxu0
        %v2262 = vadd.f32 %v2131, %v2261
        %v2263 = vpop.f32.mrb[0].mxu0
        %2264 = vmatprep.mubr.bf16.mxu0 0
        %2265 = vmatmul.mubr.bf16.gmra.mrb[0].mxu0 %v2102
        %v2266 = vpop.f32.mrb[0].mxu0
        %v2267 = vadd.f32 %v2132, %v2266
        %v2268 = vpop.f32.mrb[0].mxu0
        %v2269 = vpop.f32.mrb[0].mxu0
        %v2270 = vadd.f32 %v2133, %v2269
        %v2271 = vpop.f32.mrb[0].mxu0
        %2272 = vmatprep.mubr.bf16.mxu0 0
        %2273 = vmatmul.mubr.bf16.gmra.mrb[0].mxu0 %v2103
        %v2274 = vpop.f32.mrb[0].mxu0
        %v2275 = vadd.f32 %v2134, %v2274
        %v2276 = vpop.f32.mrb[0].mxu0
        %v2277 = vpop.f32.mrb[0].mxu0
        %v2278 = vadd.f32 %v2135, %v2277
        %v2279 = vpop.f32.mrb[0].mxu0
        %2280 = vdwg.mxu0
        %v2281 = vld [vmem:[%s4] sm:$0x3]
        %2282 = vmatprep.subr.mxu0 0.0
        %2283 = vmatpush1.msra.mxu0 %v2219
        %2284 = vmatprep.subr.mxu0 0.0
        %2285 = vmatpush1.msra.mxu0 %v2222
        %2286 = vmatprep.subr.mxu0 0.0
        %2287 = vmatpush1.msra.mxu0 %v2227
        %2288 = vmatprep.subr.mxu0 0.0
        %2289 = vmatpush1.msra.mxu0 %v2230
        %2290 = vmatprep.subr.mxu0 0.0
        %2291 = vmatpush1.msra.mxu0 %v2235
        %2292 = vmatprep.subr.mxu0 0.0
        %2293 = vmatpush1.msra.mxu0 %v2238
        %2294 = vmatprep.subr.mxu0 0.0
        %2295 = vmatpush1.msra.mxu0 %v2243
        %2296 = vmatprep.subr.mxu0 0.0
        %2297 = vmatpush1.msra.mxu0 %v2246
        %2298 = vmatprep.subr.mxu0 0.0
        %2299 = vmatpush1.msra.mxu0 %v2251
        %2300 = vmatprep.subr.mxu0 0.0
        %2301 = vmatpush1.msra.mxu0 %v2254
        %2302 = vmatprep.subr.mxu0 0.0
        %2303 = vmatpush1.msra.mxu0 %v2259
        %2304 = vmatprep.subr.mxu0 0.0
        %2305 = vmatpush1.msra.mxu0 %v2262
        %2306 = vmatprep.subr.mxu0 0.0
        %2307 = vmatpush1.msra.mxu0 %v2267
        %2308 = vmatprep.subr.mxu0 0.0
        %2309 = vmatpush1.msra.mxu0 %v2270
        %2310 = vmatprep.subr.mxu0 0.0
        %2311 = vmatpush1.msra.mxu0 %v2275
        %2312 = vmatprep.subr.mxu0 0.0
        %2313 = vmatpush1.msra.mxu0 %v2278
        %2314 = vmatprep.subr.mxu0 0.0
        %2315 = vmatpush1.msra.mxu0 0.0
        %2316 = vmatprep.subr.mxu0 0.0
        %2317 = vmatpush1.msra.mxu0 0.0
        %2318 = vmatprep.subr.mxu0 0.0
        %2319 = vmatpush1.msra.mxu0 0.0
        %2320 = vmatprep.subr.mxu0 0.0
        %2321 = vmatpush1.msra.mxu0 0.0
        %2322 = vmatprep.subr.mxu0 0.0
        %2323 = vmatpush1.msra.mxu0 0.0
        %2324 = vmatprep.subr.mxu0 0.0
        %2325 = vmatpush1.msra.mxu0 0.0
        %2326 = vmatprep.subr.mxu0 0.0
        %2327 = vmatpush1.msra.mxu0 0.0
        %2328 = vmatprep.subr.mxu0 0.0
        %2329 = vmatpush1.msra.mxu0 0.0
        %2330 = vmatprep.subr.mxu0 0.0
        %2331 = vmatpush1.msra.mxu0 0.0
        %2332 = vmatprep.subr.mxu0 0.0
        %2333 = vmatpush1.msra.mxu0 0.0
        %2334 = vmatprep.subr.mxu0 0.0
        %2335 = vmatpush1.msra.mxu0 0.0
        %2336 = vmatprep.subr.mxu0 0.0
        %2337 = vmatpush1.msra.mxu0 0.0
        %2338 = vmatprep.subr.mxu0 0.0
        %2339 = vmatpush1.msra.mxu0 0.0
        %2340 = vmatprep.subr.mxu0 0.0
        %2341 = vmatpush1.msra.mxu0 0.0
        %2342 = vmatprep.subr.mxu0 0.0
        %2343 = vmatpush1.msra.mxu0 0.0
        %2344 = vmatprep.subr.mxu0 0.0
        %2345 = vmatpush1.msra.mxu0 0.0
        %2346 = vmatprep.mubr.f32.mxu0 0.0
        %2347 = vmatmul.mubr.f32.gmra.mrb[0].mxu0 %v2281
        %v2348 = vpop.f32.mrb[0].mxu0
        %v2349 = vadd.f32 0.0, %v2348
        %v2350 = vpop.f32.mrb[0].mxu0
        %2351 = vdwg.mxu0
        %2352 = vst [vmem:[%s598] sm:$0x3] %v2349
        %s2353 = sand.u32 %s366, 1
        %s2354 = scalar_lea.sflag [#allocation4], %s2353
        %s2355 = sand.u32 %s366, 1
        %s2356 = smul.addr %s2355, 2
        %s2357 = scalar_lea.vmem [#allocation14], %s2356
        // Predicated region
        $region109: #{tpu_custom_call.1} parent=79 // pred_check
          %p2358 = pneg %p376
        $region110: #{tpu_custom_call.1} parent=79 // pred_check_branch
          %2360 = sbr.rel (%p2358) target = $region112
        $region111: #{tpu_custom_call.1} parent=79 // pred_region
          %s2362 = ssub.s32 32, 32
          %2363 = vsyncadd %s2354, %s2362
          %s2364 = smul.addr %s33, 32
          %s2365 = scalar_lea.hbm %s15, %s2364
          %s2367 = sshll.u32 %s2357, 4
          %s2368 = int_to_ptr.vmem [resolvable:$true] %s2367
          %2370 = dma.vmem_to_hbm [thread:$0]  %s2368, 32, %s2365, %s2354
        $region112: #{tpu_custom_call.1} parent=79 // pred_fallthru
          _
      $region80: #{tpu_custom_call.1} parent=5 // pred_fallthru
        _
      %p2371 = scmp.le.s32.totalorder 2, %s28
      // Predicated region
      $region113: #{tpu_custom_call.1} parent=5 // pred_check
        %p2372 = pneg %p2371
      $region114: #{tpu_custom_call.1} parent=5 // pred_check_branch
        %2374 = sbr.rel (%p2372) target = $region116
      $region115: #{tpu_custom_call.1} parent=5 // pred_region
        %s2375 = ssub.s32 %s28, 2
        // Predicated region
        $region117: #{tpu_custom_call.1} parent=115 // pred_check
          %p2376 = pneg %p382
        $region118: #{tpu_custom_call.1} parent=115 // pred_check_branch
          %2378 = sbr.rel (%p2376) target = $region120
        $region119: #{tpu_custom_call.1} parent=115 // pred_region
          %s2379 = sand.u32 %s367, 1
          %s2380 = scalar_lea.sflag [#allocation4], %s2379
          %s2381 = sand.u32 %s367, 1
          %s2382 = smul.addr %s2381, 2
          %s2383 = scalar_lea.vmem [#allocation14], %s2382
          %2384 = dma.done %s2380, 32
        $region120: #{tpu_custom_call.1} parent=115 // pred_fallthru
          _
      $region116: #{tpu_custom_call.1} parent=5 // pred_fallthru
        _
    $region6: #{tpu_custom_call.1} parent=1 // loop_footer
      %s32 = sadd.s32 1, %s28
    $region7: #{tpu_custom_call.1} parent=1 // loop_footer_branch
      %27 = sbr.rel target = $region3
    $region8: #{tpu_custom_call.1} parent=1 // loop_exit
      _
    %2385 = vsyncpa [#allocation3], 1
    %s2386 = scalar_lea.sflag [#allocation3], 1
    %2387 = vsyncpa %s2386, 1
    %2388 = vsyncpa [#allocation6], 1
    %2389 = vsyncpa [#allocation9], 1
    %2390 = vsyncpa [#allocation12], 1
    %2391 = vsyncpa [#allocation4], 1
    %s2392 = scalar_lea.sflag [#allocation4], 1
    %2393 = vsyncpa %s2392, 1

// kernel: tpu_custom_call.1
$region0: #{tpu_custom_call.1}
  #allocation0 [shape = 'u32[]', space=smem, size = 0x4, offset = 0x4, fixed_abs, tag = 'smem constant byte address 0x4 - core index']
  #allocation1 [shape = 'u32[144,128]{1,0:T(1,128)}', space=vmem, size = 0x12000, scoped, tag = 'internal scratch']
  %s0 = inlined_call_operand.vmem [shape: f32[3,128,8], index: 0, kind: input, shape index: {}]
  %s1 = inlined_call_operand.vmem [shape: bf16[3,128,128], index: 1, kind: input, shape index: {}]
  %s2 = inlined_call_operand.vmem [shape: f32[128,128], index: 2, kind: input, shape index: {}]
  %s3 = inlined_call_operand.hbm [shape: f32[128,128], index: 3, kind: input, shape index: {}]
  %s4 = inlined_call_operand.vmem [shape: f32[2,128], index: 4, kind: input, shape index: {}]
  %s5 = inlined_call_operand.hbm [shape: bf16[8,256], index: 5, kind: input, shape index: {}]
  %s6 = inlined_call_operand.vmem [shape: f32[1,256], index: 6, kind: input, shape index: {}]
  %s7 = inlined_call_operand.hbm [shape: bf16[256,128], index: 7, kind: input, shape index: {}]
  %s8 = inlined_call_operand.vmem [shape: f32[1,128], index: 8, kind: input, shape index: {}]
  %s9 = inlined_call_operand.vmem [shape: bf16[128,128], index: 9, kind: input, shape index: {}]
  %s10 = inlined_call_operand.hbm [shape: f32[1,128], index: 10, kind: input, shape index: {}]
  %s11 = inlined_call_operand.hbm [shape: bf16[128,128], index: 11, kind: input, shape index: {}]
  %s12 = inlined_call_operand.vmem [shape: bf16[128,128], index: 12, kind: input, shape index: {}]
  %s13 = inlined_call_operand.hbm [shape: f32[1,128], index: 13, kind: input, shape index: {}]
  %s14 = inlined_call_operand.hbm [shape: bf16[128,128], index: 14, kind: input, shape index: {}]
  %s15 = inlined_call_operand.hbm [shape: f32[3,2,128], index: 15, kind: output, shape index: {}]
  %s16 = sld [smem:[#allocation0]]
  $region121: #{tpu_custom_call.1} parent=0
    _
  %s18 = ssub.s32 1, %s16
  %s19 = scalar_select 0, %s18, %s16
  $region1: #{tpu_custom_call.1} parent=0
    #allocation2 [shape = 'u8[65536]{0}', space=vmem, size = 0x10000, scoped, tag = 'input window, operand 3, single buffered']
    #allocation3 [shape = 's32[2]{0}', space=sflag, size = 0x8, scoped, tag = 'scoped memory for tpu_custom_call.1']
    #allocation4 [shape = 's32[2]{0}', space=sflag, size = 0x8, scoped, tag = 'scoped memory for tpu_custom_call.1']
    #allocation5 [shape = 'u8[4096]{0}', space=vmem, size = 0x1000, scoped, tag = 'input window, operand 5, single buffered']
    #allocation6 [shape = 's32[1]{0}', space=sflag, size = 0x4, scoped, tag = 'scoped memory for tpu_custom_call.1']
    #allocation7 [shape = 'u8[65536]{0}', space=vmem, size = 0x10000, scoped, tag = 'input window, operand 7, single buffered']
    #allocation8 [shape = 'u8[512]{0}', space=vmem, size = 0x400, scoped, tag = 'input window, operand 10, single buffered']
    #allocation9 [shape = 's32[1]{0}', space=sflag, size = 0x4, scoped, tag = 'scoped memory for tpu_custom_call.1']
    #allocation10 [shape = 'u8[32768]{0}', space=vmem, size = 0x8000, scoped, tag = 'input window, operand 11, single buffered']
    #allocation11 [shape = 'u8[512]{0}', space=vmem, size = 0x400, scoped, tag = 'input window, operand 13, single buffered']
    #allocation12 [shape = 's32[1]{0}', space=sflag, size = 0x4, scoped, tag = 'scoped memory for tpu_custom_call.1']
    #allocation13 [shape = 'u8[32768]{0}', space=vmem, size = 0x8000, scoped, tag = 'input window, operand 14, single buffered']
    #allocation14 [shape = 'u8[2048]{0}', space=vmem, size = 0x800, scoped, tag = 'output window, operand 0']
    %20 = vsyncpa [#allocation3], 0
    %21 = vsyncpa [#allocation6], 0
    %22 = vsyncpa [#allocation9], 0
    %23 = vsyncpa [#allocation12], 0
    %24 = vsyncpa [#allocation4], 0
    %s25 = scalar_lea.sflag [#allocation4], 1
    %26 = vsyncpa %s25, 0
    loop: start=0, step=1, limit=5
    $region2: #{tpu_custom_call.1} parent=1 // loop_pre_header
      _
    $region3: #{tpu_custom_call.1} parent=1 // loop_header
      %s28 = sphi 0, %s32
      %p29 = scmp.ge.s32.totalorder %s28, 5
      %s38 = sphi 0, %s40
      %s41 = sphi 0, %s38
      %s42 = sphi 0, %s41
      %s58 = sphi 0, %s42
      %s64 = sphi 0, %s66
      %s67 = sphi 0, %s64
      %s68 = sphi 0, %s67
      %s84 = sphi 0, %s68
      %s88 = sphi 0, %s88
      %s90 = sphi 0, %s88
      %s91 = sphi 0, %s90
      %s105 = sphi 0, %s91
      %s109 = sphi 0, %s109
      %s111 = sphi 0, %s109
      %s112 = sphi 0, %s111
      %s126 = sphi 0, %s112
      %s130 = sphi 0, %s130
      %s132 = sphi 0, %s130
      %s133 = sphi 0, %s132
      %s147 = sphi 0, %s133
      %s151 = sphi 0, %s151
      %s153 = sphi 0, %s151
      %s154 = sphi 0, %s153
      %s168 = sphi 0, %s154
      %s172 = sphi 0, %s172
      %s174 = sphi 0, %s172
      %s175 = sphi 0, %s174
      %s189 = sphi 0, %s175
      %s193 = sphi 0, %s193
      %s195 = sphi 0, %s193
      %s196 = sphi 0, %s195
      %s210 = sphi 0, %s196
      %s214 = sphi 0, %s214
      %s216 = sphi 0, %s214
      %s217 = sphi 0, %s216
      %s231 = sphi 0, %s217
      %s235 = sphi 0, %s235
      %s237 = sphi 0, %s235
      %s238 = sphi 0, %s237
      %s252 = sphi 0, %s238
      %s256 = sphi 0, %s256
      %s258 = sphi 0, %s256
      %s259 = sphi 0, %s258
      %s273 = sphi 0, %s259
      %s277 = sphi 0, %s277
      %s279 = sphi 0, %s277
      %s280 = sphi 0, %s279
      %s294 = sphi 0, %s280
      %s298 = sphi 0, %s298
      %s300 = sphi 0, %s298
      %s301 = sphi 0, %s300
      %s315 = sphi 0, %s301
      %s319 = sphi 0, %s319
      %s321 = sphi 0, %s319
      %s322 = sphi 0, %s321
      %s336 = sphi 0, %s322
      %s340 = sphi 0, %s340
      %s342 = sphi 0, %s340
      %s343 = sphi 0, %s342
      %s357 = sphi 0, %s343
      %s363 = sphi 0, %s365
      %s366 = sphi 0, %s363
      %s367 = sphi 0, %s366
      %s383 = sphi 0, %s367
    $region4: #{tpu_custom_call.1} parent=1 // loop_header_branch
      %31 = sbr.rel (%p29) target = $region8
    $region5: #{tpu_custom_call.1} parent=1 // loop_body
      %s33 = ssub.s32 %s28, 1
      %s34 = ssub.s32 %s28, 2
      %s35 = sadd.s32 %s28, 1
      %s36 = ssub.s32 %s28, %s35
      %p37 = scmp.eq.s32.totalorder %s36, 0
      %s39 = sadd.s32 %s38, 1
      %s40 = scalar_select %p37, %s38, %s39
      %p43 = pneg %p37
      %p44 = scmp.eq.s32.totalorder %s28, 2
      %p45 = por %p43, %p44
      %p46 = scmp.ne.s32.totalorder %s38, %s41
      %p47 = scmp.eq.s32.totalorder %s28, 0
      %p48 = por %p46, %p47
      %p49 = scmp.ne.s32.totalorder %s38, %s41
      %p50 = scmp.eq.s32.totalorder %s33, 2
      %p51 = por %p49, %p50
      %p52 = scmp.ne.s32.totalorder %s41, %s42
      %p53 = scmp.eq.s32.totalorder %s33, 0
      %p54 = por %p52, %p53
      %p55 = scmp.ne.s32.totalorder %s41, %s42
      %p56 = scmp.eq.s32.totalorder %s34, 2
      %p57 = por %p55, %p56
      %p59 = scmp.ne.s32.totalorder %s42, %s58
      %p60 = scmp.eq.s32.totalorder %s34, 0
      %p61 = por %p59, %p60
      %s62 = ssub.s32 %s28, %s35
      %p63 = scmp.eq.s32.totalorder %s62, 0
      %s65 = sadd.s32 %s64, 1
      %s66 = scalar_select %p63, %s64, %s65
      %p69 = pneg %p63
      %p70 = scmp.eq.s32.totalorder %s28, 2
      %p71 = por %p69, %p70
      %p72 = scmp.ne.s32.totalorder %s64, %s67
      %p73 = scmp.eq.s32.totalorder %s28, 0
      %p74 = por %p72, %p73
      %p75 = scmp.ne.s32.totalorder %s64, %s67
      %p76 = scmp.eq.s32.totalorder %s33, 2
      %p77 = por %p75, %p76
      %p78 = scmp.ne.s32.totalorder %s67, %s68
      %p79 = scmp.eq.s32.totalorder %s33, 0
      %p80 = por %p78, %p79
      %p81 = scmp.ne.s32.totalorder %s67, %s68
      %p82 = scmp.eq.s32.totalorder %s34, 2
      %p83 = por %p81, %p82
      %p85 = scmp.ne.s32.totalorder %s68, %s84
      %p86 = scmp.eq.s32.totalorder %s34, 0
      %p87 = por %p85, %p86
      %s89 = sadd.s32 %s88, 1
      %p92 = scmp.eq.s32.totalorder %s28, 2
      %p93 = scmp.ne.s32.totalorder %s88, %s90
      %p94 = scmp.eq.s32.totalorder %s28, 0
      %p95 = por %p93, %p94
      %p96 = scmp.ne.s32.totalorder %s88, %s90
      %p97 = scmp.eq.s32.totalorder %s33, 2
      %p98 = por %p96, %p97
      %p99 = scmp.ne.s32.totalorder %s90, %s91
      %p100 = scmp.eq.s32.totalorder %s33, 0
      %p101 = por %p99, %p100
      %p102 = scmp.ne.s32.totalorder %s90, %s91
      %p103 = scmp.eq.s32.totalorder %s34, 2
      %p104 = por %p102, %p103
      %p106 = scmp.ne.s32.totalorder %s91, %s105
      %p107 = scmp.eq.s32.totalorder %s34, 0
      %p108 = por %p106, %p107
      %s110 = sadd.s32 %s109, 1
      %p113 = scmp.eq.s32.totalorder %s28, 2
      %p114 = scmp.ne.s32.totalorder %s109, %s111
      %p115 = scmp.eq.s32.totalorder %s28, 0
      %p116 = por %p114, %p115
      %p117 = scmp.ne.s32.totalorder %s109, %s111
      %p118 = scmp.eq.s32.totalorder %s33, 2
      %p119 = por %p117, %p118
      %p120 = scmp.ne.s32.totalorder %s111, %s112
      %p121 = scmp.eq.s32.totalorder %s33, 0
      %p122 = por %p120, %p121
      %p123 = scmp.ne.s32.totalorder %s111, %s112
      %p124 = scmp.eq.s32.totalorder %s34, 2
      %p125 = por %p123, %p124
      %p127 = scmp.ne.s32.totalorder %s112, %s126
      %p128 = scmp.eq.s32.totalorder %s34, 0
      %p129 = por %p127, %p128
      %s131 = sadd.s32 %s130, 1
      %p134 = scmp.eq.s32.totalorder %s28, 2
      %p135 = scmp.ne.s32.totalorder %s130, %s132
      %p136 = scmp.eq.s32.totalorder %s28, 0
      %p137 = por %p135, %p136
      %p138 = scmp.ne.s32.totalorder %s130, %s132
      %p139 = scmp.eq.s32.totalorder %s33, 2
      %p140 = por %p138, %p139
      %p141 = scmp.ne.s32.totalorder %s132, %s133
      %p142 = scmp.eq.s32.totalorder %s33, 0
      %p143 = por %p141, %p142
      %p144 = scmp.ne.s32.totalorder %s132, %s133
      %p145 = scmp.eq.s32.totalorder %s34, 2
      %p146 = por %p144, %p145
      %p148 = scmp.ne.s32.totalorder %s133, %s147
      %p149 = scmp.eq.s32.totalorder %s34, 0
      %p150 = por %p148, %p149
      %s152 = sadd.s32 %s151, 1
      %p155 = scmp.eq.s32.totalorder %s28, 2
      %p156 = scmp.ne.s32.totalorder %s151, %s153
      %p157 = scmp.eq.s32.totalorder %s28, 0
      %p158 = por %p156, %p157
      %p159 = scmp.ne.s32.totalorder %s151, %s153
      %p160 = scmp.eq.s32.totalorder %s33, 2
      %p161 = por %p159, %p160
      %p162 = scmp.ne.s32.totalorder %s153, %s154
      %p163 = scmp.eq.s32.totalorder %s33, 0
      %p164 = por %p162, %p163
      %p165 = scmp.ne.s32.totalorder %s153, %s154
      %p166 = scmp.eq.s32.totalorder %s34, 2
      %p167 = por %p165, %p166
      %p169 = scmp.ne.s32.totalorder %s154, %s168
      %p170 = scmp.eq.s32.totalorder %s34, 0
      %p171 = por %p169, %p170
      %s173 = sadd.s32 %s172, 1
      %p176 = scmp.eq.s32.totalorder %s28, 2
      %p177 = scmp.ne.s32.totalorder %s172, %s174
      %p178 = scmp.eq.s32.totalorder %s28, 0
      %p179 = por %p177, %p178
      %p180 = scmp.ne.s32.totalorder %s172, %s174
      %p181 = scmp.eq.s32.totalorder %s33, 2
      %p182 = por %p180, %p181
      %p183 = scmp.ne.s32.totalorder %s174, %s175
      %p184 = scmp.eq.s32.totalorder %s33, 0
      %p185 = por %p183, %p184
      %p186 = scmp.ne.s32.totalorder %s174, %s175
      %p187 = scmp.eq.s32.totalorder %s34, 2
      %p188 = por %p186, %p187
      %p190 = scmp.ne.s32.totalorder %s175, %s189
      %p191 = scmp.eq.s32.totalorder %s34, 0
      %p192 = por %p190, %p191
      %s194 = sadd.s32 %s193, 1
      %p197 = scmp.eq.s32.totalorder %s28, 2
      %p198 = scmp.ne.s32.totalorder %s193, %s195
      %p199 = scmp.eq.s32.totalorder %s28, 0
      %p200 = por %p198, %p199
      %p201 = scmp.ne.s32.totalorder %s193, %s195
      %p202 = scmp.eq.s32.totalorder %s33, 2
      %p203 = por %p201, %p202
      %p204 = scmp.ne.s32.totalorder %s195, %s196
      %p205 = scmp.eq.s32.totalorder %s33, 0
      %p206 = por %p204, %p205
      %p207 = scmp.ne.s32.totalorder %s195, %s196
      %p208 = scmp.eq.s32.totalorder %s34, 2
      %p209 = por %p207, %p208
      %p211 = scmp.ne.s32.totalorder %s196, %s210
      %p212 = scmp.eq.s32.totalorder %s34, 0
      %p213 = por %p211, %p212
      %s215 = sadd.s32 %s214, 1
      %p218 = scmp.eq.s32.totalorder %s28, 2
      %p219 = scmp.ne.s32.totalorder %s214, %s216
      %p220 = scmp.eq.s32.totalorder %s28, 0
      %p221 = por %p219, %p220
      %p222 = scmp.ne.s32.totalorder %s214, %s216
      %p223 = scmp.eq.s32.totalorder %s33, 2
      %p224 = por %p222, %p223
      %p225 = scmp.ne.s32.totalorder %s216, %s217
      %p226 = scmp.eq.s32.totalorder %s33, 0
      %p227 = por %p225, %p226
      %p228 = scmp.ne.s32.totalorder %s216, %s217
      %p229 = scmp.eq.s32.totalorder %s34, 2
      %p230 = por %p228, %p229
      %p232 = scmp.ne.s32.totalorder %s217, %s231
      %p233 = scmp.eq.s32.totalorder %s34, 0
      %p234 = por %p232, %p233
      %s236 = sadd.s32 %s235, 1
      %p239 = scmp.eq.s32.totalorder %s28, 2
      %p240 = scmp.ne.s32.totalorder %s235, %s237
      %p241 = scmp.eq.s32.totalorder %s28, 0
      %p242 = por %p240, %p241
      %p243 = scmp.ne.s32.totalorder %s235, %s237
      %p244 = scmp.eq.s32.totalorder %s33, 2
      %p245 = por %p243, %p244
      %p246 = scmp.ne.s32.totalorder %s237, %s238
      %p247 = scmp.eq.s32.totalorder %s33, 0
      %p248 = por %p246, %p247
      %p249 = scmp.ne.s32.totalorder %s237, %s238
      %p250 = scmp.eq.s32.totalorder %s34, 2
      %p251 = por %p249, %p250
      %p253 = scmp.ne.s32.totalorder %s238, %s252
      %p254 = scmp.eq.s32.totalorder %s34, 0
      %p255 = por %p253, %p254
      %s257 = sadd.s32 %s256, 1
      %p260 = scmp.eq.s32.totalorder %s28, 2
      %p261 = scmp.ne.s32.totalorder %s256, %s258
      %p262 = scmp.eq.s32.totalorder %s28, 0
      %p263 = por %p261, %p262
      %p264 = scmp.ne.s32.totalorder %s256, %s258
      %p265 = scmp.eq.s32.totalorder %s33, 2
      %p266 = por %p264, %p265
      %p267 = scmp.ne.s32.totalorder %s258, %s259
      %p268 = scmp.eq.s32.totalorder %s33, 0
      %p269 = por %p267, %p268
      %p270 = scmp.ne.s32.totalorder %s258, %s259
      %p271 = scmp.eq.s32.totalorder %s34, 2
      %p272 = por %p270, %p271
      %p274 = scmp.ne.s32.totalorder %s259, %s273
      %p275 = scmp.eq.s32.totalorder %s34, 0
      %p276 = por %p274, %p275
      %s278 = sadd.s32 %s277, 1
      %p281 = scmp.eq.s32.totalorder %s28, 2
      %p282 = scmp.ne.s32.totalorder %s277, %s279
      %p283 = scmp.eq.s32.totalorder %s28, 0
      %p284 = por %p282, %p283
      %p285 = scmp.ne.s32.totalorder %s277, %s279
      %p286 = scmp.eq.s32.totalorder %s33, 2
      %p287 = por %p285, %p286
      %p288 = scmp.ne.s32.totalorder %s279, %s280
      %p289 = scmp.eq.s32.totalorder %s33, 0
      %p290 = por %p288, %p289
      %p291 = scmp.ne.s32.totalorder %s279, %s280
      %p292 = scmp.eq.s32.totalorder %s34, 2
      %p293 = por %p291, %p292
      %p295 = scmp.ne.s32.totalorder %s280, %s294
      %p296 = scmp.eq.s32.totalorder %s34, 0
      %p297 = por %p295, %p296
      %s299 = sadd.s32 %s298, 1
      %p302 = scmp.eq.s32.totalorder %s28, 2
      %p303 = scmp.ne.s32.totalorder %s298, %s300
      %p304 = scmp.eq.s32.totalorder %s28, 0
      %p305 = por %p303, %p304
      %p306 = scmp.ne.s32.totalorder %s298, %s300
      %p307 = scmp.eq.s32.totalorder %s33, 2
      %p308 = por %p306, %p307
      %p309 = scmp.ne.s32.totalorder %s300, %s301
      %p310 = scmp.eq.s32.totalorder %s33, 0
      %p311 = por %p309, %p310
      %p312 = scmp.ne.s32.totalorder %s300, %s301
      %p313 = scmp.eq.s32.totalorder %s34, 2
      %p314 = por %p312, %p313
      %p316 = scmp.ne.s32.totalorder %s301, %s315
      %p317 = scmp.eq.s32.totalorder %s34, 0
      %p318 = por %p316, %p317
      %s320 = sadd.s32 %s319, 1
      %p323 = scmp.eq.s32.totalorder %s28, 2
      %p324 = scmp.ne.s32.totalorder %s319, %s321
      %p325 = scmp.eq.s32.totalorder %s28, 0
      %p326 = por %p324, %p325
      %p327 = scmp.ne.s32.totalorder %s319, %s321
      %p328 = scmp.eq.s32.totalorder %s33, 2
      %p329 = por %p327, %p328
      %p330 = scmp.ne.s32.totalorder %s321, %s322
      %p331 = scmp.eq.s32.totalorder %s33, 0
      %p332 = por %p330, %p331
      %p333 = scmp.ne.s32.totalorder %s321, %s322
      %p334 = scmp.eq.s32.totalorder %s34, 2
      %p335 = por %p333, %p334
      %p337 = scmp.ne.s32.totalorder %s322, %s336
      %p338 = scmp.eq.s32.totalorder %s34, 0
      %p339 = por %p337, %p338
      %s341 = sadd.s32 %s340, 1
      %p344 = scmp.eq.s32.totalorder %s28, 2
      %p345 = scmp.ne.s32.totalorder %s340, %s342
      %p346 = scmp.eq.s32.totalorder %s28, 0
      %p347 = por %p345, %p346
      %p348 = scmp.ne.s32.totalorder %s340, %s342
      %p349 = scmp.eq.s32.totalorder %s33, 2
      %p350 = por %p348, %p349
      %p351 = scmp.ne.s32.totalorder %s342, %s343
      %p352 = scmp.eq.s32.totalorder %s33, 0
      %p353 = por %p351, %p352
      %p354 = scmp.ne.s32.totalorder %s342, %s343
      %p355 = scmp.eq.s32.totalorder %s34, 2
      %p356 = por %p354, %p355
      %p358 = scmp.ne.s32.totalorder %s343, %s357
      %p359 = scmp.eq.s32.totalorder %s34, 0
      %p360 = por %p358, %p359
      %s361 = ssub.s32 %s28, %s35
      %p362 = scmp.eq.s32.totalorder %s361, 0
      %s364 = sadd.s32 %s363, 1
      %s365 = scalar_select %p362, %s363, %s364
      %p368 = pneg %p362
      %p369 = scmp.eq.s32.totalorder %s28, 2
      %p370 = por %p368, %p369
      %p371 = scmp.ne.s32.totalorder %s363, %s366
      %p372 = scmp.eq.s32.totalorder %s28, 0
      %p373 = por %p371, %p372
      %p374 = scmp.ne.s32.totalorder %s363, %s366
      %p375 = scmp.eq.s32.totalorder %s33, 2
      %p376 = por %p374, %p375
      %p377 = scmp.ne.s32.totalorder %s366, %s367
      %p378 = scmp.eq.s32.totalorder %s33, 0
      %p379 = por %p377, %p378
      %p380 = scmp.ne.s32.totalorder %s366, %s367
      %p381 = scmp.eq.s32.totalorder %s34, 2
      %p382 = por %p380, %p381
      %p384 = scmp.ne.s32.totalorder %s367, %s383
      %p385 = scmp.eq.s32.totalorder %s34, 0
      %p386 = por %p384, %p385
      %p387 = scmp.le.s32.totalorder 1, %s28
      %p388 = scmp.lt.s32.totalorder %s28, 4
      %p389 = pnand %p387, %p388
      %p390 = pneg %p389
      // Predicated region
      $region9: #{tpu_custom_call.1} parent=5 // pred_check
        _
      $region10: #{tpu_custom_call.1} parent=5 // pred_check_branch
        %392 = sbr.rel (%p389) target = $region12
      $region11: #{tpu_custom_call.1} parent=5 // pred_region
        %s393 = ssub.s32 %s28, 1
        // Predicated region
        $region13: #{tpu_custom_call.1} parent=11 // pred_check
          %p394 = pneg %p101
        $region14: #{tpu_custom_call.1} parent=11 // pred_check_branch
          %396 = sbr.rel (%p394) target = $region16
        $region15: #{tpu_custom_call.1} parent=11 // pred_region
          _
        $region16: #{tpu_custom_call.1} parent=11 // pred_fallthru
          _
        // Predicated region
        $region17: #{tpu_custom_call.1} parent=11 // pred_check
          %p397 = pneg %p122
        $region18: #{tpu_custom_call.1} parent=11 // pred_check_branch
          %399 = sbr.rel (%p397) target = $region20
        $region19: #{tpu_custom_call.1} parent=11 // pred_region
          %s401 = ssub.s32 2048, 2048
          %402 = vsyncadd [#allocation3], %s401
          %s403 = sshll.u32 [#allocation2], 4
          %s404 = int_to_ptr.vmem [resolvable:$true] %s403
          %409 = dma.hbm_to_vmem [thread:$0]  %s3, 2048, %s404, [#allocation3], 128, 128, 8
        $region20: #{tpu_custom_call.1} parent=11 // pred_fallthru
          _
        // Predicated region
        $region21: #{tpu_custom_call.1} parent=11 // pred_check
          %p410 = pneg %p143
        $region22: #{tpu_custom_call.1} parent=11 // pred_check_branch
          %412 = sbr.rel (%p410) target = $region24
        $region23: #{tpu_custom_call.1} parent=11 // pred_region
          _
        $region24: #{tpu_custom_call.1} parent=11 // pred_fallthru
          _
        // Predicated region
        $region25: #{tpu_custom_call.1} parent=11 // pred_check
          %p413 = pneg %p164
        $region26: #{tpu_custom_call.1} parent=11 // pred_check_branch
          %415 = sbr.rel (%p413) target = $region28
        $region27: #{tpu_custom_call.1} parent=11 // pred_region
          %s417 = ssub.s32 128, 128
          %418 = vsyncadd [#allocation6], %s417
          %s420 = sshll.u32 [#allocation5], 4
          %s421 = int_to_ptr.vmem [resolvable:$true] %s420
          %423 = dma.hbm_to_vmem [thread:$0]  %s5, 128, %s421, [#allocation6]
        $region28: #{tpu_custom_call.1} parent=11 // pred_fallthru
          _
        // Predicated region
        $region29: #{tpu_custom_call.1} parent=11 // pred_check
          %p424 = pneg %p185
        $region30: #{tpu_custom_call.1} parent=11 // pred_check_branch
          %426 = sbr.rel (%p424) target = $region32
        $region31: #{tpu_custom_call.1} parent=11 // pred_region
          _
        $region32: #{tpu_custom_call.1} parent=11 // pred_fallthru
          _
        // Predicated region
        $region33: #{tpu_custom_call.1} parent=11 // pred_check
          %p427 = pneg %p206
        $region34: #{tpu_custom_call.1} parent=11 // pred_check_branch
          %429 = sbr.rel (%p427) target = $region36
        $region35: #{tpu_custom_call.1} parent=11 // pred_region
          %s431 = ssub.s32 2048, 2048
          %432 = vsyncadd [#allocation6], %s431
          %s433 = sshll.u32 [#allocation7], 4
          %s434 = int_to_ptr.vmem [resolvable:$true] %s433
          %439 = dma.hbm_to_vmem [thread:$0]  %s7, 2048, %s434, [#allocation6], 64, 64, 4
        $region36: #{tpu_custom_call.1} parent=11 // pred_fallthru
          _
        // Predicated region
        $region37: #{tpu_custom_call.1} parent=11 // pred_check
          %p440 = pneg %p227
        $region38: #{tpu_custom_call.1} parent=11 // pred_check_branch
          %442 = sbr.rel (%p440) target = $region40
        $region39: #{tpu_custom_call.1} parent=11 // pred_region
          _
        $region40: #{tpu_custom_call.1} parent=11 // pred_fallthru
          _
        // Predicated region
        $region41: #{tpu_custom_call.1} parent=11 // pred_check
          %p443 = pneg %p248
        $region42: #{tpu_custom_call.1} parent=11 // pred_check_branch
          %445 = sbr.rel (%p443) target = $region44
        $region43: #{tpu_custom_call.1} parent=11 // pred_region
          _
        $region44: #{tpu_custom_call.1} parent=11 // pred_fallthru
          _
        // Predicated region
        $region45: #{tpu_custom_call.1} parent=11 // pred_check
          %p446 = pneg %p269
        $region46: #{tpu_custom_call.1} parent=11 // pred_check_branch
          %448 = sbr.rel (%p446) target = $region48
        $region47: #{tpu_custom_call.1} parent=11 // pred_region
          %s450 = ssub.s32 16, 16
          %451 = vsyncadd [#allocation9], %s450
          %s453 = sshll.u32 [#allocation8], 4
          %s454 = int_to_ptr.vmem [resolvable:$true] %s453
          %456 = dma.hbm_to_vmem [thread:$0]  %s10, 16, %s454, [#allocation9]
        $region48: #{tpu_custom_call.1} parent=11 // pred_fallthru
          _
        // Predicated region
        $region49: #{tpu_custom_call.1} parent=11 // pred_check
          %p457 = pneg %p290
        $region50: #{tpu_custom_call.1} parent=11 // pred_check_branch
          %459 = sbr.rel (%p457) target = $region52
        $region51: #{tpu_custom_call.1} parent=11 // pred_region
          %s461 = ssub.s32 1024, 1024
          %462 = vsyncadd [#allocation9], %s461
          %s463 = sshll.u32 [#allocation10], 4
          %s464 = int_to_ptr.vmem [resolvable:$true] %s463
          %469 = dma.hbm_to_vmem [thread:$0]  %s11, 1024, %s464, [#allocation9], 64, 64, 4
        $region52: #{tpu_custom_call.1} parent=11 // pred_fallthru
          _
        // Predicated region
        $region53: #{tpu_custom_call.1} parent=11 // pred_check
          %p470 = pneg %p311
        $region54: #{tpu_custom_call.1} parent=11 // pred_check_branch
          %472 = sbr.rel (%p470) target = $region56
        $region55: #{tpu_custom_call.1} parent=11 // pred_region
          _
        $region56: #{tpu_custom_call.1} parent=11 // pred_fallthru
          _
        // Predicated region
        $region57: #{tpu_custom_call.1} parent=11 // pred_check
          %p473 = pneg %p332
        $region58: #{tpu_custom_call.1} parent=11 // pred_check_branch
          %475 = sbr.rel (%p473) target = $region60
        $region59: #{tpu_custom_call.1} parent=11 // pred_region
          %s477 = ssub.s32 16, 16
          %478 = vsyncadd [#allocation12], %s477
          %s480 = sshll.u32 [#allocation11], 4
          %s481 = int_to_ptr.vmem [resolvable:$true] %s480
          %483 = dma.hbm_to_vmem [thread:$0]  %s13, 16, %s481, [#allocation12]
        $region60: #{tpu_custom_call.1} parent=11 // pred_fallthru
          _
        // Predicated region
        $region61: #{tpu_custom_call.1} parent=11 // pred_check
          %p484 = pneg %p353
        $region62: #{tpu_custom_call.1} parent=11 // pred_check_branch
          %486 = sbr.rel (%p484) target = $region64
        $region63: #{tpu_custom_call.1} parent=11 // pred_region
          %s488 = ssub.s32 1024, 1024
          %489 = vsyncadd [#allocation12], %s488
          %s490 = sshll.u32 [#allocation13], 4
          %s491 = int_to_ptr.vmem [resolvable:$true] %s490
          %496 = dma.hbm_to_vmem [thread:$0]  %s14, 1024, %s491, [#allocation12], 64, 64, 4
        $region64: #{tpu_custom_call.1} parent=11 // pred_fallthru
          _
      $region12: #{tpu_custom_call.1} parent=5 // pred_fallthru
        _
      %p497 = scmp.lt.s32.totalorder %s28, 3
      // Predicated region
      $region65: #{tpu_custom_call.1} parent=5 // pred_check
        %p498 = pneg %p497
      $region66: #{tpu_custom_call.1} parent=5 // pred_check_branch
        %500 = sbr.rel (%p498) target = $region68
      $region67: #{tpu_custom_call.1} parent=5 // pred_region
        // Predicated region
        $region69: #{tpu_custom_call.1} parent=67 // pred_check
          %p501 = pneg %p48
        $region70: #{tpu_custom_call.1} parent=67 // pred_check_branch
          %503 = sbr.rel (%p501) target = $region72
        $region71: #{tpu_custom_call.1} parent=67 // pred_region
          %p504 = scmp.lt.s32.totalorder %s28, 2
          %s505 = scalar_select %p504, %s28, 2
          %s506 = smul.addr %s505, 16
          %s507 = smul.addr %s506, 8
          %s508 = scalar_lea.vmem %s0, %s507
        $region72: #{tpu_custom_call.1} parent=67 // pred_fallthru
          _
        // Predicated region
        $region73: #{tpu_custom_call.1} parent=67 // pred_check
          %p509 = pneg %p74
        $region74: #{tpu_custom_call.1} parent=67 // pred_check_branch
          %511 = sbr.rel (%p509) target = $region76
        $region75: #{tpu_custom_call.1} parent=67 // pred_region
          %p512 = scmp.lt.s32.totalorder %s28, 2
          %s513 = scalar_select %p512, %s28, 2
          %s514 = smul.addr %s513, 16
          %s515 = smul.addr %s514, 4
          %s516 = scalar_lea.vmem %s1, %s515
        $region76: #{tpu_custom_call.1} parent=67 // pred_fallthru
          _
      $region68: #{tpu_custom_call.1} parent=5 // pred_fallthru
        _
      %p517 = scmp.le.s32.totalorder 1, %s28
      %p518 = scmp.lt.s32.totalorder %s28, 4
      %p519 = pnand %p517, %p518
      %p520 = pneg %p519
      // Predicated region
      $region77: #{tpu_custom_call.1} parent=5 // pred_check
        _
      $region78: #{tpu_custom_call.1} parent=5 // pred_check_branch
        %522 = sbr.rel (%p519) target = $region80
      $region79: #{tpu_custom_call.1} parent=5 // pred_region
        %s523 = ssub.s32 %s28, 1
        // Predicated region
        $region81: #{tpu_custom_call.1} parent=79 // pred_check
          %p524 = pneg %p122
        $region82: #{tpu_custom_call.1} parent=79 // pred_check_branch
          %526 = sbr.rel (%p524) target = $region84
        $region83: #{tpu_custom_call.1} parent=79 // pred_region
          %527 = dma.done [#allocation3], 2048
        $region84: #{tpu_custom_call.1} parent=79 // pred_fallthru
          _
        // Predicated region
        $region85: #{tpu_custom_call.1} parent=79 // pred_check
          %p528 = pneg %p164
        $region86: #{tpu_custom_call.1} parent=79 // pred_check_branch
          %530 = sbr.rel (%p528) target = $region88
        $region87: #{tpu_custom_call.1} parent=79 // pred_region
          %531 = dma.done [#allocation6], 128
        $region88: #{tpu_custom_call.1} parent=79 // pred_fallthru
          _
        // Predicated region
        $region89: #{tpu_custom_call.1} parent=79 // pred_check
          %p532 = pneg %p206
        $region90: #{tpu_custom_call.1} parent=79 // pred_check_branch
          %534 = sbr.rel (%p532) target = $region92
        $region91: #{tpu_custom_call.1} parent=79 // pred_region
          %535 = dma.done [#allocation6], 2048
        $region92: #{tpu_custom_call.1} parent=79 // pred_fallthru
          _
        // Predicated region
        $region93: #{tpu_custom_call.1} parent=79 // pred_check
          %p536 = pneg %p269
        $region94: #{tpu_custom_call.1} parent=79 // pred_check_branch
          %538 = sbr.rel (%p536) target = $region96
        $region95: #{tpu_custom_call.1} parent=79 // pred_region
          %539 = dma.done [#allocation9], 16
        $region96: #{tpu_custom_call.1} parent=79 // pred_fallthru
          _
        // Predicated region
        $region97: #{tpu_custom_call.1} parent=79 // pred_check
          %p540 = pneg %p290
        $region98: #{tpu_custom_call.1} parent=79 // pred_check_branch
          %542 = sbr.rel (%p540) target = $region100
        $region99: #{tpu_custom_call.1} parent=79 // pred_region
          %543 = dma.done [#allocation9], 1024
        $region100: #{tpu_custom_call.1} parent=79 // pred_fallthru
          _
        // Predicated region
        $region101: #{tpu_custom_call.1} parent=79 // pred_check
          %p544 = pneg %p332
        $region102: #{tpu_custom_call.1} parent=79 // pred_check_branch
          %546 = sbr.rel (%p544) target = $region104
        $region103: #{tpu_custom_call.1} parent=79 // pred_region
          %547 = dma.done [#allocation12], 16
        $region104: #{tpu_custom_call.1} parent=79 // pred_fallthru
          _
        // Predicated region
        $region105: #{tpu_custom_call.1} parent=79 // pred_check
          %p548 = pneg %p353
        $region106: #{tpu_custom_call.1} parent=79 // pred_check_branch
          %550 = sbr.rel (%p548) target = $region108
        $region107: #{tpu_custom_call.1} parent=79 // pred_region
          %551 = dma.done [#allocation12], 1024
        $region108: #{tpu_custom_call.1} parent=79 // pred_fallthru
          _
        %p552 = scmp.lt.s32.totalorder %s33, 2
        %s553 = scalar_select %p552, %s33, 2
        %s554 = smul.addr %s553, 16
        %s555 = smul.addr %s554, 8
        %s556 = scalar_lea.vmem %s0, %s555
        %p557 = pneg %p54
        %p558 = pneg %p51
        %p559 = scmp.lt.s32.totalorder %s33, 2
        %s560 = scalar_select %p559, %s33, 2
        %s561 = smul.addr %s560, 16
        %s562 = smul.addr %s561, 4
        %s563 = scalar_lea.vmem %s1, %s562
        %p564 = pneg %p80
        %p565 = pneg %p77
        %p566 = pneg %p101
        %p567 = pneg %p98
        %p568 = pneg %p122
        %p569 = pneg %p119
        %p570 = pneg %p143
        %p571 = pneg %p140
        %p572 = pneg %p164
        %p573 = pneg %p161
        %p574 = pneg %p185
        %p575 = pneg %p182
        %p576 = pneg %p206
        %p577 = pneg %p203
        %p578 = pneg %p227
        %p579 = pneg %p224
        %p580 = pneg %p248
        %p581 = pneg %p245
        %p582 = pneg %p269
        %p583 = pneg %p266
        %p584 = pneg %p290
        %p585 = pneg %p287
        %p586 = pneg %p311
        %p587 = pneg %p308
        %p588 = pneg %p332
        %p589 = pneg %p329
        %p590 = pneg %p353
        %p591 = pneg %p350
        %p592 = pneg %p379
        %p593 = pneg %p376
        %s594 = sand.u32 %s366, 1
        %s595 = scalar_lea.sflag [#allocation4], %s594
        %s596 = sand.u32 %s366, 1
        %s597 = smul.addr %s596, 2
        %s598 = scalar_lea.vmem [#allocation14], %s597
        %p599 = scmp.lt.s32.totalorder %s33, 2
        %s600 = scalar_select %p599, %s33, 2
        %s601 = smul.addr %s600, 16
        %s602 = smul.addr %s601, 8
        %s603 = scalar_lea.vmem %s0, %s602
        %p604 = scmp.lt.s32.totalorder %s33, 2
        %s605 = scalar_select %p604, %s33, 2
        %s606 = smul.addr %s605, 16
        %s607 = smul.addr %s606, 4
        %s608 = scalar_lea.vmem %s1, %s607
        %v610 = vld [vmem:[%s608] sm:$0xf]
        %v611 = vld [vmem:[%s608 + $0x4] sm:$0xf]
        %v612 = vld [vmem:[%s608 + $0x8] sm:$0xf]
        %v613 = vld [vmem:[%s608 + $0xc] sm:$0xf]
        %v614 = vld [vmem:[%s608 + $0x10] sm:$0xf]
        %v615 = vld [vmem:[%s608 + $0x14] sm:$0xf]
        %v616 = vld [vmem:[%s608 + $0x18] sm:$0xf]
        %v617 = vld [vmem:[%s608 + $0x1c] sm:$0xf]
        %v618 = vld [vmem:[%s608 + $0x20] sm:$0xf]
        %v619 = vld [vmem:[%s608 + $0x24] sm:$0xf]
        %v620 = vld [vmem:[%s608 + $0x28] sm:$0xf]
        %v621 = vld [vmem:[%s608 + $0x2c] sm:$0xf]
        %v622 = vld [vmem:[%s608 + $0x30] sm:$0xf]
        %v623 = vld [vmem:[%s608 + $0x34] sm:$0xf]
        %v624 = vld [vmem:[%s608 + $0x38] sm:$0xf]
        %v625 = vld [vmem:[%s608 + $0x3c] sm:$0xf]
        %v626 = vld [vmem:[%s603] sm:$0xff]
        %v627 = vld [vmem:[%s603 + $0x8] sm:$0xff]
        %v628 = vld [vmem:[%s603 + $0x10] sm:$0xff]
        %v629 = vld [vmem:[%s603 + $0x18] sm:$0xff]
        %v630 = vld [vmem:[%s603 + $0x20] sm:$0xff]
        %v631 = vld [vmem:[%s603 + $0x28] sm:$0xff]
        %v632 = vld [vmem:[%s603 + $0x30] sm:$0xff]
        %v633 = vld [vmem:[%s603 + $0x38] sm:$0xff]
        %v634 = vld [vmem:[%s603 + $0x40] sm:$0xff]
        %v635 = vld [vmem:[%s603 + $0x48] sm:$0xff]
        %v636 = vld [vmem:[%s603 + $0x50] sm:$0xff]
        %v637 = vld [vmem:[%s603 + $0x58] sm:$0xff]
        %v638 = vld [vmem:[%s603 + $0x60] sm:$0xff]
        %v639 = vld [vmem:[%s603 + $0x68] sm:$0xff]
        %v640 = vld [vmem:[%s603 + $0x70] sm:$0xff]
        %v641 = vld [vmem:[%s603 + $0x78] sm:$0xff]
        %v642 = vpack.c.bf16 %v627, %v626
        %v643 = vpack.c.bf16 %v629, %v628
        %v644 = vpack.c.bf16 %v631, %v630
        %v645 = vpack.c.bf16 %v633, %v632
        %v646 = vpack.c.bf16 %v635, %v634
        %v647 = vpack.c.bf16 %v637, %v636
        %v648 = vpack.c.bf16 %v639, %v638
        %v649 = vpack.c.bf16 %v641, %v640
        %v650 = vld [vmem:[#allocation5] sm:$0xff]
        %v651 = vld [vmem:[%s6] sm:$0x3]
        %v653 = vlaneseq
        %v654 = vshrl.u32 %v653, 7
        %v655 = vsub.s32 0, %v654
        %v656 = vrot.slane %v651, %v655
        %v657 = vlaneseq
        %v658 = vshrl.u32 %v657, 7
        %v659 = vsub.s32 1, %v658
        %v660 = vrot.slane %v651, %v659
        %v664 = vunpack.c.l.b16 %v650
        %v665 = vunpack.c.h.b16 %v650
        %v666 = vpack.c.b16 %v664, %v664
        %v667 = vpack.c.b16 %v665, %v665
        %vm668 = vcmask 64512
        %v670 = vsel %vm668, %v642, 0
        %v673 = vsel %vm668, %v643, 0
        %v676 = vsel %vm668, %v644, 0
        %v679 = vsel %vm668, %v645, 0
        %v682 = vsel %vm668, %v646, 0
        %v685 = vsel %vm668, %v647, 0
        %v688 = vsel %vm668, %v648, 0
        %v691 = vsel %vm668, %v649, 0
        %vm693 = vcmask 1043456
        %v695 = vsel %vm693, %v666, 0
        %v698 = vsel %vm693, %v667, 0
        %700 = vmatprep.subr.bf16.mxu0 %v698
        %701 = vmatpush1.bf16.msra.mxu0 %v695
        %702 = vmatprep.subr.bf16.mxu0 0
        %703 = vmatpush1.bf16.msra.mxu0 0
        %704 = vmatprep.subr.bf16.mxu0 0
        %705 = vmatpush1.bf16.msra.mxu0 0
        %706 = vmatprep.subr.bf16.mxu0 0
        %707 = vmatpush1.bf16.msra.mxu0 0
        %708 = vmatprep.subr.bf16.mxu0 0
        %709 = vmatpush1.bf16.msra.mxu0 0
        %710 = vmatprep.subr.bf16.mxu0 0
        %711 = vmatpush1.bf16.msra.mxu0 0
        %712 = vmatprep.subr.bf16.mxu0 0
        %713 = vmatpush1.bf16.msra.mxu0 0
        %714 = vmatprep.subr.bf16.mxu0 0
        %715 = vmatpush1.bf16.msra.mxu0 0
        %716 = vmatprep.subr.bf16.mxu0 0
        %717 = vmatpush1.bf16.msra.mxu0 0
        %718 = vmatprep.subr.bf16.mxu0 0
        %719 = vmatpush1.bf16.msra.mxu0 0
        %720 = vmatprep.subr.bf16.mxu0 0
        %721 = vmatpush1.bf16.msra.mxu0 0
        %722 = vmatprep.subr.bf16.mxu0 0
        %723 = vmatpush1.bf16.msra.mxu0 0
        %724 = vmatprep.subr.bf16.mxu0 0
        %725 = vmatpush1.bf16.msra.mxu0 0
        %726 = vmatprep.subr.bf16.mxu0 0
        %727 = vmatpush1.bf16.msra.mxu0 0
        %728 = vmatprep.subr.bf16.mxu0 0
        %729 = vmatpush1.bf16.msra.mxu0 0
        %730 = vmatprep.subr.bf16.mxu0 0
        %731 = vmatpush1.bf16.msra.mxu0 0
        %732 = vmatprep.mubr.bf16.mxu0 0
        %733 = vmatmul.mubr.bf16.gmra.mrb[0].mxu0 %v670
        %v734 = vpop.f32.mrb[0].mxu0
        %v735 = vadd.f32 %v656, %v734
        %v736 = vpop.f32.mrb[0].mxu0
        %v737 = vadd.f32 %v660, %v736
        %v738 = vpop.f32.mrb[0].mxu0
        %v739 = vadd.f32 %v656, %v738
        %v740 = vpop.f32.mrb[0].mxu0
        %v741 = vadd.f32 %v660, %v740
        %742 = vmatprep.mubr.bf16.mxu0 0
        %743 = vmatmul.mubr.bf16.gmra.mrb[0].mxu0 %v673
        %v744 = vpop.f32.mrb[0].mxu0
        %v745 = vadd.f32 %v656, %v744
        %v746 = vpop.f32.mrb[0].mxu0
        %v747 = vadd.f32 %v660, %v746
        %v748 = vpop.f32.mrb[0].mxu0
        %v749 = vadd.f32 %v656, %v748
        %v750 = vpop.f32.mrb[0].mxu0
        %v751 = vadd.f32 %v660, %v750
        %752 = vmatprep.mubr.bf16.mxu0 0
        %753 = vmatmul.mubr.bf16.gmra.mrb[0].mxu0 %v676
        %v754 = vpop.f32.mrb[0].mxu0
        %v755 = vadd.f32 %v656, %v754
        %v756 = vpop.f32.mrb[0].mxu0
        %v757 = vadd.f32 %v660, %v756
        %v758 = vpop.f32.mrb[0].mxu0
        %v759 = vadd.f32 %v656, %v758
        %v760 = vpop.f32.mrb[0].mxu0
        %v761 = vadd.f32 %v660, %v760
        %762 = vmatprep.mubr.bf16.mxu0 0
        %763 = vmatmul.mubr.bf16.gmra.mrb[0].mxu0 %v679
        %v764 = vpop.f32.mrb[0].mxu0
        %v765 = vadd.f32 %v656, %v764
        %v766 = vpop.f32.mrb[0].mxu0
        %v767 = vadd.f32 %v660, %v766
        %v768 = vpop.f32.mrb[0].mxu0
        %v769 = vadd.f32 %v656, %v768
        %v770 = vpop.f32.mrb[0].mxu0
        %v771 = vadd.f32 %v660, %v770
        %772 = vmatprep.mubr.bf16.mxu0 0
        %773 = vmatmul.mubr.bf16.gmra.mrb[0].mxu0 %v682
        %v774 = vpop.f32.mrb[0].mxu0
        %v775 = vadd.f32 %v656, %v774
        %v776 = vpop.f32.mrb[0].mxu0
        %v777 = vadd.f32 %v660, %v776
        %v778 = vpop.f32.mrb[0].mxu0
        %v779 = vadd.f32 %v656, %v778
        %v780 = vpop.f32.mrb[0].mxu0
        %v781 = vadd.f32 %v660, %v780
        %782 = vmatprep.mubr.bf16.mxu0 0
        %783 = vmatmul.mubr.bf16.gmra.mrb[0].mxu0 %v685
        %v784 = vpop.f32.mrb[0].mxu0
        %v785 = vadd.f32 %v656, %v784
        %v786 = vpop.f32.mrb[0].mxu0
        %v787 = vadd.f32 %v660, %v786
        %v788 = vpop.f32.mrb[0].mxu0
        %v789 = vadd.f32 %v656, %v788
        %v790 = vpop.f32.mrb[0].mxu0
        %v791 = vadd.f32 %v660, %v790
        %792 = vmatprep.mubr.bf16.mxu0 0
        %793 = vmatmul.mubr.bf16.gmra.mrb[0].mxu0 %v688
        %v794 = vpop.f32.mrb[0].mxu0
        %v795 = vadd.f32 %v656, %v794
        %v796 = vpop.f32.mrb[0].mxu0
        %v797 = vadd.f32 %v660, %v796
        %v798 = vpop.f32.mrb[0].mxu0
        %v799 = vadd.f32 %v656, %v798
        %v800 = vpop.f32.mrb[0].mxu0
        %v801 = vadd.f32 %v660, %v800
        %802 = vmatprep.mubr.bf16.mxu0 0
        %803 = vmatmul.mubr.bf16.gmra.mrb[0].mxu0 %v691
        %v804 = vpop.f32.mrb[0].mxu0
        %v805 = vadd.f32 %v656, %v804
        %v806 = vpop.f32.mrb[0].mxu0
        %v807 = vadd.f32 %v660, %v806
        %v808 = vpop.f32.mrb[0].mxu0
        %v809 = vadd.f32 %v656, %v808
        %v810 = vpop.f32.mrb[0].mxu0
        %v811 = vadd.f32 %v660, %v810
        %812 = vdwg.mxu0
        %vm813 = vcmp.gt.f32.partialorder %v735, 0.0
        %vm814 = vcmp.gt.f32.partialorder %v737, 0.0
        %vm815 = vcmp.gt.f32.partialorder %v739, 0.0
        %vm816 = vcmp.gt.f32.partialorder %v741, 0.0
        %vm817 = vcmp.gt.f32.partialorder %v745, 0.0
        %vm818 = vcmp.gt.f32.partialorder %v747, 0.0
        %vm819 = vcmp.gt.f32.partialorder %v749, 0.0
        %vm820 = vcmp.gt.f32.partialorder %v751, 0.0
        %vm821 = vcmp.gt.f32.partialorder %v755, 0.0
        %vm822 = vcmp.gt.f32.partialorder %v757, 0.0
        %vm823 = vcmp.gt.f32.partialorder %v759, 0.0
        %vm824 = vcmp.gt.f32.partialorder %v761, 0.0
        %vm825 = vcmp.gt.f32.partialorder %v765, 0.0
        %vm826 = vcmp.gt.f32.partialorder %v767, 0.0
        %vm827 = vcmp.gt.f32.partialorder %v769, 0.0
        %vm828 = vcmp.gt.f32.partialorder %v771, 0.0
        %vm829 = vcmp.gt.f32.partialorder %v775, 0.0
        %vm830 = vcmp.gt.f32.partialorder %v777, 0.0
        %vm831 = vcmp.gt.f32.partialorder %v779, 0.0
        %vm832 = vcmp.gt.f32.partialorder %v781, 0.0
        %vm833 = vcmp.gt.f32.partialorder %v785, 0.0
        %vm834 = vcmp.gt.f32.partialorder %v787, 0.0
        %vm835 = vcmp.gt.f32.partialorder %v789, 0.0
        %vm836 = vcmp.gt.f32.partialorder %v791, 0.0
        %vm837 = vcmp.gt.f32.partialorder %v795, 0.0
        %vm838 = vcmp.gt.f32.partialorder %v797, 0.0
        %vm839 = vcmp.gt.f32.partialorder %v799, 0.0
        %vm840 = vcmp.gt.f32.partialorder %v801, 0.0
        %vm841 = vcmp.gt.f32.partialorder %v805, 0.0
        %vm842 = vcmp.gt.f32.partialorder %v807, 0.0
        %vm843 = vcmp.gt.f32.partialorder %v809, 0.0
        %vm844 = vcmp.gt.f32.partialorder %v811, 0.0
        %v845 = vmul.f32 %v735, 0.01
        %v846 = vmul.f32 %v737, 0.01
        %v847 = vmul.f32 %v739, 0.01
        %v848 = vmul.f32 %v741, 0.01
        %v849 = vmul.f32 %v745, 0.01
        %v850 = vmul.f32 %v747, 0.01
        %v851 = vmul.f32 %v749, 0.01
        %v852 = vmul.f32 %v751, 0.01
        %v853 = vmul.f32 %v755, 0.01
        %v854 = vmul.f32 %v757, 0.01
        %v855 = vmul.f32 %v759, 0.01
        %v856 = vmul.f32 %v761, 0.01
        %v857 = vmul.f32 %v765, 0.01
        %v858 = vmul.f32 %v767, 0.01
        %v859 = vmul.f32 %v769, 0.01
        %v860 = vmul.f32 %v771, 0.01
        %v861 = vmul.f32 %v775, 0.01
        %v862 = vmul.f32 %v777, 0.01
        %v863 = vmul.f32 %v779, 0.01
        %v864 = vmul.f32 %v781, 0.01
        %v865 = vmul.f32 %v785, 0.01
        %v866 = vmul.f32 %v787, 0.01
        %v867 = vmul.f32 %v789, 0.01
        %v868 = vmul.f32 %v791, 0.01
        %v869 = vmul.f32 %v795, 0.01
        %v870 = vmul.f32 %v797, 0.01
        %v871 = vmul.f32 %v799, 0.01
        %v872 = vmul.f32 %v801, 0.01
        %v873 = vmul.f32 %v805, 0.01
        %v874 = vmul.f32 %v807, 0.01
        %v875 = vmul.f32 %v809, 0.01
        %v876 = vmul.f32 %v811, 0.01
        %v877 = vsel %vm813, %v735, %v845
        %v878 = vsel %vm814, %v737, %v846
        %v879 = vsel %vm815, %v739, %v847
        %v880 = vsel %vm816, %v741, %v848
        %v881 = vsel %vm817, %v745, %v849
        %v882 = vsel %vm818, %v747, %v850
        %v883 = vsel %vm819, %v749, %v851
        %v884 = vsel %vm820, %v751, %v852
        %v885 = vsel %vm821, %v755, %v853
        %v886 = vsel %vm822, %v757, %v854
        %v887 = vsel %vm823, %v759, %v855
        %v888 = vsel %vm824, %v761, %v856
        %v889 = vsel %vm825, %v765, %v857
        %v890 = vsel %vm826, %v767, %v858
        %v891 = vsel %vm827, %v769, %v859
        %v892 = vsel %vm828, %v771, %v860
        %v893 = vsel %vm829, %v775, %v861
        %v894 = vsel %vm830, %v777, %v862
        %v895 = vsel %vm831, %v779, %v863
        %v896 = vsel %vm832, %v781, %v864
        %v897 = vsel %vm833, %v785, %v865
        %v898 = vsel %vm834, %v787, %v866
        %v899 = vsel %vm835, %v789, %v867
        %v900 = vsel %vm836, %v791, %v868
        %v901 = vsel %vm837, %v795, %v869
        %v902 = vsel %vm838, %v797, %v870
        %v903 = vsel %vm839, %v799, %v871
        %v904 = vsel %vm840, %v801, %v872
        %v905 = vsel %vm841, %v805, %v873
        %v906 = vsel %vm842, %v807, %v874
        %v907 = vsel %vm843, %v809, %v875
        %v908 = vsel %vm844, %v811, %v876
        %v909 = vpack.c.bf16 %v879, %v877
        %v910 = vpack.c.bf16 %v880, %v878
        %v911 = vpack.c.bf16 %v883, %v881
        %v912 = vpack.c.bf16 %v884, %v882
        %v913 = vpack.c.bf16 %v887, %v885
        %v914 = vpack.c.bf16 %v888, %v886
        %v915 = vpack.c.bf16 %v891, %v889
        %v916 = vpack.c.bf16 %v892, %v890
        %v917 = vpack.c.bf16 %v895, %v893
        %v918 = vpack.c.bf16 %v896, %v894
        %v919 = vpack.c.bf16 %v899, %v897
        %v920 = vpack.c.bf16 %v900, %v898
        %v921 = vpack.c.bf16 %v903, %v901
        %v922 = vpack.c.bf16 %v904, %v902
        %v923 = vpack.c.bf16 %v907, %v905
        %v924 = vpack.c.bf16 %v908, %v906
        %v925 = vld [vmem:[#allocation7] sm:$0xf]
        %v926 = vld [vmem:[#allocation7 + $0x4] sm:$0xf]
        %v927 = vld [vmem:[#allocation7 + $0x8] sm:$0xf]
        %v928 = vld [vmem:[#allocation7 + $0xc] sm:$0xf]
        %v929 = vld [vmem:[#allocation7 + $0x10] sm:$0xf]
        %v930 = vld [vmem:[#allocation7 + $0x14] sm:$0xf]
        %v931 = vld [vmem:[#allocation7 + $0x18] sm:$0xf]
        %v932 = vld [vmem:[#allocation7 + $0x1c] sm:$0xf]
        %v933 = vld [vmem:[#allocation7 + $0x20] sm:$0xf]
        %v934 = vld [vmem:[#allocation7 + $0x24] sm:$0xf]
        %v935 = vld [vmem:[#allocation7 + $0x28] sm:$0xf]
        %v936 = vld [vmem:[#allocation7 + $0x2c] sm:$0xf]
        %v937 = vld [vmem:[#allocation7 + $0x30] sm:$0xf]
        %v938 = vld [vmem:[#allocation7 + $0x34] sm:$0xf]
        %v939 = vld [vmem:[#allocation7 + $0x38] sm:$0xf]
        %v940 = vld [vmem:[#allocation7 + $0x3c] sm:$0xf]
        %v941 = vld [vmem:[#allocation7 + $0x40] sm:$0xf]
        %v942 = vld [vmem:[#allocation7 + $0x44] sm:$0xf]
        %v943 = vld [vmem:[#allocation7 + $0x48] sm:$0xf]
        %v944 = vld [vmem:[#allocation7 + $0x4c] sm:$0xf]
        %v945 = vld [vmem:[#allocation7 + $0x50] sm:$0xf]
        %v946 = vld [vmem:[#allocation7 + $0x54] sm:$0xf]
        %v947 = vld [vmem:[#allocation7 + $0x58] sm:$0xf]
        %v948 = vld [vmem:[#allocation7 + $0x5c] sm:$0xf]
        %v949 = vld [vmem:[#allocation7 + $0x60] sm:$0xf]
        %v950 = vld [vmem:[#allocation7 + $0x64] sm:$0xf]
        %v951 = vld [vmem:[#allocation7 + $0x68] sm:$0xf]
        %v952 = vld [vmem:[#allocation7 + $0x6c] sm:$0xf]
        %v953 = vld [vmem:[#allocation7 + $0x70] sm:$0xf]
        %v954 = vld [vmem:[#allocation7 + $0x74] sm:$0xf]
        %v955 = vld [vmem:[#allocation7 + $0x78] sm:$0xf]
        %v956 = vld [vmem:[#allocation7 + $0x7c] sm:$0xf]
        %v957 = vld [vmem:[%s8] sm:$0x1]
        %v959 = vlaneseq
        %v960 = vshrl.u32 %v959, 7
        %v961 = vsub.s32 0, %v960
        %v962 = vrot.slane %v957, %v961
        %v996 = vunpack.c.l.b16 %v925
        %v997 = vunpack.c.l.b16 %v926
        %v998 = vunpack.c.l.b16 %v927
        %v999 = vunpack.c.l.b16 %v928
        %v1000 = vunpack.c.l.b16 %v929
        %v1001 = vunpack.c.l.b16 %v930
        %v1002 = vunpack.c.l.b16 %v931
        %v1003 = vunpack.c.l.b16 %v932
        %v1004 = vunpack.c.l.b16 %v933
        %v1005 = vunpack.c.l.b16 %v934
        %v1006 = vunpack.c.l.b16 %v935
        %v1007 = vunpack.c.l.b16 %v936
        %v1008 = vunpack.c.l.b16 %v937
        %v1009 = vunpack.c.l.b16 %v938
        %v1010 = vunpack.c.l.b16 %v939
        %v1011 = vunpack.c.l.b16 %v940
        %v1012 = vunpack.c.l.b16 %v941
        %v1013 = vunpack.c.l.b16 %v942
        %v1014 = vunpack.c.l.b16 %v943
        %v1015 = vunpack.c.l.b16 %v944
        %v1016 = vunpack.c.l.b16 %v945
        %v1017 = vunpack.c.l.b16 %v946
        %v1018 = vunpack.c.l.b16 %v947
        %v1019 = vunpack.c.l.b16 %v948
        %v1020 = vunpack.c.l.b16 %v949
        %v1021 = vunpack.c.l.b16 %v950
        %v1022 = vunpack.c.l.b16 %v951
        %v1023 = vunpack.c.l.b16 %v952
        %v1024 = vunpack.c.l.b16 %v953
        %v1025 = vunpack.c.l.b16 %v954
        %v1026 = vunpack.c.l.b16 %v955
        %v1027 = vunpack.c.l.b16 %v956
        %v1028 = vpack.c.b16 %v997, %v996
        %v1029 = vpack.c.b16 %v999, %v998
        %v1030 = vpack.c.b16 %v1001, %v1000
        %v1031 = vpack.c.b16 %v1003, %v1002
        %v1032 = vpack.c.b16 %v1005, %v1004
        %v1033 = vpack.c.b16 %v1007, %v1006
        %v1034 = vpack.c.b16 %v1009, %v1008
        %v1035 = vpack.c.b16 %v1011, %v1010
        %v1036 = vpack.c.b16 %v1013, %v1012
        %v1037 = vpack.c.b16 %v1015, %v1014
        %v1038 = vpack.c.b16 %v1017, %v1016
        %v1039 = vpack.c.b16 %v1019, %v1018
        %v1040 = vpack.c.b16 %v1021, %v1020
        %v1041 = vpack.c.b16 %v1023, %v1022
        %v1042 = vpack.c.b16 %v1025, %v1024
        %v1043 = vpack.c.b16 %v1027, %v1026
        %1060 = vmatprep.subr.bf16.mxu0 0
        %1061 = vmatpush1.bf16.msra.mxu0 %v1028
        %1062 = vmatprep.subr.bf16.mxu0 0
        %1063 = vmatpush1.bf16.msra.mxu0 %v1029
        %1064 = vmatprep.subr.bf16.mxu0 0
        %1065 = vmatpush1.bf16.msra.mxu0 %v1030
        %1066 = vmatprep.subr.bf16.mxu0 0
        %1067 = vmatpush1.bf16.msra.mxu0 %v1031
        %1068 = vmatprep.subr.bf16.mxu0 0
        %1069 = vmatpush1.bf16.msra.mxu0 %v1032
        %1070 = vmatprep.subr.bf16.mxu0 0
        %1071 = vmatpush1.bf16.msra.mxu0 %v1033
        %1072 = vmatprep.subr.bf16.mxu0 0
        %1073 = vmatpush1.bf16.msra.mxu0 %v1034
        %1074 = vmatprep.subr.bf16.mxu0 0
        %1075 = vmatpush1.bf16.msra.mxu0 %v1035
        %1076 = vmatprep.subr.bf16.mxu0 0
        %1077 = vmatpush1.bf16.msra.mxu0 %v1036
        %1078 = vmatprep.subr.bf16.mxu0 0
        %1079 = vmatpush1.bf16.msra.mxu0 %v1037
        %1080 = vmatprep.subr.bf16.mxu0 0
        %1081 = vmatpush1.bf16.msra.mxu0 %v1038
        %1082 = vmatprep.subr.bf16.mxu0 0
        %1083 = vmatpush1.bf16.msra.mxu0 %v1039
        %1084 = vmatprep.subr.bf16.mxu0 0
        %1085 = vmatpush1.bf16.msra.mxu0 %v1040
        %1086 = vmatprep.subr.bf16.mxu0 0
        %1087 = vmatpush1.bf16.msra.mxu0 %v1041
        %1088 = vmatprep.subr.bf16.mxu0 0
        %1089 = vmatpush1.bf16.msra.mxu0 %v1042
        %1090 = vmatprep.subr.bf16.mxu0 0
        %1091 = vmatpush1.bf16.msra.mxu0 %v1043
        %1092 = vmatprep.mubr.bf16.mxu0 %v910
        %1093 = vmatmul.mubr.bf16.gmra.mrb[0].mxu0 %v909
        %v1094 = vpop.f32.mrb[0].mxu0
        %v1095 = vadd.f32 %v962, %v1094
        %v1096 = vpop.f32.mrb[0].mxu0
        %v1097 = vpop.f32.mrb[0].mxu0
        %v1098 = vadd.f32 %v962, %v1097
        %v1099 = vpop.f32.mrb[0].mxu0
        %1100 = vmatprep.mubr.bf16.mxu0 %v912
        %1101 = vmatmul.mubr.bf16.gmra.mrb[0].mxu0 %v911
        %v1102 = vpop.f32.mrb[0].mxu0
        %v1103 = vadd.f32 %v962, %v1102
        %v1104 = vpop.f32.mrb[0].mxu0
        %v1105 = vpop.f32.mrb[0].mxu0
        %v1106 = vadd.f32 %v962, %v1105
        %v1107 = vpop.f32.mrb[0].mxu0
        %1108 = vmatprep.mubr.bf16.mxu0 %v914
        %1109 = vmatmul.mubr.bf16.gmra.mrb[0].mxu0 %v913
        %v1110 = vpop.f32.mrb[0].mxu0
        %v1111 = vadd.f32 %v962, %v1110
        %v1112 = vpop.f32.mrb[0].mxu0
        %v1113 = vpop.f32.mrb[0].mxu0
        %v1114 = vadd.f32 %v962, %v1113
        %v1115 = vpop.f32.mrb[0].mxu0
        %1116 = vmatprep.mubr.bf16.mxu0 %v916
        %1117 = vmatmul.mubr.bf16.gmra.mrb[0].mxu0 %v915
        %v1118 = vpop.f32.mrb[0].mxu0
        %v1119 = vadd.f32 %v962, %v1118
        %v1120 = vpop.f32.mrb[0].mxu0
        %v1121 = vpop.f32.mrb[0].mxu0
        %v1122 = vadd.f32 %v962, %v1121
        %v1123 = vpop.f32.mrb[0].mxu0
        %1124 = vmatprep.mubr.bf16.mxu0 %v918
        %1125 = vmatmul.mubr.bf16.gmra.mrb[0].mxu0 %v917
        %v1126 = vpop.f32.mrb[0].mxu0
        %v1127 = vadd.f32 %v962, %v1126
        %v1128 = vpop.f32.mrb[0].mxu0
        %v1129 = vpop.f32.mrb[0].mxu0
        %v1130 = vadd.f32 %v962, %v1129
        %v1131 = vpop.f32.mrb[0].mxu0
        %1132 = vmatprep.mubr.bf16.mxu0 %v920
        %1133 = vmatmul.mubr.bf16.gmra.mrb[0].mxu0 %v919
        %v1134 = vpop.f32.mrb[0].mxu0
        %v1135 = vadd.f32 %v962, %v1134
        %v1136 = vpop.f32.mrb[0].mxu0
        %v1137 = vpop.f32.mrb[0].mxu0
        %v1138 = vadd.f32 %v962, %v1137
        %v1139 = vpop.f32.mrb[0].mxu0
        %1140 = vmatprep.mubr.bf16.mxu0 %v922
        %1141 = vmatmul.mubr.bf16.gmra.mrb[0].mxu0 %v921
        %v1142 = vpop.f32.mrb[0].mxu0
        %v1143 = vadd.f32 %v962, %v1142
        %v1144 = vpop.f32.mrb[0].mxu0
        %v1145 = vpop.f32.mrb[0].mxu0
        %v1146 = vadd.f32 %v962, %v1145
        %v1147 = vpop.f32.mrb[0].mxu0
        %1148 = vmatprep.mubr.bf16.mxu0 %v924
        %1149 = vmatmul.mubr.bf16.gmra.mrb[0].mxu0 %v923
        %v1150 = vpop.f32.mrb[0].mxu0
        %v1151 = vadd.f32 %v962, %v1150
        %v1152 = vpop.f32.mrb[0].mxu0
        %v1153 = vpop.f32.mrb[0].mxu0
        %v1154 = vadd.f32 %v962, %v1153
        %v1155 = vpop.f32.mrb[0].mxu0
        %1156 = vdwg.mxu0
        %vm1157 = vcmp.gt.f32.partialorder %v1095, 0.0
        %vm1158 = vcmp.gt.f32.partialorder %v1098, 0.0
        %vm1159 = vcmp.gt.f32.partialorder %v1103, 0.0
        %vm1160 = vcmp.gt.f32.partialorder %v1106, 0.0
        %vm1161 = vcmp.gt.f32.partialorder %v1111, 0.0
        %vm1162 = vcmp.gt.f32.partialorder %v1114, 0.0
        %vm1163 = vcmp.gt.f32.partialorder %v1119, 0.0
        %vm1164 = vcmp.gt.f32.partialorder %v1122, 0.0
        %vm1165 = vcmp.gt.f32.partialorder %v1127, 0.0
        %vm1166 = vcmp.gt.f32.partialorder %v1130, 0.0
        %vm1167 = vcmp.gt.f32.partialorder %v1135, 0.0
        %vm1168 = vcmp.gt.f32.partialorder %v1138, 0.0
        %vm1169 = vcmp.gt.f32.partialorder %v1143, 0.0
        %vm1170 = vcmp.gt.f32.partialorder %v1146, 0.0
        %vm1171 = vcmp.gt.f32.partialorder %v1151, 0.0
        %vm1172 = vcmp.gt.f32.partialorder %v1154, 0.0
        %v1173 = vmul.f32 %v1095, 0.01
        %v1174 = vmul.f32 %v1098, 0.01
        %v1175 = vmul.f32 %v1103, 0.01
        %v1176 = vmul.f32 %v1106, 0.01
        %v1177 = vmul.f32 %v1111, 0.01
        %v1178 = vmul.f32 %v1114, 0.01
        %v1179 = vmul.f32 %v1119, 0.01
        %v1180 = vmul.f32 %v1122, 0.01
        %v1181 = vmul.f32 %v1127, 0.01
        %v1182 = vmul.f32 %v1130, 0.01
        %v1183 = vmul.f32 %v1135, 0.01
        %v1184 = vmul.f32 %v1138, 0.01
        %v1185 = vmul.f32 %v1143, 0.01
        %v1186 = vmul.f32 %v1146, 0.01
        %v1187 = vmul.f32 %v1151, 0.01
        %v1188 = vmul.f32 %v1154, 0.01
        %v1189 = vsel %vm1157, %v1095, %v1173
        %v1190 = vsel %vm1158, %v1098, %v1174
        %v1191 = vsel %vm1159, %v1103, %v1175
        %v1192 = vsel %vm1160, %v1106, %v1176
        %v1193 = vsel %vm1161, %v1111, %v1177
        %v1194 = vsel %vm1162, %v1114, %v1178
        %v1195 = vsel %vm1163, %v1119, %v1179
        %v1196 = vsel %vm1164, %v1122, %v1180
        %v1197 = vsel %vm1165, %v1127, %v1181
        %v1198 = vsel %vm1166, %v1130, %v1182
        %v1199 = vsel %vm1167, %v1135, %v1183
        %v1200 = vsel %vm1168, %v1138, %v1184
        %v1201 = vsel %vm1169, %v1143, %v1185
        %v1202 = vsel %vm1170, %v1146, %v1186
        %v1203 = vsel %vm1171, %v1151, %v1187
        %v1204 = vsel %vm1172, %v1154, %v1188
        %v1205 = vpack.c.bf16 %v1190, %v1189
        %v1206 = vpack.c.bf16 %v1192, %v1191
        %v1207 = vpack.c.bf16 %v1194, %v1193
        %v1208 = vpack.c.bf16 %v1196, %v1195
        %v1209 = vpack.c.bf16 %v1198, %v1197
        %v1210 = vpack.c.bf16 %v1200, %v1199
        %v1211 = vpack.c.bf16 %v1202, %v1201
        %v1212 = vpack.c.bf16 %v1204, %v1203
        %v1213 = vld [vmem:[%s9] sm:$0xf]
        %v1214 = vld [vmem:[%s9 + $0x4] sm:$0xf]
        %v1215 = vld [vmem:[%s9 + $0x8] sm:$0xf]
        %v1216 = vld [vmem:[%s9 + $0xc] sm:$0xf]
        %v1217 = vld [vmem:[%s9 + $0x10] sm:$0xf]
        %v1218 = vld [vmem:[%s9 + $0x14] sm:$0xf]
        %v1219 = vld [vmem:[%s9 + $0x18] sm:$0xf]
        %v1220 = vld [vmem:[%s9 + $0x1c] sm:$0xf]
        %v1221 = vld [vmem:[%s9 + $0x20] sm:$0xf]
        %v1222 = vld [vmem:[%s9 + $0x24] sm:$0xf]
        %v1223 = vld [vmem:[%s9 + $0x28] sm:$0xf]
        %v1224 = vld [vmem:[%s9 + $0x2c] sm:$0xf]
        %v1225 = vld [vmem:[%s9 + $0x30] sm:$0xf]
        %v1226 = vld [vmem:[%s9 + $0x34] sm:$0xf]
        %v1227 = vld [vmem:[%s9 + $0x38] sm:$0xf]
        %v1228 = vld [vmem:[%s9 + $0x3c] sm:$0xf]
        %v1245 = vunpack.c.l.b16 %v1213
        %v1246 = vunpack.c.l.b16 %v1214
        %v1247 = vunpack.c.l.b16 %v1215
        %v1248 = vunpack.c.l.b16 %v1216
        %v1249 = vunpack.c.l.b16 %v1217
        %v1250 = vunpack.c.l.b16 %v1218
        %v1251 = vunpack.c.l.b16 %v1219
        %v1252 = vunpack.c.l.b16 %v1220
        %v1253 = vunpack.c.l.b16 %v1221
        %v1254 = vunpack.c.l.b16 %v1222
        %v1255 = vunpack.c.l.b16 %v1223
        %v1256 = vunpack.c.l.b16 %v1224
        %v1257 = vunpack.c.l.b16 %v1225
        %v1258 = vunpack.c.l.b16 %v1226
        %v1259 = vunpack.c.l.b16 %v1227
        %v1260 = vunpack.c.l.b16 %v1228
        %v1261 = vpack.c.b16 %v1246, %v1245
        %v1262 = vpack.c.b16 %v1248, %v1247
        %v1263 = vpack.c.b16 %v1250, %v1249
        %v1264 = vpack.c.b16 %v1252, %v1251
        %v1265 = vpack.c.b16 %v1254, %v1253
        %v1266 = vpack.c.b16 %v1256, %v1255
        %v1267 = vpack.c.b16 %v1258, %v1257
        %v1268 = vpack.c.b16 %v1260, %v1259
        %1277 = vmatprep.subr.bf16.mxu0 0
        %1278 = vmatpush1.bf16.msra.mxu0 %v1261
        %1279 = vmatprep.subr.bf16.mxu0 0
        %1280 = vmatpush1.bf16.msra.mxu0 %v1262
        %1281 = vmatprep.subr.bf16.mxu0 0
        %1282 = vmatpush1.bf16.msra.mxu0 %v1263
        %1283 = vmatprep.subr.bf16.mxu0 0
        %1284 = vmatpush1.bf16.msra.mxu0 %v1264
        %1285 = vmatprep.subr.bf16.mxu0 0
        %1286 = vmatpush1.bf16.msra.mxu0 %v1265
        %1287 = vmatprep.subr.bf16.mxu0 0
        %1288 = vmatpush1.bf16.msra.mxu0 %v1266
        %1289 = vmatprep.subr.bf16.mxu0 0
        %1290 = vmatpush1.bf16.msra.mxu0 %v1267
        %1291 = vmatprep.subr.bf16.mxu0 0
        %1292 = vmatpush1.bf16.msra.mxu0 %v1268
        %1293 = vmatprep.subr.bf16.mxu0 0
        %1294 = vmatpush1.bf16.msra.mxu0 0
        %1295 = vmatprep.subr.bf16.mxu0 0
        %1296 = vmatpush1.bf16.msra.mxu0 0
        %1297 = vmatprep.subr.bf16.mxu0 0
        %1298 = vmatpush1.bf16.msra.mxu0 0
        %1299 = vmatprep.subr.bf16.mxu0 0
        %1300 = vmatpush1.bf16.msra.mxu0 0
        %1301 = vmatprep.subr.bf16.mxu0 0
        %1302 = vmatpush1.bf16.msra.mxu0 0
        %1303 = vmatprep.subr.bf16.mxu0 0
        %1304 = vmatpush1.bf16.msra.mxu0 0
        %1305 = vmatprep.subr.bf16.mxu0 0
        %1306 = vmatpush1.bf16.msra.mxu0 0
        %1307 = vmatprep.subr.bf16.mxu0 0
        %1308 = vmatpush1.bf16.msra.mxu0 0
        %1309 = vmatprep.mubr.bf16.mxu0 0
        %1310 = vmatmul.mubr.bf16.gmra.mrb[0].mxu0 %v1205
        %v1311 = vpop.f32.mrb[0].mxu0
        %v1312 = vadd.f32 0.0, %v1311
        %v1313 = vpop.f32.mrb[0].mxu0
        %v1314 = vpop.f32.mrb[0].mxu0
        %v1315 = vadd.f32 0.0, %v1314
        %v1316 = vpop.f32.mrb[0].mxu0
        %1317 = vmatprep.mubr.bf16.mxu0 0
        %1318 = vmatmul.mubr.bf16.gmra.mrb[0].mxu0 %v1206
        %v1319 = vpop.f32.mrb[0].mxu0
        %v1320 = vadd.f32 0.0, %v1319
        %v1321 = vpop.f32.mrb[0].mxu0
        %v1322 = vpop.f32.mrb[0].mxu0
        %v1323 = vadd.f32 0.0, %v1322
        %v1324 = vpop.f32.mrb[0].mxu0
        %1325 = vmatprep.mubr.bf16.mxu0 0
        %1326 = vmatmul.mubr.bf16.gmra.mrb[0].mxu0 %v1207
        %v1327 = vpop.f32.mrb[0].mxu0
        %v1328 = vadd.f32 0.0, %v1327
        %v1329 = vpop.f32.mrb[0].mxu0
        %v1330 = vpop.f32.mrb[0].mxu0
        %v1331 = vadd.f32 0.0, %v1330
        %v1332 = vpop.f32.mrb[0].mxu0
        %1333 = vmatprep.mubr.bf16.mxu0 0
        %1334 = vmatmul.mubr.bf16.gmra.mrb[0].mxu0 %v1208
        %v1335 = vpop.f32.mrb[0].mxu0
        %v1336 = vadd.f32 0.0, %v1335
        %v1337 = vpop.f32.mrb[0].mxu0
        %v1338 = vpop.f32.mrb[0].mxu0
        %v1339 = vadd.f32 0.0, %v1338
        %v1340 = vpop.f32.mrb[0].mxu0
        %1341 = vmatprep.mubr.bf16.mxu0 0
        %1342 = vmatmul.mubr.bf16.gmra.mrb[0].mxu0 %v1209
        %v1343 = vpop.f32.mrb[0].mxu0
        %v1344 = vadd.f32 0.0, %v1343
        %v1345 = vpop.f32.mrb[0].mxu0
        %v1346 = vpop.f32.mrb[0].mxu0
        %v1347 = vadd.f32 0.0, %v1346
        %v1348 = vpop.f32.mrb[0].mxu0
        %1349 = vmatprep.mubr.bf16.mxu0 0
        %1350 = vmatmul.mubr.bf16.gmra.mrb[0].mxu0 %v1210
        %v1351 = vpop.f32.mrb[0].mxu0
        %v1352 = vadd.f32 0.0, %v1351
        %v1353 = vpop.f32.mrb[0].mxu0
        %v1354 = vpop.f32.mrb[0].mxu0
        %v1355 = vadd.f32 0.0, %v1354
        %v1356 = vpop.f32.mrb[0].mxu0
        %1357 = vmatprep.mubr.bf16.mxu0 0
        %1358 = vmatmul.mubr.bf16.gmra.mrb[0].mxu0 %v1211
        %v1359 = vpop.f32.mrb[0].mxu0
        %v1360 = vadd.f32 0.0, %v1359
        %v1361 = vpop.f32.mrb[0].mxu0
        %v1362 = vpop.f32.mrb[0].mxu0
        %v1363 = vadd.f32 0.0, %v1362
        %v1364 = vpop.f32.mrb[0].mxu0
        %1365 = vmatprep.mubr.bf16.mxu0 0
        %1366 = vmatmul.mubr.bf16.gmra.mrb[0].mxu0 %v1212
        %v1367 = vpop.f32.mrb[0].mxu0
        %v1368 = vadd.f32 0.0, %v1367
        %v1369 = vpop.f32.mrb[0].mxu0
        %v1370 = vpop.f32.mrb[0].mxu0
        %v1371 = vadd.f32 0.0, %v1370
        %v1372 = vpop.f32.mrb[0].mxu0
        %1373 = vdwg.mxu0
        %v1374 = vpack.c.bf16 %v1315, %v1312
        %v1375 = vpack.c.bf16 %v1323, %v1320
        %v1376 = vpack.c.bf16 %v1331, %v1328
        %v1377 = vpack.c.bf16 %v1339, %v1336
        %v1378 = vpack.c.bf16 %v1347, %v1344
        %v1379 = vpack.c.bf16 %v1355, %v1352
        %v1380 = vpack.c.bf16 %v1363, %v1360
        %v1381 = vpack.c.bf16 %v1371, %v1368
        %v1382 = vld [vmem:[#allocation8] sm:$0x1]
        %v1384 = vlaneseq
        %v1385 = vshrl.u32 %v1384, 7
        %v1386 = vsub.s32 0, %v1385
        %v1387 = vrot.slane %v1382, %v1386
        %v1405 = vunpack.c.l.b16 %v610
        %v1406 = vunpack.c.l.b16 %v611
        %v1407 = vunpack.c.l.b16 %v612
        %v1408 = vunpack.c.l.b16 %v613
        %v1409 = vunpack.c.l.b16 %v614
        %v1410 = vunpack.c.l.b16 %v615
        %v1411 = vunpack.c.l.b16 %v616
        %v1412 = vunpack.c.l.b16 %v617
        %v1413 = vunpack.c.l.b16 %v618
        %v1414 = vunpack.c.l.b16 %v619
        %v1415 = vunpack.c.l.b16 %v620
        %v1416 = vunpack.c.l.b16 %v621
        %v1417 = vunpack.c.l.b16 %v622
        %v1418 = vunpack.c.l.b16 %v623
        %v1419 = vunpack.c.l.b16 %v624
        %v1420 = vunpack.c.l.b16 %v625
        %v1421 = vpack.c.b16 %v1406, %v1405
        %v1422 = vpack.c.b16 %v1408, %v1407
        %v1423 = vpack.c.b16 %v1410, %v1409
        %v1424 = vpack.c.b16 %v1412, %v1411
        %v1425 = vpack.c.b16 %v1414, %v1413
        %v1426 = vpack.c.b16 %v1416, %v1415
        %v1427 = vpack.c.b16 %v1418, %v1417
        %v1428 = vpack.c.b16 %v1420, %v1419
        %1437 = vmatprep.subr.bf16.mxu0 0
        %1438 = vmatpush1.bf16.msra.mxu0 %v1374
        %1439 = vmatprep.subr.bf16.mxu0 0
        %1440 = vmatpush1.bf16.msra.mxu0 %v1375
        %1441 = vmatprep.subr.bf16.mxu0 0
        %1442 = vmatpush1.bf16.msra.mxu0 %v1376
        %1443 = vmatprep.subr.bf16.mxu0 0
        %1444 = vmatpush1.bf16.msra.mxu0 %v1377
        %1445 = vmatprep.subr.bf16.mxu0 0
        %1446 = vmatpush1.bf16.msra.mxu0 %v1378
        %1447 = vmatprep.subr.bf16.mxu0 0
        %1448 = vmatpush1.bf16.msra.mxu0 %v1379
        %1449 = vmatprep.subr.bf16.mxu0 0
        %1450 = vmatpush1.bf16.msra.mxu0 %v1380
        %1451 = vmatprep.subr.bf16.mxu0 0
        %1452 = vmatpush1.bf16.msra.mxu0 %v1381
        %1453 = vmatprep.subr.bf16.mxu0 0
        %1454 = vmatpush1.bf16.msra.mxu0 0
        %1455 = vmatprep.subr.bf16.mxu0 0
        %1456 = vmatpush1.bf16.msra.mxu0 0
        %1457 = vmatprep.subr.bf16.mxu0 0
        %1458 = vmatpush1.bf16.msra.mxu0 0
        %1459 = vmatprep.subr.bf16.mxu0 0
        %1460 = vmatpush1.bf16.msra.mxu0 0
        %1461 = vmatprep.subr.bf16.mxu0 0
        %1462 = vmatpush1.bf16.msra.mxu0 0
        %1463 = vmatprep.subr.bf16.mxu0 0
        %1464 = vmatpush1.bf16.msra.mxu0 0
        %1465 = vmatprep.subr.bf16.mxu0 0
        %1466 = vmatpush1.bf16.msra.mxu0 0
        %1467 = vmatprep.subr.bf16.mxu0 0
        %1468 = vmatpush1.bf16.msra.mxu0 0
        %1469 = vmatprep.mubr.bf16.mxu0 0
        %1470 = vmatmul.mubr.bf16.gmra.mrb[0].mxu0 %v1421
        %v1471 = vpop.f32.mrb[0].mxu0
        %v1472 = vadd.f32 %v1387, %v1471
        %v1473 = vpop.f32.mrb[0].mxu0
        %v1474 = vpop.f32.mrb[0].mxu0
        %v1475 = vadd.f32 %v1387, %v1474
        %v1476 = vpop.f32.mrb[0].mxu0
        %1477 = vmatprep.mubr.bf16.mxu0 0
        %1478 = vmatmul.mubr.bf16.gmra.mrb[0].mxu0 %v1422
        %v1479 = vpop.f32.mrb[0].mxu0
        %v1480 = vadd.f32 %v1387, %v1479
        %v1481 = vpop.f32.mrb[0].mxu0
        %v1482 = vpop.f32.mrb[0].mxu0
        %v1483 = vadd.f32 %v1387, %v1482
        %v1484 = vpop.f32.mrb[0].mxu0
        %1485 = vmatprep.mubr.bf16.mxu0 0
        %1486 = vmatmul.mubr.bf16.gmra.mrb[0].mxu0 %v1423
        %v1487 = vpop.f32.mrb[0].mxu0
        %v1488 = vadd.f32 %v1387, %v1487
        %v1489 = vpop.f32.mrb[0].mxu0
        %v1490 = vpop.f32.mrb[0].mxu0
        %v1491 = vadd.f32 %v1387, %v1490
        %v1492 = vpop.f32.mrb[0].mxu0
        %1493 = vmatprep.mubr.bf16.mxu0 0
        %1494 = vmatmul.mubr.bf16.gmra.mrb[0].mxu0 %v1424
        %v1495 = vpop.f32.mrb[0].mxu0
        %v1496 = vadd.f32 %v1387, %v1495
        %v1497 = vpop.f32.mrb[0].mxu0
        %v1498 = vpop.f32.mrb[0].mxu0
        %v1499 = vadd.f32 %v1387, %v1498
        %v1500 = vpop.f32.mrb[0].mxu0
        %1501 = vmatprep.mubr.bf16.mxu0 0
        %1502 = vmatmul.mubr.bf16.gmra.mrb[0].mxu0 %v1425
        %v1503 = vpop.f32.mrb[0].mxu0
        %v1504 = vadd.f32 %v1387, %v1503
        %v1505 = vpop.f32.mrb[0].mxu0
        %v1506 = vpop.f32.mrb[0].mxu0
        %v1507 = vadd.f32 %v1387, %v1506
        %v1508 = vpop.f32.mrb[0].mxu0
        %1509 = vmatprep.mubr.bf16.mxu0 0
        %1510 = vmatmul.mubr.bf16.gmra.mrb[0].mxu0 %v1426
        %v1511 = vpop.f32.mrb[0].mxu0
        %v1512 = vadd.f32 %v1387, %v1511
        %v1513 = vpop.f32.mrb[0].mxu0
        %v1514 = vpop.f32.mrb[0].mxu0
        %v1515 = vadd.f32 %v1387, %v1514
        %v1516 = vpop.f32.mrb[0].mxu0
        %1517 = vmatprep.mubr.bf16.mxu0 0
        %1518 = vmatmul.mubr.bf16.gmra.mrb[0].mxu0 %v1427
        %v1519 = vpop.f32.mrb[0].mxu0
        %v1520 = vadd.f32 %v1387, %v1519
        %v1521 = vpop.f32.mrb[0].mxu0
        %v1522 = vpop.f32.mrb[0].mxu0
        %v1523 = vadd.f32 %v1387, %v1522
        %v1524 = vpop.f32.mrb[0].mxu0
        %1525 = vmatprep.mubr.bf16.mxu0 0
        %1526 = vmatmul.mubr.bf16.gmra.mrb[0].mxu0 %v1428
        %v1527 = vpop.f32.mrb[0].mxu0
        %v1528 = vadd.f32 %v1387, %v1527
        %v1529 = vpop.f32.mrb[0].mxu0
        %v1530 = vpop.f32.mrb[0].mxu0
        %v1531 = vadd.f32 %v1387, %v1530
        %v1532 = vpop.f32.mrb[0].mxu0
        %1533 = vdwg.mxu0
        %vm1534 = vcmp.gt.f32.partialorder %v1472, 0.0
        %vm1535 = vcmp.gt.f32.partialorder %v1475, 0.0
        %vm1536 = vcmp.gt.f32.partialorder %v1480, 0.0
        %vm1537 = vcmp.gt.f32.partialorder %v1483, 0.0
        %vm1538 = vcmp.gt.f32.partialorder %v1488, 0.0
        %vm1539 = vcmp.gt.f32.partialorder %v1491, 0.0
        %vm1540 = vcmp.gt.f32.partialorder %v1496, 0.0
        %vm1541 = vcmp.gt.f32.partialorder %v1499, 0.0
        %vm1542 = vcmp.gt.f32.partialorder %v1504, 0.0
        %vm1543 = vcmp.gt.f32.partialorder %v1507, 0.0
        %vm1544 = vcmp.gt.f32.partialorder %v1512, 0.0
        %vm1545 = vcmp.gt.f32.partialorder %v1515, 0.0
        %vm1546 = vcmp.gt.f32.partialorder %v1520, 0.0
        %vm1547 = vcmp.gt.f32.partialorder %v1523, 0.0
        %vm1548 = vcmp.gt.f32.partialorder %v1528, 0.0
        %vm1549 = vcmp.gt.f32.partialorder %v1531, 0.0
        %v1550 = vmul.f32 %v1472, 0.01
        %v1551 = vmul.f32 %v1475, 0.01
        %v1552 = vmul.f32 %v1480, 0.01
        %v1553 = vmul.f32 %v1483, 0.01
        %v1554 = vmul.f32 %v1488, 0.01
        %v1555 = vmul.f32 %v1491, 0.01
        %v1556 = vmul.f32 %v1496, 0.01
        %v1557 = vmul.f32 %v1499, 0.01
        %v1558 = vmul.f32 %v1504, 0.01
        %v1559 = vmul.f32 %v1507, 0.01
        %v1560 = vmul.f32 %v1512, 0.01
        %v1561 = vmul.f32 %v1515, 0.01
        %v1562 = vmul.f32 %v1520, 0.01
        %v1563 = vmul.f32 %v1523, 0.01
        %v1564 = vmul.f32 %v1528, 0.01
        %v1565 = vmul.f32 %v1531, 0.01
        %v1566 = vsel %vm1534, %v1472, %v1550
        %v1567 = vsel %vm1535, %v1475, %v1551
        %v1568 = vsel %vm1536, %v1480, %v1552
        %v1569 = vsel %vm1537, %v1483, %v1553
        %v1570 = vsel %vm1538, %v1488, %v1554
        %v1571 = vsel %vm1539, %v1491, %v1555
        %v1572 = vsel %vm1540, %v1496, %v1556
        %v1573 = vsel %vm1541, %v1499, %v1557
        %v1574 = vsel %vm1542, %v1504, %v1558
        %v1575 = vsel %vm1543, %v1507, %v1559
        %v1576 = vsel %vm1544, %v1512, %v1560
        %v1577 = vsel %vm1545, %v1515, %v1561
        %v1578 = vsel %vm1546, %v1520, %v1562
        %v1579 = vsel %vm1547, %v1523, %v1563
        %v1580 = vsel %vm1548, %v1528, %v1564
        %v1581 = vsel %vm1549, %v1531, %v1565
        %v1582 = vpack.c.bf16 %v1567, %v1566
        %v1583 = vpack.c.bf16 %v1569, %v1568
        %v1584 = vpack.c.bf16 %v1571, %v1570
        %v1585 = vpack.c.bf16 %v1573, %v1572
        %v1586 = vpack.c.bf16 %v1575, %v1574
        %v1587 = vpack.c.bf16 %v1577, %v1576
        %v1588 = vpack.c.bf16 %v1579, %v1578
        %v1589 = vpack.c.bf16 %v1581, %v1580
        %v1590 = vld [vmem:[#allocation10] sm:$0xf]
        %v1591 = vld [vmem:[#allocation10 + $0x4] sm:$0xf]
        %v1592 = vld [vmem:[#allocation10 + $0x8] sm:$0xf]
        %v1593 = vld [vmem:[#allocation10 + $0xc] sm:$0xf]
        %v1594 = vld [vmem:[#allocation10 + $0x10] sm:$0xf]
        %v1595 = vld [vmem:[#allocation10 + $0x14] sm:$0xf]
        %v1596 = vld [vmem:[#allocation10 + $0x18] sm:$0xf]
        %v1597 = vld [vmem:[#allocation10 + $0x1c] sm:$0xf]
        %v1598 = vld [vmem:[#allocation10 + $0x20] sm:$0xf]
        %v1599 = vld [vmem:[#allocation10 + $0x24] sm:$0xf]
        %v1600 = vld [vmem:[#allocation10 + $0x28] sm:$0xf]
        %v1601 = vld [vmem:[#allocation10 + $0x2c] sm:$0xf]
        %v1602 = vld [vmem:[#allocation10 + $0x30] sm:$0xf]
        %v1603 = vld [vmem:[#allocation10 + $0x34] sm:$0xf]
        %v1604 = vld [vmem:[#allocation10 + $0x38] sm:$0xf]
        %v1605 = vld [vmem:[#allocation10 + $0x3c] sm:$0xf]
        %v1606 = vld [vmem:[%s2] sm:$0xff]
        %v1607 = vld [vmem:[%s2 + $0x8] sm:$0xff]
        %v1608 = vld [vmem:[%s2 + $0x10] sm:$0xff]
        %v1609 = vld [vmem:[%s2 + $0x18] sm:$0xff]
        %v1610 = vld [vmem:[%s2 + $0x20] sm:$0xff]
        %v1611 = vld [vmem:[%s2 + $0x28] sm:$0xff]
        %v1612 = vld [vmem:[%s2 + $0x30] sm:$0xff]
        %v1613 = vld [vmem:[%s2 + $0x38] sm:$0xff]
        %v1614 = vld [vmem:[%s2 + $0x40] sm:$0xff]
        %v1615 = vld [vmem:[%s2 + $0x48] sm:$0xff]
        %v1616 = vld [vmem:[%s2 + $0x50] sm:$0xff]
        %v1617 = vld [vmem:[%s2 + $0x58] sm:$0xff]
        %v1618 = vld [vmem:[%s2 + $0x60] sm:$0xff]
        %v1619 = vld [vmem:[%s2 + $0x68] sm:$0xff]
        %v1620 = vld [vmem:[%s2 + $0x70] sm:$0xff]
        %v1621 = vld [vmem:[%s2 + $0x78] sm:$0xff]
        %v1638 = vunpack.c.l.b16 %v1590
        %v1639 = vunpack.c.l.b16 %v1591
        %v1640 = vunpack.c.l.b16 %v1592
        %v1641 = vunpack.c.l.b16 %v1593
        %v1642 = vunpack.c.l.b16 %v1594
        %v1643 = vunpack.c.l.b16 %v1595
        %v1644 = vunpack.c.l.b16 %v1596
        %v1645 = vunpack.c.l.b16 %v1597
        %v1646 = vunpack.c.l.b16 %v1598
        %v1647 = vunpack.c.l.b16 %v1599
        %v1648 = vunpack.c.l.b16 %v1600
        %v1649 = vunpack.c.l.b16 %v1601
        %v1650 = vunpack.c.l.b16 %v1602
        %v1651 = vunpack.c.l.b16 %v1603
        %v1652 = vunpack.c.l.b16 %v1604
        %v1653 = vunpack.c.l.b16 %v1605
        %v1654 = vpack.c.b16 %v1639, %v1638
        %v1655 = vpack.c.b16 %v1641, %v1640
        %v1656 = vpack.c.b16 %v1643, %v1642
        %v1657 = vpack.c.b16 %v1645, %v1644
        %v1658 = vpack.c.b16 %v1647, %v1646
        %v1659 = vpack.c.b16 %v1649, %v1648
        %v1660 = vpack.c.b16 %v1651, %v1650
        %v1661 = vpack.c.b16 %v1653, %v1652
        %1670 = vmatprep.subr.bf16.mxu0 0
        %1671 = vmatpush1.bf16.msra.mxu0 %v1654
        %1672 = vmatprep.subr.bf16.mxu0 0
        %1673 = vmatpush1.bf16.msra.mxu0 %v1655
        %1674 = vmatprep.subr.bf16.mxu0 0
        %1675 = vmatpush1.bf16.msra.mxu0 %v1656
        %1676 = vmatprep.subr.bf16.mxu0 0
        %1677 = vmatpush1.bf16.msra.mxu0 %v1657
        %1678 = vmatprep.subr.bf16.mxu0 0
        %1679 = vmatpush1.bf16.msra.mxu0 %v1658
        %1680 = vmatprep.subr.bf16.mxu0 0
        %1681 = vmatpush1.bf16.msra.mxu0 %v1659
        %1682 = vmatprep.subr.bf16.mxu0 0
        %1683 = vmatpush1.bf16.msra.mxu0 %v1660
        %1684 = vmatprep.subr.bf16.mxu0 0
        %1685 = vmatpush1.bf16.msra.mxu0 %v1661
        %1686 = vmatprep.subr.bf16.mxu0 0
        %1687 = vmatpush1.bf16.msra.mxu0 0
        %1688 = vmatprep.subr.bf16.mxu0 0
        %1689 = vmatpush1.bf16.msra.mxu0 0
        %1690 = vmatprep.subr.bf16.mxu0 0
        %1691 = vmatpush1.bf16.msra.mxu0 0
        %1692 = vmatprep.subr.bf16.mxu0 0
        %1693 = vmatpush1.bf16.msra.mxu0 0
        %1694 = vmatprep.subr.bf16.mxu0 0
        %1695 = vmatpush1.bf16.msra.mxu0 0
        %1696 = vmatprep.subr.bf16.mxu0 0
        %1697 = vmatpush1.bf16.msra.mxu0 0
        %1698 = vmatprep.subr.bf16.mxu0 0
        %1699 = vmatpush1.bf16.msra.mxu0 0
        %1700 = vmatprep.subr.bf16.mxu0 0
        %1701 = vmatpush1.bf16.msra.mxu0 0
        %1702 = vmatprep.mubr.bf16.mxu0 0
        %1703 = vmatmul.mubr.bf16.gmra.mrb[0].mxu0 %v1582
        %v1704 = vpop.f32.mrb[0].mxu0
        %v1705 = vadd.f32 %v1606, %v1704
        %v1706 = vpop.f32.mrb[0].mxu0
        %v1707 = vpop.f32.mrb[0].mxu0
        %v1708 = vadd.f32 %v1607, %v1707
        %v1709 = vpop.f32.mrb[0].mxu0
        %1710 = vmatprep.mubr.bf16.mxu0 0
        %1711 = vmatmul.mubr.bf16.gmra.mrb[0].mxu0 %v1583
        %v1712 = vpop.f32.mrb[0].mxu0
        %v1713 = vadd.f32 %v1608, %v1712
        %v1714 = vpop.f32.mrb[0].mxu0
        %v1715 = vpop.f32.mrb[0].mxu0
        %v1716 = vadd.f32 %v1609, %v1715
        %v1717 = vpop.f32.mrb[0].mxu0
        %1718 = vmatprep.mubr.bf16.mxu0 0
        %1719 = vmatmul.mubr.bf16.gmra.mrb[0].mxu0 %v1584
        %v1720 = vpop.f32.mrb[0].mxu0
        %v1721 = vadd.f32 %v1610, %v1720
        %v1722 = vpop.f32.mrb[0].mxu0
        %v1723 = vpop.f32.mrb[0].mxu0
        %v1724 = vadd.f32 %v1611, %v1723
        %v1725 = vpop.f32.mrb[0].mxu0
        %1726 = vmatprep.mubr.bf16.mxu0 0
        %1727 = vmatmul.mubr.bf16.gmra.mrb[0].mxu0 %v1585
        %v1728 = vpop.f32.mrb[0].mxu0
        %v1729 = vadd.f32 %v1612, %v1728
        %v1730 = vpop.f32.mrb[0].mxu0
        %v1731 = vpop.f32.mrb[0].mxu0
        %v1732 = vadd.f32 %v1613, %v1731
        %v1733 = vpop.f32.mrb[0].mxu0
        %1734 = vmatprep.mubr.bf16.mxu0 0
        %1735 = vmatmul.mubr.bf16.gmra.mrb[0].mxu0 %v1586
        %v1736 = vpop.f32.mrb[0].mxu0
        %v1737 = vadd.f32 %v1614, %v1736
        %v1738 = vpop.f32.mrb[0].mxu0
        %v1739 = vpop.f32.mrb[0].mxu0
        %v1740 = vadd.f32 %v1615, %v1739
        %v1741 = vpop.f32.mrb[0].mxu0
        %1742 = vmatprep.mubr.bf16.mxu0 0
        %1743 = vmatmul.mubr.bf16.gmra.mrb[0].mxu0 %v1587
        %v1744 = vpop.f32.mrb[0].mxu0
        %v1745 = vadd.f32 %v1616, %v1744
        %v1746 = vpop.f32.mrb[0].mxu0
        %v1747 = vpop.f32.mrb[0].mxu0
        %v1748 = vadd.f32 %v1617, %v1747
        %v1749 = vpop.f32.mrb[0].mxu0
        %1750 = vmatprep.mubr.bf16.mxu0 0
        %1751 = vmatmul.mubr.bf16.gmra.mrb[0].mxu0 %v1588
        %v1752 = vpop.f32.mrb[0].mxu0
        %v1753 = vadd.f32 %v1618, %v1752
        %v1754 = vpop.f32.mrb[0].mxu0
        %v1755 = vpop.f32.mrb[0].mxu0
        %v1756 = vadd.f32 %v1619, %v1755
        %v1757 = vpop.f32.mrb[0].mxu0
        %1758 = vmatprep.mubr.bf16.mxu0 0
        %1759 = vmatmul.mubr.bf16.gmra.mrb[0].mxu0 %v1589
        %v1760 = vpop.f32.mrb[0].mxu0
        %v1761 = vadd.f32 %v1620, %v1760
        %v1762 = vpop.f32.mrb[0].mxu0
        %v1763 = vpop.f32.mrb[0].mxu0
        %v1764 = vadd.f32 %v1621, %v1763
        %v1765 = vpop.f32.mrb[0].mxu0
        %1766 = vdwg.mxu0
        %v1767 = vpack.c.bf16 %v1708, %v1705
        %v1768 = vpack.c.bf16 %v1716, %v1713
        %v1769 = vpack.c.bf16 %v1724, %v1721
        %v1770 = vpack.c.bf16 %v1732, %v1729
        %v1771 = vpack.c.bf16 %v1740, %v1737
        %v1772 = vpack.c.bf16 %v1748, %v1745
        %v1773 = vpack.c.bf16 %v1756, %v1753
        %v1774 = vpack.c.bf16 %v1764, %v1761
        %v1775 = vld [vmem:[%s12] sm:$0xf]
        %v1776 = vld [vmem:[%s12 + $0x4] sm:$0xf]
        %v1777 = vld [vmem:[%s12 + $0x8] sm:$0xf]
        %v1778 = vld [vmem:[%s12 + $0xc] sm:$0xf]
        %v1779 = vld [vmem:[%s12 + $0x10] sm:$0xf]
        %v1780 = vld [vmem:[%s12 + $0x14] sm:$0xf]
        %v1781 = vld [vmem:[%s12 + $0x18] sm:$0xf]
        %v1782 = vld [vmem:[%s12 + $0x1c] sm:$0xf]
        %v1783 = vld [vmem:[%s12 + $0x20] sm:$0xf]
        %v1784 = vld [vmem:[%s12 + $0x24] sm:$0xf]
        %v1785 = vld [vmem:[%s12 + $0x28] sm:$0xf]
        %v1786 = vld [vmem:[%s12 + $0x2c] sm:$0xf]
        %v1787 = vld [vmem:[%s12 + $0x30] sm:$0xf]
        %v1788 = vld [vmem:[%s12 + $0x34] sm:$0xf]
        %v1789 = vld [vmem:[%s12 + $0x38] sm:$0xf]
        %v1790 = vld [vmem:[%s12 + $0x3c] sm:$0xf]
        %v1807 = vunpack.c.l.b16 %v1775
        %v1808 = vunpack.c.l.b16 %v1776
        %v1809 = vunpack.c.l.b16 %v1777
        %v1810 = vunpack.c.l.b16 %v1778
        %v1811 = vunpack.c.l.b16 %v1779
        %v1812 = vunpack.c.l.b16 %v1780
        %v1813 = vunpack.c.l.b16 %v1781
        %v1814 = vunpack.c.l.b16 %v1782
        %v1815 = vunpack.c.l.b16 %v1783
        %v1816 = vunpack.c.l.b16 %v1784
        %v1817 = vunpack.c.l.b16 %v1785
        %v1818 = vunpack.c.l.b16 %v1786
        %v1819 = vunpack.c.l.b16 %v1787
        %v1820 = vunpack.c.l.b16 %v1788
        %v1821 = vunpack.c.l.b16 %v1789
        %v1822 = vunpack.c.l.b16 %v1790
        %v1823 = vpack.c.b16 %v1808, %v1807
        %v1824 = vpack.c.b16 %v1810, %v1809
        %v1825 = vpack.c.b16 %v1812, %v1811
        %v1826 = vpack.c.b16 %v1814, %v1813
        %v1827 = vpack.c.b16 %v1816, %v1815
        %v1828 = vpack.c.b16 %v1818, %v1817
        %v1829 = vpack.c.b16 %v1820, %v1819
        %v1830 = vpack.c.b16 %v1822, %v1821
        %1839 = vmatprep.subr.bf16.mxu0 0
        %1840 = vmatpush1.bf16.msra.mxu0 %v1823
        %1841 = vmatprep.subr.bf16.mxu0 0
        %1842 = vmatpush1.bf16.msra.mxu0 %v1824
        %1843 = vmatprep.subr.bf16.mxu0 0
        %1844 = vmatpush1.bf16.msra.mxu0 %v1825
        %1845 = vmatprep.subr.bf16.mxu0 0
        %1846 = vmatpush1.bf16.msra.mxu0 %v1826
        %1847 = vmatprep.subr.bf16.mxu0 0
        %1848 = vmatpush1.bf16.msra.mxu0 %v1827
        %1849 = vmatprep.subr.bf16.mxu0 0
        %1850 = vmatpush1.bf16.msra.mxu0 %v1828
        %1851 = vmatprep.subr.bf16.mxu0 0
        %1852 = vmatpush1.bf16.msra.mxu0 %v1829
        %1853 = vmatprep.subr.bf16.mxu0 0
        %1854 = vmatpush1.bf16.msra.mxu0 %v1830
        %1855 = vmatprep.subr.bf16.mxu0 0
        %1856 = vmatpush1.bf16.msra.mxu0 0
        %1857 = vmatprep.subr.bf16.mxu0 0
        %1858 = vmatpush1.bf16.msra.mxu0 0
        %1859 = vmatprep.subr.bf16.mxu0 0
        %1860 = vmatpush1.bf16.msra.mxu0 0
        %1861 = vmatprep.subr.bf16.mxu0 0
        %1862 = vmatpush1.bf16.msra.mxu0 0
        %1863 = vmatprep.subr.bf16.mxu0 0
        %1864 = vmatpush1.bf16.msra.mxu0 0
        %1865 = vmatprep.subr.bf16.mxu0 0
        %1866 = vmatpush1.bf16.msra.mxu0 0
        %1867 = vmatprep.subr.bf16.mxu0 0
        %1868 = vmatpush1.bf16.msra.mxu0 0
        %1869 = vmatprep.subr.bf16.mxu0 0
        %1870 = vmatpush1.bf16.msra.mxu0 0
        %1871 = vmatprep.mubr.bf16.mxu0 0
        %1872 = vmatmul.mubr.bf16.gmra.mrb[0].mxu0 %v1767
        %v1873 = vpop.f32.mrb[0].mxu0
        %v1874 = vadd.f32 0.0, %v1873
        %v1875 = vpop.f32.mrb[0].mxu0
        %v1876 = vpop.f32.mrb[0].mxu0
        %v1877 = vadd.f32 0.0, %v1876
        %v1878 = vpop.f32.mrb[0].mxu0
        %1879 = vmatprep.mubr.bf16.mxu0 0
        %1880 = vmatmul.mubr.bf16.gmra.mrb[0].mxu0 %v1768
        %v1881 = vpop.f32.mrb[0].mxu0
        %v1882 = vadd.f32 0.0, %v1881
        %v1883 = vpop.f32.mrb[0].mxu0
        %v1884 = vpop.f32.mrb[0].mxu0
        %v1885 = vadd.f32 0.0, %v1884
        %v1886 = vpop.f32.mrb[0].mxu0
        %1887 = vmatprep.mubr.bf16.mxu0 0
        %1888 = vmatmul.mubr.bf16.gmra.mrb[0].mxu0 %v1769
        %v1889 = vpop.f32.mrb[0].mxu0
        %v1890 = vadd.f32 0.0, %v1889
        %v1891 = vpop.f32.mrb[0].mxu0
        %v1892 = vpop.f32.mrb[0].mxu0
        %v1893 = vadd.f32 0.0, %v1892
        %v1894 = vpop.f32.mrb[0].mxu0
        %1895 = vmatprep.mubr.bf16.mxu0 0
        %1896 = vmatmul.mubr.bf16.gmra.mrb[0].mxu0 %v1770
        %v1897 = vpop.f32.mrb[0].mxu0
        %v1898 = vadd.f32 0.0, %v1897
        %v1899 = vpop.f32.mrb[0].mxu0
        %v1900 = vpop.f32.mrb[0].mxu0
        %v1901 = vadd.f32 0.0, %v1900
        %v1902 = vpop.f32.mrb[0].mxu0
        %1903 = vmatprep.mubr.bf16.mxu0 0
        %1904 = vmatmul.mubr.bf16.gmra.mrb[0].mxu0 %v1771
        %v1905 = vpop.f32.mrb[0].mxu0
        %v1906 = vadd.f32 0.0, %v1905
        %v1907 = vpop.f32.mrb[0].mxu0
        %v1908 = vpop.f32.mrb[0].mxu0
        %v1909 = vadd.f32 0.0, %v1908
        %v1910 = vpop.f32.mrb[0].mxu0
        %1911 = vmatprep.mubr.bf16.mxu0 0
        %1912 = vmatmul.mubr.bf16.gmra.mrb[0].mxu0 %v1772
        %v1913 = vpop.f32.mrb[0].mxu0
        %v1914 = vadd.f32 0.0, %v1913
        %v1915 = vpop.f32.mrb[0].mxu0
        %v1916 = vpop.f32.mrb[0].mxu0
        %v1917 = vadd.f32 0.0, %v1916
        %v1918 = vpop.f32.mrb[0].mxu0
        %1919 = vmatprep.mubr.bf16.mxu0 0
        %1920 = vmatmul.mubr.bf16.gmra.mrb[0].mxu0 %v1773
        %v1921 = vpop.f32.mrb[0].mxu0
        %v1922 = vadd.f32 0.0, %v1921
        %v1923 = vpop.f32.mrb[0].mxu0
        %v1924 = vpop.f32.mrb[0].mxu0
        %v1925 = vadd.f32 0.0, %v1924
        %v1926 = vpop.f32.mrb[0].mxu0
        %1927 = vmatprep.mubr.bf16.mxu0 0
        %1928 = vmatmul.mubr.bf16.gmra.mrb[0].mxu0 %v1774
        %v1929 = vpop.f32.mrb[0].mxu0
        %v1930 = vadd.f32 0.0, %v1929
        %v1931 = vpop.f32.mrb[0].mxu0
        %v1932 = vpop.f32.mrb[0].mxu0
        %v1933 = vadd.f32 0.0, %v1932
        %v1934 = vpop.f32.mrb[0].mxu0
        %1935 = vdwg.mxu0
        %v1936 = vpack.c.bf16 %v1877, %v1874
        %v1937 = vpack.c.bf16 %v1885, %v1882
        %v1938 = vpack.c.bf16 %v1893, %v1890
        %v1939 = vpack.c.bf16 %v1901, %v1898
        %v1940 = vpack.c.bf16 %v1909, %v1906
        %v1941 = vpack.c.bf16 %v1917, %v1914
        %v1942 = vpack.c.bf16 %v1925, %v1922
        %v1943 = vpack.c.bf16 %v1933, %v1930
        %v1944 = vld [vmem:[#allocation11] sm:$0x1]
        %v1946 = vlaneseq
        %v1947 = vshrl.u32 %v1946, 7
        %v1948 = vsub.s32 0, %v1947
        %v1949 = vrot.slane %v1944, %v1948
        %1951 = vmatprep.subr.bf16.mxu0 0
        %1952 = vmatpush1.bf16.msra.mxu0 %v1936
        %1953 = vmatprep.subr.bf16.mxu0 0
        %1954 = vmatpush1.bf16.msra.mxu0 %v1937
        %1955 = vmatprep.subr.bf16.mxu0 0
        %1956 = vmatpush1.bf16.msra.mxu0 %v1938
        %1957 = vmatprep.subr.bf16.mxu0 0
        %1958 = vmatpush1.bf16.msra.mxu0 %v1939
        %1959 = vmatprep.subr.bf16.mxu0 0
        %1960 = vmatpush1.bf16.msra.mxu0 %v1940
        %1961 = vmatprep.subr.bf16.mxu0 0
        %1962 = vmatpush1.bf16.msra.mxu0 %v1941
        %1963 = vmatprep.subr.bf16.mxu0 0
        %1964 = vmatpush1.bf16.msra.mxu0 %v1942
        %1965 = vmatprep.subr.bf16.mxu0 0
        %1966 = vmatpush1.bf16.msra.mxu0 %v1943
        %1967 = vmatprep.subr.bf16.mxu0 0
        %1968 = vmatpush1.bf16.msra.mxu0 0
        %1969 = vmatprep.subr.bf16.mxu0 0
        %1970 = vmatpush1.bf16.msra.mxu0 0
        %1971 = vmatprep.subr.bf16.mxu0 0
        %1972 = vmatpush1.bf16.msra.mxu0 0
        %1973 = vmatprep.subr.bf16.mxu0 0
        %1974 = vmatpush1.bf16.msra.mxu0 0
        %1975 = vmatprep.subr.bf16.mxu0 0
        %1976 = vmatpush1.bf16.msra.mxu0 0
        %1977 = vmatprep.subr.bf16.mxu0 0
        %1978 = vmatpush1.bf16.msra.mxu0 0
        %1979 = vmatprep.subr.bf16.mxu0 0
        %1980 = vmatpush1.bf16.msra.mxu0 0
        %1981 = vmatprep.subr.bf16.mxu0 0
        %1982 = vmatpush1.bf16.msra.mxu0 0
        %1983 = vmatprep.mubr.bf16.mxu0 0
        %1984 = vmatmul.mubr.bf16.gmra.mrb[0].mxu0 %v1421
        %v1985 = vpop.f32.mrb[0].mxu0
        %v1986 = vadd.f32 %v1949, %v1985
        %v1987 = vpop.f32.mrb[0].mxu0
        %v1988 = vpop.f32.mrb[0].mxu0
        %v1989 = vadd.f32 %v1949, %v1988
        %v1990 = vpop.f32.mrb[0].mxu0
        %1991 = vmatprep.mubr.bf16.mxu0 0
        %1992 = vmatmul.mubr.bf16.gmra.mrb[0].mxu0 %v1422
        %v1993 = vpop.f32.mrb[0].mxu0
        %v1994 = vadd.f32 %v1949, %v1993
        %v1995 = vpop.f32.mrb[0].mxu0
        %v1996 = vpop.f32.mrb[0].mxu0
        %v1997 = vadd.f32 %v1949, %v1996
        %v1998 = vpop.f32.mrb[0].mxu0
        %1999 = vmatprep.mubr.bf16.mxu0 0
        %2000 = vmatmul.mubr.bf16.gmra.mrb[0].mxu0 %v1423
        %v2001 = vpop.f32.mrb[0].mxu0
        %v2002 = vadd.f32 %v1949, %v2001
        %v2003 = vpop.f32.mrb[0].mxu0
        %v2004 = vpop.f32.mrb[0].mxu0
        %v2005 = vadd.f32 %v1949, %v2004
        %v2006 = vpop.f32.mrb[0].mxu0
        %2007 = vmatprep.mubr.bf16.mxu0 0
        %2008 = vmatmul.mubr.bf16.gmra.mrb[0].mxu0 %v1424
        %v2009 = vpop.f32.mrb[0].mxu0
        %v2010 = vadd.f32 %v1949, %v2009
        %v2011 = vpop.f32.mrb[0].mxu0
        %v2012 = vpop.f32.mrb[0].mxu0
        %v2013 = vadd.f32 %v1949, %v2012
        %v2014 = vpop.f32.mrb[0].mxu0
        %2015 = vmatprep.mubr.bf16.mxu0 0
        %2016 = vmatmul.mubr.bf16.gmra.mrb[0].mxu0 %v1425
        %v2017 = vpop.f32.mrb[0].mxu0
        %v2018 = vadd.f32 %v1949, %v2017
        %v2019 = vpop.f32.mrb[0].mxu0
        %v2020 = vpop.f32.mrb[0].mxu0
        %v2021 = vadd.f32 %v1949, %v2020
        %v2022 = vpop.f32.mrb[0].mxu0
        %2023 = vmatprep.mubr.bf16.mxu0 0
        %2024 = vmatmul.mubr.bf16.gmra.mrb[0].mxu0 %v1426
        %v2025 = vpop.f32.mrb[0].mxu0
        %v2026 = vadd.f32 %v1949, %v2025
        %v2027 = vpop.f32.mrb[0].mxu0
        %v2028 = vpop.f32.mrb[0].mxu0
        %v2029 = vadd.f32 %v1949, %v2028
        %v2030 = vpop.f32.mrb[0].mxu0
        %2031 = vmatprep.mubr.bf16.mxu0 0
        %2032 = vmatmul.mubr.bf16.gmra.mrb[0].mxu0 %v1427
        %v2033 = vpop.f32.mrb[0].mxu0
        %v2034 = vadd.f32 %v1949, %v2033
        %v2035 = vpop.f32.mrb[0].mxu0
        %v2036 = vpop.f32.mrb[0].mxu0
        %v2037 = vadd.f32 %v1949, %v2036
        %v2038 = vpop.f32.mrb[0].mxu0
        %2039 = vmatprep.mubr.bf16.mxu0 0
        %2040 = vmatmul.mubr.bf16.gmra.mrb[0].mxu0 %v1428
        %v2041 = vpop.f32.mrb[0].mxu0
        %v2042 = vadd.f32 %v1949, %v2041
        %v2043 = vpop.f32.mrb[0].mxu0
        %v2044 = vpop.f32.mrb[0].mxu0
        %v2045 = vadd.f32 %v1949, %v2044
        %v2046 = vpop.f32.mrb[0].mxu0
        %2047 = vdwg.mxu0
        %vm2048 = vcmp.gt.f32.partialorder %v1986, 0.0
        %vm2049 = vcmp.gt.f32.partialorder %v1989, 0.0
        %vm2050 = vcmp.gt.f32.partialorder %v1994, 0.0
        %vm2051 = vcmp.gt.f32.partialorder %v1997, 0.0
        %vm2052 = vcmp.gt.f32.partialorder %v2002, 0.0
        %vm2053 = vcmp.gt.f32.partialorder %v2005, 0.0
        %vm2054 = vcmp.gt.f32.partialorder %v2010, 0.0
        %vm2055 = vcmp.gt.f32.partialorder %v2013, 0.0
        %vm2056 = vcmp.gt.f32.partialorder %v2018, 0.0
        %vm2057 = vcmp.gt.f32.partialorder %v2021, 0.0
        %vm2058 = vcmp.gt.f32.partialorder %v2026, 0.0
        %vm2059 = vcmp.gt.f32.partialorder %v2029, 0.0
        %vm2060 = vcmp.gt.f32.partialorder %v2034, 0.0
        %vm2061 = vcmp.gt.f32.partialorder %v2037, 0.0
        %vm2062 = vcmp.gt.f32.partialorder %v2042, 0.0
        %vm2063 = vcmp.gt.f32.partialorder %v2045, 0.0
        %v2064 = vmul.f32 %v1986, 0.01
        %v2065 = vmul.f32 %v1989, 0.01
        %v2066 = vmul.f32 %v1994, 0.01
        %v2067 = vmul.f32 %v1997, 0.01
        %v2068 = vmul.f32 %v2002, 0.01
        %v2069 = vmul.f32 %v2005, 0.01
        %v2070 = vmul.f32 %v2010, 0.01
        %v2071 = vmul.f32 %v2013, 0.01
        %v2072 = vmul.f32 %v2018, 0.01
        %v2073 = vmul.f32 %v2021, 0.01
        %v2074 = vmul.f32 %v2026, 0.01
        %v2075 = vmul.f32 %v2029, 0.01
        %v2076 = vmul.f32 %v2034, 0.01
        %v2077 = vmul.f32 %v2037, 0.01
        %v2078 = vmul.f32 %v2042, 0.01
        %v2079 = vmul.f32 %v2045, 0.01
        %v2080 = vsel %vm2048, %v1986, %v2064
        %v2081 = vsel %vm2049, %v1989, %v2065
        %v2082 = vsel %vm2050, %v1994, %v2066
        %v2083 = vsel %vm2051, %v1997, %v2067
        %v2084 = vsel %vm2052, %v2002, %v2068
        %v2085 = vsel %vm2053, %v2005, %v2069
        %v2086 = vsel %vm2054, %v2010, %v2070
        %v2087 = vsel %vm2055, %v2013, %v2071
        %v2088 = vsel %vm2056, %v2018, %v2072
        %v2089 = vsel %vm2057, %v2021, %v2073
        %v2090 = vsel %vm2058, %v2026, %v2074
        %v2091 = vsel %vm2059, %v2029, %v2075
        %v2092 = vsel %vm2060, %v2034, %v2076
        %v2093 = vsel %vm2061, %v2037, %v2077
        %v2094 = vsel %vm2062, %v2042, %v2078
        %v2095 = vsel %vm2063, %v2045, %v2079
        %v2096 = vpack.c.bf16 %v2081, %v2080
        %v2097 = vpack.c.bf16 %v2083, %v2082
        %v2098 = vpack.c.bf16 %v2085, %v2084
        %v2099 = vpack.c.bf16 %v2087, %v2086
        %v2100 = vpack.c.bf16 %v2089, %v2088
        %v2101 = vpack.c.bf16 %v2091, %v2090
        %v2102 = vpack.c.bf16 %v2093, %v2092
        %v2103 = vpack.c.bf16 %v2095, %v2094
        %v2104 = vld [vmem:[#allocation13] sm:$0xf]
        %v2105 = vld [vmem:[#allocation13 + $0x4] sm:$0xf]
        %v2106 = vld [vmem:[#allocation13 + $0x8] sm:$0xf]
        %v2107 = vld [vmem:[#allocation13 + $0xc] sm:$0xf]
        %v2108 = vld [vmem:[#allocation13 + $0x10] sm:$0xf]
        %v2109 = vld [vmem:[#allocation13 + $0x14] sm:$0xf]
        %v2110 = vld [vmem:[#allocation13 + $0x18] sm:$0xf]
        %v2111 = vld [vmem:[#allocation13 + $0x1c] sm:$0xf]
        %v2112 = vld [vmem:[#allocation13 + $0x20] sm:$0xf]
        %v2113 = vld [vmem:[#allocation13 + $0x24] sm:$0xf]
        %v2114 = vld [vmem:[#allocation13 + $0x28] sm:$0xf]
        %v2115 = vld [vmem:[#allocation13 + $0x2c] sm:$0xf]
        %v2116 = vld [vmem:[#allocation13 + $0x30] sm:$0xf]
        %v2117 = vld [vmem:[#allocation13 + $0x34] sm:$0xf]
        %v2118 = vld [vmem:[#allocation13 + $0x38] sm:$0xf]
        %v2119 = vld [vmem:[#allocation13 + $0x3c] sm:$0xf]
        %v2120 = vld [vmem:[#allocation2] sm:$0xff]
        %v2121 = vld [vmem:[#allocation2 + $0x8] sm:$0xff]
        %v2122 = vld [vmem:[#allocation2 + $0x10] sm:$0xff]
        %v2123 = vld [vmem:[#allocation2 + $0x18] sm:$0xff]
        %v2124 = vld [vmem:[#allocation2 + $0x20] sm:$0xff]
        %v2125 = vld [vmem:[#allocation2 + $0x28] sm:$0xff]
        %v2126 = vld [vmem:[#allocation2 + $0x30] sm:$0xff]
        %v2127 = vld [vmem:[#allocation2 + $0x38] sm:$0xff]
        %v2128 = vld [vmem:[#allocation2 + $0x40] sm:$0xff]
        %v2129 = vld [vmem:[#allocation2 + $0x48] sm:$0xff]
        %v2130 = vld [vmem:[#allocation2 + $0x50] sm:$0xff]
        %v2131 = vld [vmem:[#allocation2 + $0x58] sm:$0xff]
        %v2132 = vld [vmem:[#allocation2 + $0x60] sm:$0xff]
        %v2133 = vld [vmem:[#allocation2 + $0x68] sm:$0xff]
        %v2134 = vld [vmem:[#allocation2 + $0x70] sm:$0xff]
        %v2135 = vld [vmem:[#allocation2 + $0x78] sm:$0xff]
        %v2152 = vunpack.c.l.b16 %v2104
        %v2153 = vunpack.c.l.b16 %v2105
        %v2154 = vunpack.c.l.b16 %v2106
        %v2155 = vunpack.c.l.b16 %v2107
        %v2156 = vunpack.c.l.b16 %v2108
        %v2157 = vunpack.c.l.b16 %v2109
        %v2158 = vunpack.c.l.b16 %v2110
        %v2159 = vunpack.c.l.b16 %v2111
        %v2160 = vunpack.c.l.b16 %v2112
        %v2161 = vunpack.c.l.b16 %v2113
        %v2162 = vunpack.c.l.b16 %v2114
        %v2163 = vunpack.c.l.b16 %v2115
        %v2164 = vunpack.c.l.b16 %v2116
        %v2165 = vunpack.c.l.b16 %v2117
        %v2166 = vunpack.c.l.b16 %v2118
        %v2167 = vunpack.c.l.b16 %v2119
        %v2168 = vpack.c.b16 %v2153, %v2152
        %v2169 = vpack.c.b16 %v2155, %v2154
        %v2170 = vpack.c.b16 %v2157, %v2156
        %v2171 = vpack.c.b16 %v2159, %v2158
        %v2172 = vpack.c.b16 %v2161, %v2160
        %v2173 = vpack.c.b16 %v2163, %v2162
        %v2174 = vpack.c.b16 %v2165, %v2164
        %v2175 = vpack.c.b16 %v2167, %v2166
        %2184 = vmatprep.subr.bf16.mxu0 0
        %2185 = vmatpush1.bf16.msra.mxu0 %v2168
        %2186 = vmatprep.subr.bf16.mxu0 0
        %2187 = vmatpush1.bf16.msra.mxu0 %v2169
        %2188 = vmatprep.subr.bf16.mxu0 0
        %2189 = vmatpush1.bf16.msra.mxu0 %v2170
        %2190 = vmatprep.subr.bf16.mxu0 0
        %2191 = vmatpush1.bf16.msra.mxu0 %v2171
        %2192 = vmatprep.subr.bf16.mxu0 0
        %2193 = vmatpush1.bf16.msra.mxu0 %v2172
        %2194 = vmatprep.subr.bf16.mxu0 0
        %2195 = vmatpush1.bf16.msra.mxu0 %v2173
        %2196 = vmatprep.subr.bf16.mxu0 0
        %2197 = vmatpush1.bf16.msra.mxu0 %v2174
        %2198 = vmatprep.subr.bf16.mxu0 0
        %2199 = vmatpush1.bf16.msra.mxu0 %v2175
        %2200 = vmatprep.subr.bf16.mxu0 0
        %2201 = vmatpush1.bf16.msra.mxu0 0
        %2202 = vmatprep.subr.bf16.mxu0 0
        %2203 = vmatpush1.bf16.msra.mxu0 0
        %2204 = vmatprep.subr.bf16.mxu0 0
        %2205 = vmatpush1.bf16.msra.mxu0 0
        %2206 = vmatprep.subr.bf16.mxu0 0
        %2207 = vmatpush1.bf16.msra.mxu0 0
        %2208 = vmatprep.subr.bf16.mxu0 0
        %2209 = vmatpush1.bf16.msra.mxu0 0
        %2210 = vmatprep.subr.bf16.mxu0 0
        %2211 = vmatpush1.bf16.msra.mxu0 0
        %2212 = vmatprep.subr.bf16.mxu0 0
        %2213 = vmatpush1.bf16.msra.mxu0 0
        %2214 = vmatprep.subr.bf16.mxu0 0
        %2215 = vmatpush1.bf16.msra.mxu0 0
        %2216 = vmatprep.mubr.bf16.mxu0 0
        %2217 = vmatmul.mubr.bf16.gmra.mrb[0].mxu0 %v2096
        %v2218 = vpop.f32.mrb[0].mxu0
        %v2219 = vadd.f32 %v2120, %v2218
        %v2220 = vpop.f32.mrb[0].mxu0
        %v2221 = vpop.f32.mrb[0].mxu0
        %v2222 = vadd.f32 %v2121, %v2221
        %v2223 = vpop.f32.mrb[0].mxu0
        %2224 = vmatprep.mubr.bf16.mxu0 0
        %2225 = vmatmul.mubr.bf16.gmra.mrb[0].mxu0 %v2097
        %v2226 = vpop.f32.mrb[0].mxu0
        %v2227 = vadd.f32 %v2122, %v2226
        %v2228 = vpop.f32.mrb[0].mxu0
        %v2229 = vpop.f32.mrb[0].mxu0
        %v2230 = vadd.f32 %v2123, %v2229
        %v2231 = vpop.f32.mrb[0].mxu0
        %2232 = vmatprep.mubr.bf16.mxu0 0
        %2233 = vmatmul.mubr.bf16.gmra.mrb[0].mxu0 %v2098
        %v2234 = vpop.f32.mrb[0].mxu0
        %v2235 = vadd.f32 %v2124, %v2234
        %v2236 = vpop.f32.mrb[0].mxu0
        %v2237 = vpop.f32.mrb[0].mxu0
        %v2238 = vadd.f32 %v2125, %v2237
        %v2239 = vpop.f32.mrb[0].mxu0
        %2240 = vmatprep.mubr.bf16.mxu0 0
        %2241 = vmatmul.mubr.bf16.gmra.mrb[0].mxu0 %v2099
        %v2242 = vpop.f32.mrb[0].mxu0
        %v2243 = vadd.f32 %v2126, %v2242
        %v2244 = vpop.f32.mrb[0].mxu0
        %v2245 = vpop.f32.mrb[0].mxu0
        %v2246 = vadd.f32 %v2127, %v2245
        %v2247 = vpop.f32.mrb[0].mxu0
        %2248 = vmatprep.mubr.bf16.mxu0 0
        %2249 = vmatmul.mubr.bf16.gmra.mrb[0].mxu0 %v2100
        %v2250 = vpop.f32.mrb[0].mxu0
        %v2251 = vadd.f32 %v2128, %v2250
        %v2252 = vpop.f32.mrb[0].mxu0
        %v2253 = vpop.f32.mrb[0].mxu0
        %v2254 = vadd.f32 %v2129, %v2253
        %v2255 = vpop.f32.mrb[0].mxu0
        %2256 = vmatprep.mubr.bf16.mxu0 0
        %2257 = vmatmul.mubr.bf16.gmra.mrb[0].mxu0 %v2101
        %v2258 = vpop.f32.mrb[0].mxu0
        %v2259 = vadd.f32 %v2130, %v2258
        %v2260 = vpop.f32.mrb[0].mxu0
        %v2261 = vpop.f32.mrb[0].mxu0
        %v2262 = vadd.f32 %v2131, %v2261
        %v2263 = vpop.f32.mrb[0].mxu0
        %2264 = vmatprep.mubr.bf16.mxu0 0
        %2265 = vmatmul.mubr.bf16.gmra.mrb[0].mxu0 %v2102
        %v2266 = vpop.f32.mrb[0].mxu0
        %v2267 = vadd.f32 %v2132, %v2266
        %v2268 = vpop.f32.mrb[0].mxu0
        %v2269 = vpop.f32.mrb[0].mxu0
        %v2270 = vadd.f32 %v2133, %v2269
        %v2271 = vpop.f32.mrb[0].mxu0
        %2272 = vmatprep.mubr.bf16.mxu0 0
        %2273 = vmatmul.mubr.bf16.gmra.mrb[0].mxu0 %v2103
        %v2274 = vpop.f32.mrb[0].mxu0
        %v2275 = vadd.f32 %v2134, %v2274
        %v2276 = vpop.f32.mrb[0].mxu0
        %v2277 = vpop.f32.mrb[0].mxu0
        %v2278 = vadd.f32 %v2135, %v2277
        %v2279 = vpop.f32.mrb[0].mxu0
        %2280 = vdwg.mxu0
        %v2281 = vld [vmem:[%s4] sm:$0x3]
        %2282 = vmatprep.subr.mxu0 0.0
        %2283 = vmatpush1.msra.mxu0 %v2219
        %2284 = vmatprep.subr.mxu0 0.0
        %2285 = vmatpush1.msra.mxu0 %v2222
        %2286 = vmatprep.subr.mxu0 0.0
        %2287 = vmatpush1.msra.mxu0 %v2227
        %2288 = vmatprep.subr.mxu0 0.0
        %2289 = vmatpush1.msra.mxu0 %v2230
        %2290 = vmatprep.subr.mxu0 0.0
        %2291 = vmatpush1.msra.mxu0 %v2235
        %2292 = vmatprep.subr.mxu0 0.0
        %2293 = vmatpush1.msra.mxu0 %v2238
        %2294 = vmatprep.subr.mxu0 0.0
        %2295 = vmatpush1.msra.mxu0 %v2243
        %2296 = vmatprep.subr.mxu0 0.0
        %2297 = vmatpush1.msra.mxu0 %v2246
        %2298 = vmatprep.subr.mxu0 0.0
        %2299 = vmatpush1.msra.mxu0 %v2251
        %2300 = vmatprep.subr.mxu0 0.0
        %2301 = vmatpush1.msra.mxu0 %v2254
        %2302 = vmatprep.subr.mxu0 0.0
        %2303 = vmatpush1.msra.mxu0 %v2259
        %2304 = vmatprep.subr.mxu0 0.0
        %2305 = vmatpush1.msra.mxu0 %v2262
        %2306 = vmatprep.subr.mxu0 0.0
        %2307 = vmatpush1.msra.mxu0 %v2267
        %2308 = vmatprep.subr.mxu0 0.0
        %2309 = vmatpush1.msra.mxu0 %v2270
        %2310 = vmatprep.subr.mxu0 0.0
        %2311 = vmatpush1.msra.mxu0 %v2275
        %2312 = vmatprep.subr.mxu0 0.0
        %2313 = vmatpush1.msra.mxu0 %v2278
        %2314 = vmatprep.subr.mxu0 0.0
        %2315 = vmatpush1.msra.mxu0 0.0
        %2316 = vmatprep.subr.mxu0 0.0
        %2317 = vmatpush1.msra.mxu0 0.0
        %2318 = vmatprep.subr.mxu0 0.0
        %2319 = vmatpush1.msra.mxu0 0.0
        %2320 = vmatprep.subr.mxu0 0.0
        %2321 = vmatpush1.msra.mxu0 0.0
        %2322 = vmatprep.subr.mxu0 0.0
        %2323 = vmatpush1.msra.mxu0 0.0
        %2324 = vmatprep.subr.mxu0 0.0
        %2325 = vmatpush1.msra.mxu0 0.0
        %2326 = vmatprep.subr.mxu0 0.0
        %2327 = vmatpush1.msra.mxu0 0.0
        %2328 = vmatprep.subr.mxu0 0.0
        %2329 = vmatpush1.msra.mxu0 0.0
        %2330 = vmatprep.subr.mxu0 0.0
        %2331 = vmatpush1.msra.mxu0 0.0
        %2332 = vmatprep.subr.mxu0 0.0
        %2333 = vmatpush1.msra.mxu0 0.0
        %2334 = vmatprep.subr.mxu0 0.0
        %2335 = vmatpush1.msra.mxu0 0.0
        %2336 = vmatprep.subr.mxu0 0.0
        %2337 = vmatpush1.msra.mxu0 0.0
        %2338 = vmatprep.subr.mxu0 0.0
        %2339 = vmatpush1.msra.mxu0 0.0
        %2340 = vmatprep.subr.mxu0 0.0
        %2341 = vmatpush1.msra.mxu0 0.0
        %2342 = vmatprep.subr.mxu0 0.0
        %2343 = vmatpush1.msra.mxu0 0.0
        %2344 = vmatprep.subr.mxu0 0.0
        %2345 = vmatpush1.msra.mxu0 0.0
        %2346 = vmatprep.mubr.f32.mxu0 0.0
        %2347 = vmatmul.mubr.f32.gmra.mrb[0].mxu0 %v2281
        %v2348 = vpop.f32.mrb[0].mxu0
        %v2349 = vadd.f32 0.0, %v2348
        %v2350 = vpop.f32.mrb[0].mxu0
        %2351 = vdwg.mxu0
        %2352 = vst [vmem:[%s598] sm:$0x3] %v2349
        %s2353 = sand.u32 %s366, 1
        %s2354 = scalar_lea.sflag [#allocation4], %s2353
        %s2355 = sand.u32 %s366, 1
        %s2356 = smul.addr %s2355, 2
        %s2357 = scalar_lea.vmem [#allocation14], %s2356
        // Predicated region
        $region109: #{tpu_custom_call.1} parent=79 // pred_check
          %p2358 = pneg %p376
        $region110: #{tpu_custom_call.1} parent=79 // pred_check_branch
          %2360 = sbr.rel (%p2358) target = $region112
        $region111: #{tpu_custom_call.1} parent=79 // pred_region
          %s2362 = ssub.s32 32, 32
          %2363 = vsyncadd %s2354, %s2362
          %s2364 = smul.addr %s33, 32
          %s2365 = scalar_lea.hbm %s15, %s2364
          %s2367 = sshll.u32 %s2357, 4
          %s2368 = int_to_ptr.vmem [resolvable:$true] %s2367
          %2370 = dma.vmem_to_hbm [thread:$0]  %s2368, 32, %s2365, %s2354
        $region112: #{tpu_custom_call.1} parent=79 // pred_fallthru
          _
      $region80: #{tpu_custom_call.1} parent=5 // pred_fallthru
        _
      %p2371 = scmp.le.s32.totalorder 2, %s28
      // Predicated region
      $region113: #{tpu_custom_call.1} parent=5 // pred_check
        %p2372 = pneg %p2371
      $region114: #{tpu_custom_call.1} parent=5 // pred_check_branch
        %2374 = sbr.rel (%p2372) target = $region116
      $region115: #{tpu_custom_call.1} parent=5 // pred_region
        %s2375 = ssub.s32 %s28, 2
        // Predicated region
        $region117: #{tpu_custom_call.1} parent=115 // pred_check
          %p2376 = pneg %p382
        $region118: #{tpu_custom_call.1} parent=115 // pred_check_branch
          %2378 = sbr.rel (%p2376) target = $region120
        $region119: #{tpu_custom_call.1} parent=115 // pred_region
          %s2379 = sand.u32 %s367, 1
          %s2380 = scalar_lea.sflag [#allocation4], %s2379
          %s2381 = sand.u32 %s367, 1
          %s2382 = smul.addr %s2381, 2
          %s2383 = scalar_lea.vmem [#allocation14], %s2382
          %2384 = dma.done %s2380, 32
        $region120: #{tpu_custom_call.1} parent=115 // pred_fallthru
          _
      $region116: #{tpu_custom_call.1} parent=5 // pred_fallthru
        _
    $region6: #{tpu_custom_call.1} parent=1 // loop_footer
      %s32 = sadd.s32 1, %s28
    $region7: #{tpu_custom_call.1} parent=1 // loop_footer_branch
      %27 = sbr.rel target = $region3
    $region8: #{tpu_custom_call.1} parent=1 // loop_exit
      _
    %2385 = vsyncpa [#allocation3], 1
    %s2386 = scalar_lea.sflag [#allocation3], 1
    %2387 = vsyncpa %s2386, 1
    %2388 = vsyncpa [#allocation6], 1
    %2389 = vsyncpa [#allocation9], 1
    %2390 = vsyncpa [#allocation12], 1
    %2391 = vsyncpa [#allocation4], 1
    %s2392 = scalar_lea.sflag [#allocation4], 1
    %2393 = vsyncpa %s2392, 1

</llo_original>
